<compile_context>
chip_gen: v5e
topology: v5e:2x2
jax: 0.10.0
libtpu: 0.0.40
codegen_flags: <defaults>
</compile_context>

<pallas_src>
import numpy as np
import jax
import jax.numpy as jnp
from jax.experimental import pallas as pl
from jax.experimental.pallas import tpu as pltpu


# ----------------------------------------------------------------------------
# Weight-only preprocessing (wrapper-side, review #2)
# ----------------------------------------------------------------------------
def _conv_selectors(hin, win):
    """0/1 selection tensors encoding 3x3 / stride-2 / pad-1 geometry."""
    ho = (hin - 1) // 2 + 1
    wo = (win - 1) // 2 + 1
    sel_h = np.zeros((3, ho, hin), np.float32)
    sel_w = np.zeros((3, wo, win), np.float32)
    for k in range(3):
        for o in range(ho):
            h = 2 * o + k - 1          # pad=1, stride=2
            if 0 <= h < hin:
                sel_h[k, o, h] = 1.0
        for o in range(wo):
            w = 2 * o + k - 1
            if 0 <= w < win:
                sel_w[k, o, w] = 1.0
    return sel_h, sel_w, ho, wo


def _conv_matrix_t(w, hin, win):
    """Return MT (Cin*Hin*Win, Cout*Ho*Wo) so that  flat_out = flat_in @ MT,
    with flat indices in torch NCHW flatten order (c, h, w) / (co, oh, ow)."""
    cout, cin = w.shape[0], w.shape[1]
    sel_h, sel_w, ho, wo = _conv_selectors(hin, win)
    mt = jnp.einsum("ocij,iah,jbw->chwoab", w, sel_h, sel_w)
    return mt.reshape(cin * hin * win, cout * ho * wo), ho, wo


# ----------------------------------------------------------------------------
# Fused kernel: 4 lane-dense matmuls + 3 ReLUs per batch chunk
# ----------------------------------------------------------------------------
def _network_kernel(x_ref, m1_ref, b1_ref, m2_ref, b2_ref,
                    fw1_ref, fb1_ref, fw2_ref, fb2_ref, out_ref):
    f32, bf16 = jnp.float32, jnp.bfloat16
    a = x_ref[...]                                                    # (bc, Cin*H*W) bf16
    y1 = jnp.dot(a, m1_ref[...], preferred_element_type=f32) + b1_ref[...]
    y1 = jnp.maximum(y1, 0.0).astype(bf16)                            # conv1 + ReLU
    y2 = jnp.dot(y1, m2_ref[...], preferred_element_type=f32) + b2_ref[...]
    y2 = jnp.maximum(y2, 0.0).astype(bf16)                            # conv2 + ReLU (flat order)
    h = jnp.dot(y2, fw1_ref[...], preferred_element_type=f32) + fb1_ref[...]
    h = jnp.maximum(h, 0.0).astype(bf16)                              # FC1 + ReLU
    out_ref[...] = jnp.dot(h, fw2_ref[...],
                           preferred_element_type=f32) + fb2_ref[...]  # logits (f32)


# ----------------------------------------------------------------------------
# Wrapper
# ----------------------------------------------------------------------------
def network_forward(x, params):
    # TODO(synk): only the batched 4-D (NCHW) branch of NetWork.forward is
    # implemented; the unbatched 3-D input path is not.
    n, cin, hin, win = x.shape
    bf16 = jnp.bfloat16

    # Embed each conv (weights + stride/pad selection) into one matrix.
    m1t, ho1, wo1 = _conv_matrix_t(params["conv1_w"], hin, win)
    m2t, ho2, wo2 = _conv_matrix_t(params["conv2_w"], ho1, wo1)
    in_feat = cin * hin * win
    f1 = params["conv1_w"].shape[0] * ho1 * wo1
    f2 = params["conv2_w"].shape[0] * ho2 * wo2          # == flatten_dim

    # Pre-broadcast biases to feature rows (weight-only).
    b1row = jnp.repeat(params["conv1_b"], ho1 * wo1)[None, :]
    b2row = jnp.repeat(params["conv2_b"], ho2 * wo2)[None, :]
    fb1 = params["fc1_b"][None, :]
    fb2 = params["fc2_b"][None, :]

    # bf16 MXU operands, f32 accumulation in-kernel.
    m1t = m1t.astype(bf16)
    m2t = m2t.astype(bf16)
    fw1 = params["fc1_w"].astype(bf16)
    fw2 = params["fc2_w"].astype(bf16)
    n_classes = fw2.shape[1]

    # Batch-chunk grid: batch on sublanes, flat features lane-dense.
    x2d = x.reshape(n, in_feat).astype(bf16)
    bc = n if n <= 128 else 128
    n_pad = ((n + bc - 1) // bc) * bc
    if n_pad != n:
        x2d = jnp.pad(x2d, ((0, n_pad - n), (0, 0)))

    def _resident(arr):                    # whole array, VMEM-resident across grid steps
        nd = arr.ndim
        return pl.BlockSpec(arr.shape, lambda *_: (0,) * nd)

    flops = 2 * n_pad * (in_feat * f1 + f1 * f2 + f2 * 128 + 128 * n_classes)
    bytes_accessed = (2 * (x2d.size + m1t.size + m2t.size + fw1.size + fw2.size)
                      + 4 * (b1row.size + b2row.size + fb1.size + fb2.size
                             + n_pad * n_classes))

    logits = pl.pallas_call(
        _network_kernel,
        grid=(n_pad // bc,),
        in_specs=[pl.BlockSpec((bc, in_feat), lambda b: (b, 0)),
                  _resident(m1t), _resident(b1row),
                  _resident(m2t), _resident(b2row),
                  _resident(fw1), _resident(fb1),
                  _resident(fw2), _resident(fb2)],
        out_specs=pl.BlockSpec((bc, n_classes), lambda b: (b, 0)),
        out_shape=jax.ShapeDtypeStruct((n_pad, n_classes), jnp.float32),
        compiler_params=pltpu.CompilerParams(
            dimension_semantics=("parallel",)),
        cost_estimate=pl.CostEstimate(flops=int(flops), transcendentals=0,
                                      bytes_accessed=int(bytes_accessed)),
    )(x2d, m1t, b1row, m2t, b2row, fw1, fb1, fw2, fb2)

    # nn.Softmax(dim=0): over the BATCH axis (reference-module quirk).  It
    # couples every image, so it runs once, exactly, on the (N, 10) logits
    # outside the batch-parallel grid.
    return jax.nn.softmax(logits[:n], axis=0)


# ----------------------------------------------------------------------------
# Deterministic parameter init (shapes from NetWork.__init__)
# ----------------------------------------------------------------------------
def init_params(key, input_channel, hidden_channels, output_channel):
    flatten_dim = output_channel * 7 * 7          # from a 28x28 input
    ks = jax.random.split(key, 8)
    scale = 0.1
    return {
        "conv1_w": scale * jax.random.normal(
            ks[0], (hidden_channels, input_channel, 3, 3), jnp.float32),
        "conv1_b": scale * jax.random.normal(ks[1], (hidden_channels,), jnp.float32),
        "conv2_w": scale * jax.random.normal(
            ks[2], (output_channel, hidden_channels, 3, 3), jnp.float32),
        "conv2_b": scale * jax.random.normal(ks[3], (output_channel,), jnp.float32),
        # Stored transposed relative to torch: (in_features, out_features)
        "fc1_w": scale * jax.random.normal(ks[4], (flatten_dim, 128), jnp.float32),
        "fc1_b": scale * jax.random.normal(ks[5], (128,), jnp.float32),
        "fc2_w": scale * jax.random.normal(ks[6], (128, 10), jnp.float32),
        "fc2_b": scale * jax.random.normal(ks[7], (10,), jnp.float32),
    }


# ----------------------------------------------------------------------------
# Pure-JAX reference (for correctness validation only)
# ----------------------------------------------------------------------------
def reference_forward(x, params):
    def conv(z, w, b):
        y = jax.lax.conv_general_dilated(
            z, w, window_strides=(2, 2), padding=((1, 1), (1, 1)),
            dimension_numbers=("NCHW", "OIHW", "NCHW"))
        return jax.nn.relu(y + b[None, :, None, None])

    y = conv(x, params["conv1_w"], params["conv1_b"])
    y = conv(y, params["conv2_w"], params["conv2_b"])
    flat = y.reshape(y.shape[0], -1)
    h = jax.nn.relu(flat @ params["fc1_w"] + params["fc1_b"])
    logits = h @ params["fc2_w"] + params["fc2_b"]
    return jax.nn.softmax(logits, axis=0)


if __name__ == "__main__":
    key = jax.random.PRNGKey(0)
    k_x, k_p = jax.random.split(key)

    input_channel, hidden_channels, output_channel = 1, 4, 8
    batch = 2

    # MNIST-sized input: the module's flatten_dim hard-requires 28x28 spatial.
    x = jax.random.normal(k_x, (batch, input_channel, 28, 28), jnp.float32)
    params = init_params(k_p, input_channel, hidden_channels, output_channel)

    out = jax.jit(network_forward)(x, params)
    out = jax.block_until_ready(out)

    ref = jax.block_until_ready(jax.jit(reference_forward)(x, params))

    assert out.shape == (batch, 10), out.shape
    # Softmax(dim=0): each column sums to 1 across the batch axis.
    assert jnp.allclose(jnp.sum(out, axis=0), 1.0, atol=1e-3)
    # Match the plain-JAX f32 reference (tolerance covers bf16 MXU inputs).
    assert jnp.allclose(out, ref, atol=1e-2, rtol=1e-2), \
        float(jnp.max(jnp.abs(out - ref)))
    print("KERNEL_OK")
</pallas_src>

<mosaic_0001>
module attributes {stable_mosaic.version = 11 : i64} {
  func.func @_network_kernel(%arg0: i32, %arg1: memref<2x784xbf16, #tpu.memory_space<vmem>>, %arg2: memref<784x784xbf16, #tpu.memory_space<vmem>>, %arg3: memref<1x784xf32, #tpu.memory_space<vmem>>, %arg4: memref<784x392xbf16, #tpu.memory_space<vmem>>, %arg5: memref<1x392xf32, #tpu.memory_space<vmem>>, %arg6: memref<392x128xbf16, #tpu.memory_space<vmem>>, %arg7: memref<1x128xf32, #tpu.memory_space<vmem>>, %arg8: memref<128x10xbf16, #tpu.memory_space<vmem>>, %arg9: memref<1x10xf32, #tpu.memory_space<vmem>>, %arg10: memref<2x10xf32, #tpu.memory_space<vmem>>) attributes {dimension_semantics = [#tpu.dimension_semantics<parallel>], iteration_bounds = array<i64: 1>, scalar_prefetch = 0 : i64, scratch_operands = 0 : i64, tpu.core_type = #tpu.core_type<tc>, window_params = [{transform_indices = @transform_0, window_bounds = array<i64: 2, 784>}, {pipeline_mode = #tpu.pipeline_mode<synchronous>, transform_indices = @transform_1, window_bounds = array<i64: 784, 784>}, {pipeline_mode = #tpu.pipeline_mode<synchronous>, transform_indices = @transform_2, window_bounds = array<i64: 1, 784>}, {pipeline_mode = #tpu.pipeline_mode<synchronous>, transform_indices = @transform_3, window_bounds = array<i64: 784, 392>}, {pipeline_mode = #tpu.pipeline_mode<synchronous>, transform_indices = @transform_4, window_bounds = array<i64: 1, 392>}, {pipeline_mode = #tpu.pipeline_mode<synchronous>, transform_indices = @transform_5, window_bounds = array<i64: 392, 128>}, {pipeline_mode = #tpu.pipeline_mode<synchronous>, transform_indices = @transform_6, window_bounds = array<i64: 1, 128>}, {pipeline_mode = #tpu.pipeline_mode<synchronous>, transform_indices = @transform_7, window_bounds = array<i64: 128, 10>}, {pipeline_mode = #tpu.pipeline_mode<synchronous>, transform_indices = @transform_8, window_bounds = array<i64: 1, 10>}, {transform_indices = @transform_9, window_bounds = array<i64: 2, 10>}]} {
    %c0 = arith.constant 0 : index
    %c0_0 = arith.constant 0 : index
    %0 = vector.load %arg1[%c0, %c0_0] : memref<2x784xbf16, #tpu.memory_space<vmem>>, vector<2x784xbf16>
    %c0_1 = arith.constant 0 : index
    %c0_2 = arith.constant 0 : index
    %1 = vector.load %arg2[%c0_1, %c0_2] : memref<784x784xbf16, #tpu.memory_space<vmem>>, vector<784x784xbf16>
    %cst = arith.constant dense<0.000000e+00> : vector<2x784xf32>
    %2 = tpu.matmul %0, %1, %cst {dimension_numbers = #tpu.dot_dimension_numbers<[1], [0], [0], [1], [0, 0, 1, 1], [], []>} : vector<2x784xbf16>, vector<784x784xbf16>, vector<2x784xf32> -> vector<2x784xf32>
    %c0_3 = arith.constant 0 : index
    %c0_4 = arith.constant 0 : index
    %3 = vector.load %arg3[%c0_3, %c0_4] : memref<1x784xf32, #tpu.memory_space<vmem>>, vector<1x784xf32>
    %4 = vector.broadcast %3 : vector<1x784xf32> to vector<2x784xf32>
    %5 = arith.addf %2, %4 : vector<2x784xf32>
    %cst_5 = arith.constant 0.000000e+00 : f32
    %6 = vector.broadcast %cst_5 : f32 to vector<2x784xf32>
    %7 = arith.maximumf %5, %6 : vector<2x784xf32>
    %8 = arith.truncf %7 : vector<2x784xf32> to vector<2x784xbf16>
    %c0_6 = arith.constant 0 : index
    %c0_7 = arith.constant 0 : index
    %9 = vector.load %arg4[%c0_6, %c0_7] : memref<784x392xbf16, #tpu.memory_space<vmem>>, vector<784x392xbf16>
    %cst_8 = arith.constant dense<0.000000e+00> : vector<2x392xf32>
    %10 = tpu.matmul %8, %9, %cst_8 {dimension_numbers = #tpu.dot_dimension_numbers<[1], [0], [0], [1], [0, 0, 1, 1], [], []>} : vector<2x784xbf16>, vector<784x392xbf16>, vector<2x392xf32> -> vector<2x392xf32>
    %c0_9 = arith.constant 0 : index
    %c0_10 = arith.constant 0 : index
    %11 = vector.load %arg5[%c0_9, %c0_10] : memref<1x392xf32, #tpu.memory_space<vmem>>, vector<1x392xf32>
    %12 = vector.broadcast %11 : vector<1x392xf32> to vector<2x392xf32>
    %13 = arith.addf %10, %12 : vector<2x392xf32>
    %cst_11 = arith.constant 0.000000e+00 : f32
    %14 = vector.broadcast %cst_11 : f32 to vector<2x392xf32>
    %15 = arith.maximumf %13, %14 : vector<2x392xf32>
    %16 = arith.truncf %15 : vector<2x392xf32> to vector<2x392xbf16>
    %c0_12 = arith.constant 0 : index
    %c0_13 = arith.constant 0 : index
    %17 = vector.load %arg6[%c0_12, %c0_13] : memref<392x128xbf16, #tpu.memory_space<vmem>>, vector<392x128xbf16>
    %cst_14 = arith.constant dense<0.000000e+00> : vector<2x128xf32>
    %18 = tpu.matmul %16, %17, %cst_14 {dimension_numbers = #tpu.dot_dimension_numbers<[1], [0], [0], [1], [0, 0, 1, 1], [], []>} : vector<2x392xbf16>, vector<392x128xbf16>, vector<2x128xf32> -> vector<2x128xf32>
    %c0_15 = arith.constant 0 : index
    %c0_16 = arith.constant 0 : index
    %19 = vector.load %arg7[%c0_15, %c0_16] : memref<1x128xf32, #tpu.memory_space<vmem>>, vector<1x128xf32>
    %20 = vector.broadcast %19 : vector<1x128xf32> to vector<2x128xf32>
    %21 = arith.addf %18, %20 : vector<2x128xf32>
    %cst_17 = arith.constant 0.000000e+00 : f32
    %22 = vector.broadcast %cst_17 : f32 to vector<2x128xf32>
    %23 = arith.maximumf %21, %22 : vector<2x128xf32>
    %24 = arith.truncf %23 : vector<2x128xf32> to vector<2x128xbf16>
    %c0_18 = arith.constant 0 : index
    %c0_19 = arith.constant 0 : index
    %25 = vector.load %arg8[%c0_18, %c0_19] : memref<128x10xbf16, #tpu.memory_space<vmem>>, vector<128x10xbf16>
    %cst_20 = arith.constant dense<0.000000e+00> : vector<2x10xf32>
    %26 = tpu.matmul %24, %25, %cst_20 {dimension_numbers = #tpu.dot_dimension_numbers<[1], [0], [0], [1], [0, 0, 1, 1], [], []>} : vector<2x128xbf16>, vector<128x10xbf16>, vector<2x10xf32> -> vector<2x10xf32>
    %c0_21 = arith.constant 0 : index
    %c0_22 = arith.constant 0 : index
    %27 = vector.load %arg9[%c0_21, %c0_22] : memref<1x10xf32, #tpu.memory_space<vmem>>, vector<1x10xf32>
    %28 = vector.broadcast %27 : vector<1x10xf32> to vector<2x10xf32>
    %29 = arith.addf %26, %28 : vector<2x10xf32>
    %c0_23 = arith.constant 0 : index
    %c0_24 = arith.constant 0 : index
    %30 = vector.load %arg10[%c0_23, %c0_24] : memref<2x10xf32, #tpu.memory_space<vmem>>, vector<2x10xf32>
    tpu.vector_store %arg10[%c0_23, %c0_24], %29 {strides = array<i32>} : memref<2x10xf32, #tpu.memory_space<vmem>>, vector<2x10xf32>,
    return
  }
  func.func @transform_0(%arg0: i32) -> (i32, i32) {
    %c0_i32 = arith.constant 0 : i32
    %c0_i32_0 = arith.constant 0 : i32
    return %arg0, %c0_i32 : i32, i32
  }
  func.func @transform_1(%arg0: i32) -> (i32, i32) {
    %c0_i32 = arith.constant 0 : i32
    %c0_i32_0 = arith.constant 0 : i32
    %c0_i32_1 = arith.constant 0 : i32
    return %c0_i32, %c0_i32_0 : i32, i32
  }
  func.func @transform_2(%arg0: i32) -> (i32, i32) {
    %c0_i32 = arith.constant 0 : i32
    %c0_i32_0 = arith.constant 0 : i32
    %c0_i32_1 = arith.constant 0 : i32
    return %c0_i32, %c0_i32_0 : i32, i32
  }
  func.func @transform_3(%arg0: i32) -> (i32, i32) {
    %c0_i32 = arith.constant 0 : i32
    %c0_i32_0 = arith.constant 0 : i32
    %c0_i32_1 = arith.constant 0 : i32
    return %c0_i32, %c0_i32_0 : i32, i32
  }
  func.func @transform_4(%arg0: i32) -> (i32, i32) {
    %c0_i32 = arith.constant 0 : i32
    %c0_i32_0 = arith.constant 0 : i32
    %c0_i32_1 = arith.constant 0 : i32
    return %c0_i32, %c0_i32_0 : i32, i32
  }
  func.func @transform_5(%arg0: i32) -> (i32, i32) {
    %c0_i32 = arith.constant 0 : i32
    %c0_i32_0 = arith.constant 0 : i32
    %c0_i32_1 = arith.constant 0 : i32
    return %c0_i32, %c0_i32_0 : i32, i32
  }
  func.func @transform_6(%arg0: i32) -> (i32, i32) {
    %c0_i32 = arith.constant 0 : i32
    %c0_i32_0 = arith.constant 0 : i32
    %c0_i32_1 = arith.constant 0 : i32
    return %c0_i32, %c0_i32_0 : i32, i32
  }
  func.func @transform_7(%arg0: i32) -> (i32, i32) {
    %c0_i32 = arith.constant 0 : i32
    %c0_i32_0 = arith.constant 0 : i32
    %c0_i32_1 = arith.constant 0 : i32
    return %c0_i32, %c0_i32_0 : i32, i32
  }
  func.func @transform_8(%arg0: i32) -> (i32, i32) {
    %c0_i32 = arith.constant 0 : i32
    %c0_i32_0 = arith.constant 0 : i32
    %c0_i32_1 = arith.constant 0 : i32
    return %c0_i32, %c0_i32_0 : i32, i32
  }
  func.func @transform_9(%arg0: i32) -> (i32, i32) {
    %c0_i32 = arith.constant 0 : i32
    %c0_i32_0 = arith.constant 0 : i32
    return %arg0, %c0_i32 : i32, i32
  }
}

</mosaic_0001>

<llo_original>
// kernel: network_forward.1
$region0: #{network_forward.1}
  #allocation0 [shape = 'u32[]', space=smem, size = 0x4, offset = 0x4, fixed_abs, tag = 'smem constant byte address 0x4 - core index']
  #allocation1 [shape = 'u32[72,128]{1,0:T(1,128)}', space=vmem, size = 0x9000, scoped, tag = 'internal scratch']
  %s0 = inlined_call_operand.vmem [shape: bf16[2,784], index: 0, kind: input, shape index: {}]
  %s1 = inlined_call_operand.vmem [shape: bf16[784,784], index: 1, kind: input, shape index: {}]
  %s2 = inlined_call_operand.vmem [shape: f32[1,784], index: 2, kind: input, shape index: {}]
  %s3 = inlined_call_operand.vmem [shape: bf16[784,392], index: 3, kind: input, shape index: {}]
  %s4 = inlined_call_operand.vmem [shape: f32[1,392], index: 4, kind: input, shape index: {}]
  %s5 = inlined_call_operand.vmem [shape: bf16[392,128], index: 5, kind: input, shape index: {}]
  %s6 = inlined_call_operand.vmem [shape: f32[1,128], index: 6, kind: input, shape index: {}]
  %s7 = inlined_call_operand.vmem [shape: bf16[128,10], index: 7, kind: input, shape index: {}]
  %s8 = inlined_call_operand.vmem [shape: f32[1,10], index: 8, kind: input, shape index: {}]
  %s9 = inlined_call_operand.vmem [shape: f32[2,10], index: 9, kind: output, shape index: {}]
  %s10 = sld [smem:[#allocation0]]
  $region46: #{network_forward.1} parent=0
    _
  %s12 = ssub.s32 1, %s10
  %s13 = scalar_select 0, %s12, %s10
  // Predicated region
  $region2: #{network_forward.1} parent=0 // pred_check
    _
  $region3: #{network_forward.1} parent=0 // pred_check_branch
    %15 = sbr.rel (0) target = $region5
  $region4: #{network_forward.1} parent=0 // pred_region
    _
  $region5: #{network_forward.1} parent=0 // pred_fallthru
    _
  // Predicated region
  $region6: #{network_forward.1} parent=0 // pred_check
    _
  $region7: #{network_forward.1} parent=0 // pred_check_branch
    %17 = sbr.rel (0) target = $region9
  $region8: #{network_forward.1} parent=0 // pred_region
    _
  $region9: #{network_forward.1} parent=0 // pred_fallthru
    _
  // Predicated region
  $region10: #{network_forward.1} parent=0 // pred_check
    _
  $region11: #{network_forward.1} parent=0 // pred_check_branch
    %19 = sbr.rel (0) target = $region13
  $region12: #{network_forward.1} parent=0 // pred_region
    _
  $region13: #{network_forward.1} parent=0 // pred_fallthru
    _
  // Predicated region
  $region14: #{network_forward.1} parent=0 // pred_check
    _
  $region15: #{network_forward.1} parent=0 // pred_check_branch
    %21 = sbr.rel (0) target = $region17
  $region16: #{network_forward.1} parent=0 // pred_region
    _
  $region17: #{network_forward.1} parent=0 // pred_fallthru
    _
  // Predicated region
  $region18: #{network_forward.1} parent=0 // pred_check
    _
  $region19: #{network_forward.1} parent=0 // pred_check_branch
    %23 = sbr.rel (0) target = $region21
  $region20: #{network_forward.1} parent=0 // pred_region
    _
  $region21: #{network_forward.1} parent=0 // pred_fallthru
    _
  // Predicated region
  $region22: #{network_forward.1} parent=0 // pred_check
    _
  $region23: #{network_forward.1} parent=0 // pred_check_branch
    %25 = sbr.rel (0) target = $region25
  $region24: #{network_forward.1} parent=0 // pred_region
    _
  $region25: #{network_forward.1} parent=0 // pred_fallthru
    _
  // Predicated region
  $region26: #{network_forward.1} parent=0 // pred_check
    _
  $region27: #{network_forward.1} parent=0 // pred_check_branch
    %27 = sbr.rel (0) target = $region29
  $region28: #{network_forward.1} parent=0 // pred_region
    _
  $region29: #{network_forward.1} parent=0 // pred_fallthru
    _
  // Predicated region
  $region30: #{network_forward.1} parent=0 // pred_check
    _
  $region31: #{network_forward.1} parent=0 // pred_check_branch
    %29 = sbr.rel (0) target = $region33
  $region32: #{network_forward.1} parent=0 // pred_region
    _
  $region33: #{network_forward.1} parent=0 // pred_fallthru
    _
  // Predicated region
  $region34: #{network_forward.1} parent=0 // pred_check
    _
  $region35: #{network_forward.1} parent=0 // pred_check_branch
    %31 = sbr.rel (0) target = $region37
  $region36: #{network_forward.1} parent=0 // pred_region
    _
  $region37: #{network_forward.1} parent=0 // pred_fallthru
    _
  %v33 = vld [vmem:[%s0] sm:$0x7f]
  %v34 = vld [vmem:[%s1] sm:$0xff]
  %v35 = vld [vmem:[%s1 + $0x8] sm:$0xff]
  %v36 = vld [vmem:[%s1 + $0x10] sm:$0xff]
  %v37 = vld [vmem:[%s1 + $0x18] sm:$0xf]
  %v38 = vld [vmem:[%s1 + $0x1c] sm:$0xff]
  %v39 = vld [vmem:[%s1 + $0x24] sm:$0xff]
  %v40 = vld [vmem:[%s1 + $0x2c] sm:$0xff]
  %v41 = vld [vmem:[%s1 + $0x34] sm:$0xf]
  %v42 = vld [vmem:[%s1 + $0x38] sm:$0xff]
  %v43 = vld [vmem:[%s1 + $0x40] sm:$0xff]
  %v44 = vld [vmem:[%s1 + $0x48] sm:$0xff]
  %v45 = vld [vmem:[%s1 + $0x50] sm:$0xf]
  %v46 = vld [vmem:[%s1 + $0x54] sm:$0xff]
  %v47 = vld [vmem:[%s1 + $0x5c] sm:$0xff]
  %v48 = vld [vmem:[%s1 + $0x64] sm:$0xff]
  %v49 = vld [vmem:[%s1 + $0x6c] sm:$0xf]
  %v50 = vld [vmem:[%s1 + $0x70] sm:$0xff]
  %v51 = vld [vmem:[%s1 + $0x78] sm:$0xff]
  %v52 = vld [vmem:[%s1 + $0x80] sm:$0xff]
  %v53 = vld [vmem:[%s1 + $0x88] sm:$0xf]
  %v54 = vld [vmem:[%s1 + $0x8c] sm:$0xff]
  %v55 = vld [vmem:[%s1 + $0x94] sm:$0xff]
  %v56 = vld [vmem:[%s1 + $0x9c] sm:$0xff]
  %v57 = vld [vmem:[%s1 + $0xa4] sm:$0xf]
  %v58 = vld [vmem:[%s1 + $0xa8] sm:$0xff]
  %v59 = vld [vmem:[%s1 + $0xb0] sm:$0xff]
  %v60 = vld [vmem:[%s1 + $0xb8] sm:$0xff]
  %v61 = vld [vmem:[%s1 + $0xc0] sm:$0xf]
  %v62 = vld [vmem:[%s1 + $0xc4] sm:$0xff]
  %v63 = vld [vmem:[%s1 + $0xcc] sm:$0xff]
  %v64 = vld [vmem:[%s1 + $0xd4] sm:$0xff]
  %v65 = vld [vmem:[%s1 + $0xdc] sm:$0xf]
  %v66 = vld [vmem:[%s1 + $0xe0] sm:$0xff]
  %v67 = vld [vmem:[%s1 + $0xe8] sm:$0xff]
  %v68 = vld [vmem:[%s1 + $0xf0] sm:$0xff]
  %v69 = vld [vmem:[%s1 + $0xf8] sm:$0xf]
  %v70 = vld [vmem:[%s1 + $0xfc] sm:$0xff]
  %v71 = vld [vmem:[%s1 + $0x104] sm:$0xff]
  %v72 = vld [vmem:[%s1 + $0x10c] sm:$0xff]
  %v73 = vld [vmem:[%s1 + $0x114] sm:$0xf]
  %v74 = vld [vmem:[%s1 + $0x118] sm:$0xff]
  %v75 = vld [vmem:[%s1 + $0x120] sm:$0xff]
  %v76 = vld [vmem:[%s1 + $0x128] sm:$0xff]
  %v77 = vld [vmem:[%s1 + $0x130] sm:$0xf]
  %v78 = vld [vmem:[%s1 + $0x134] sm:$0xff]
  %v79 = vld [vmem:[%s1 + $0x13c] sm:$0xff]
  %v80 = vld [vmem:[%s1 + $0x144] sm:$0xff]
  %v81 = vld [vmem:[%s1 + $0x14c] sm:$0xf]
  %v82 = vld [vmem:[%s1 + $0x150] sm:$0xff]
  %v83 = vld [vmem:[%s1 + $0x158] sm:$0xff]
  %v84 = vld [vmem:[%s1 + $0x160] sm:$0xff]
  %v85 = vld [vmem:[%s1 + $0x168] sm:$0xf]
  %v86 = vld [vmem:[%s1 + $0x16c] sm:$0xff]
  %v87 = vld [vmem:[%s1 + $0x174] sm:$0xff]
  %v88 = vld [vmem:[%s1 + $0x17c] sm:$0xff]
  %v89 = vld [vmem:[%s1 + $0x184] sm:$0xf]
  %v90 = vld [vmem:[%s1 + $0x188] sm:$0xff]
  %v91 = vld [vmem:[%s1 + $0x190] sm:$0xff]
  %v92 = vld [vmem:[%s1 + $0x198] sm:$0xff]
  %v93 = vld [vmem:[%s1 + $0x1a0] sm:$0xf]
  %v94 = vld [vmem:[%s1 + $0x1a4] sm:$0xff]
  %v95 = vld [vmem:[%s1 + $0x1ac] sm:$0xff]
  %v96 = vld [vmem:[%s1 + $0x1b4] sm:$0xff]
  %v97 = vld [vmem:[%s1 + $0x1bc] sm:$0xf]
  %v98 = vld [vmem:[%s1 + $0x1c0] sm:$0xff]
  %v99 = vld [vmem:[%s1 + $0x1c8] sm:$0xff]
  %v100 = vld [vmem:[%s1 + $0x1d0] sm:$0xff]
  %v101 = vld [vmem:[%s1 + $0x1d8] sm:$0xf]
  %v102 = vld [vmem:[%s1 + $0x1dc] sm:$0xff]
  %v103 = vld [vmem:[%s1 + $0x1e4] sm:$0xff]
  %v104 = vld [vmem:[%s1 + $0x1ec] sm:$0xff]
  %v105 = vld [vmem:[%s1 + $0x1f4] sm:$0xf]
  %v106 = vld [vmem:[%s1 + $0x1f8] sm:$0xff]
  %v107 = vld [vmem:[%s1 + $0x200] sm:$0xff]
  %v108 = vld [vmem:[%s1 + $0x208] sm:$0xff]
  %v109 = vld [vmem:[%s1 + $0x210] sm:$0xf]
  %v110 = vld [vmem:[%s1 + $0x214] sm:$0xff]
  %v111 = vld [vmem:[%s1 + $0x21c] sm:$0xff]
  %v112 = vld [vmem:[%s1 + $0x224] sm:$0xff]
  %v113 = vld [vmem:[%s1 + $0x22c] sm:$0xf]
  %v114 = vld [vmem:[%s1 + $0x230] sm:$0xff]
  %v115 = vld [vmem:[%s1 + $0x238] sm:$0xff]
  %v116 = vld [vmem:[%s1 + $0x240] sm:$0xff]
  %v117 = vld [vmem:[%s1 + $0x248] sm:$0xf]
  %v118 = vld [vmem:[%s1 + $0x24c] sm:$0xff]
  %v119 = vld [vmem:[%s1 + $0x254] sm:$0xff]
  %v120 = vld [vmem:[%s1 + $0x25c] sm:$0xff]
  %v121 = vld [vmem:[%s1 + $0x264] sm:$0xf]
  %v122 = vld [vmem:[%s1 + $0x268] sm:$0xff]
  %v123 = vld [vmem:[%s1 + $0x270] sm:$0xff]
  %v124 = vld [vmem:[%s1 + $0x278] sm:$0xff]
  %v125 = vld [vmem:[%s1 + $0x280] sm:$0xf]
  %v126 = vld [vmem:[%s1 + $0x284] sm:$0xff]
  %v127 = vld [vmem:[%s1 + $0x28c] sm:$0xff]
  %v128 = vld [vmem:[%s1 + $0x294] sm:$0xff]
  %v129 = vld [vmem:[%s1 + $0x29c] sm:$0xf]
  %v130 = vld [vmem:[%s1 + $0x2a0] sm:$0xff]
  %v131 = vld [vmem:[%s1 + $0x2a8] sm:$0xff]
  %v132 = vld [vmem:[%s1 + $0x2b0] sm:$0xff]
  %v133 = vld [vmem:[%s1 + $0x2b8] sm:$0xf]
  %v134 = vld [vmem:[%s1 + $0x2bc] sm:$0xff]
  %v135 = vld [vmem:[%s1 + $0x2c4] sm:$0xff]
  %v136 = vld [vmem:[%s1 + $0x2cc] sm:$0xff]
  %v137 = vld [vmem:[%s1 + $0x2d4] sm:$0xf]
  %v138 = vld [vmem:[%s1 + $0x2d8] sm:$0xff]
  %v139 = vld [vmem:[%s1 + $0x2e0] sm:$0xff]
  %v140 = vld [vmem:[%s1 + $0x2e8] sm:$0xff]
  %v141 = vld [vmem:[%s1 + $0x2f0] sm:$0xf]
  %v142 = vld [vmem:[%s1 + $0x2f4] sm:$0xff]
  %v143 = vld [vmem:[%s1 + $0x2fc] sm:$0xff]
  %v144 = vld [vmem:[%s1 + $0x304] sm:$0xff]
  %v145 = vld [vmem:[%s1 + $0x30c] sm:$0xf]
  %v146 = vld [vmem:[%s1 + $0x310] sm:$0xff]
  %v147 = vld [vmem:[%s1 + $0x318] sm:$0xff]
  %v148 = vld [vmem:[%s1 + $0x320] sm:$0xff]
  %v149 = vld [vmem:[%s1 + $0x328] sm:$0xf]
  %v150 = vld [vmem:[%s1 + $0x32c] sm:$0xff]
  %v151 = vld [vmem:[%s1 + $0x334] sm:$0xff]
  %v152 = vld [vmem:[%s1 + $0x33c] sm:$0xff]
  %v153 = vld [vmem:[%s1 + $0x344] sm:$0xf]
  %v154 = vld [vmem:[%s1 + $0x348] sm:$0xff]
  %v155 = vld [vmem:[%s1 + $0x350] sm:$0xff]
  %v156 = vld [vmem:[%s1 + $0x358] sm:$0xff]
  %v157 = vld [vmem:[%s1 + $0x360] sm:$0xf]
  %v158 = vld [vmem:[%s1 + $0x364] sm:$0xff]
  %v159 = vld [vmem:[%s1 + $0x36c] sm:$0xff]
  %v160 = vld [vmem:[%s1 + $0x374] sm:$0xff]
  %v161 = vld [vmem:[%s1 + $0x37c] sm:$0xf]
  %v162 = vld [vmem:[%s1 + $0x380] sm:$0xff]
  %v163 = vld [vmem:[%s1 + $0x388] sm:$0xff]
  %v164 = vld [vmem:[%s1 + $0x390] sm:$0xff]
  %v165 = vld [vmem:[%s1 + $0x398] sm:$0xf]
  %v166 = vld [vmem:[%s1 + $0x39c] sm:$0xff]
  %v167 = vld [vmem:[%s1 + $0x3a4] sm:$0xff]
  %v168 = vld [vmem:[%s1 + $0x3ac] sm:$0xff]
  %v169 = vld [vmem:[%s1 + $0x3b4] sm:$0xf]
  %v170 = vld [vmem:[%s1 + $0x3b8] sm:$0xff]
  %v171 = vld [vmem:[%s1 + $0x3c0] sm:$0xff]
  %v172 = vld [vmem:[%s1 + $0x3c8] sm:$0xff]
  %v173 = vld [vmem:[%s1 + $0x3d0] sm:$0xf]
  %v174 = vld [vmem:[%s1 + $0x3d4] sm:$0xff]
  %v175 = vld [vmem:[%s1 + $0x3dc] sm:$0xff]
  %v176 = vld [vmem:[%s1 + $0x3e4] sm:$0xff]
  %v177 = vld [vmem:[%s1 + $0x3ec] sm:$0xf]
  %v178 = vld [vmem:[%s1 + $0x3f0] sm:$0xff]
  %v179 = vld [vmem:[%s1 + $0x3f8] sm:$0xff]
  %v180 = vld [vmem:[%s1 + $0x400] sm:$0xff]
  %v181 = vld [vmem:[%s1 + $0x408] sm:$0xf]
  %v182 = vld [vmem:[%s1 + $0x40c] sm:$0xff]
  %v183 = vld [vmem:[%s1 + $0x414] sm:$0xff]
  %v184 = vld [vmem:[%s1 + $0x41c] sm:$0xff]
  %v185 = vld [vmem:[%s1 + $0x424] sm:$0xf]
  %v186 = vld [vmem:[%s1 + $0x428] sm:$0xff]
  %v187 = vld [vmem:[%s1 + $0x430] sm:$0xff]
  %v188 = vld [vmem:[%s1 + $0x438] sm:$0xff]
  %v189 = vld [vmem:[%s1 + $0x440] sm:$0xf]
  %v190 = vld [vmem:[%s1 + $0x444] sm:$0xff]
  %v191 = vld [vmem:[%s1 + $0x44c] sm:$0xff]
  %v192 = vld [vmem:[%s1 + $0x454] sm:$0xff]
  %v193 = vld [vmem:[%s1 + $0x45c] sm:$0xf]
  %v194 = vld [vmem:[%s1 + $0x460] sm:$0xff]
  %v195 = vld [vmem:[%s1 + $0x468] sm:$0xff]
  %v196 = vld [vmem:[%s1 + $0x470] sm:$0xff]
  %v197 = vld [vmem:[%s1 + $0x478] sm:$0xf]
  %v198 = vld [vmem:[%s1 + $0x47c] sm:$0xff]
  %v199 = vld [vmem:[%s1 + $0x484] sm:$0xff]
  %v200 = vld [vmem:[%s1 + $0x48c] sm:$0xff]
  %v201 = vld [vmem:[%s1 + $0x494] sm:$0xf]
  %v202 = vld [vmem:[%s1 + $0x498] sm:$0xff]
  %v203 = vld [vmem:[%s1 + $0x4a0] sm:$0xff]
  %v204 = vld [vmem:[%s1 + $0x4a8] sm:$0xff]
  %v205 = vld [vmem:[%s1 + $0x4b0] sm:$0xf]
  %v206 = vld [vmem:[%s1 + $0x4b4] sm:$0xff]
  %v207 = vld [vmem:[%s1 + $0x4bc] sm:$0xff]
  %v208 = vld [vmem:[%s1 + $0x4c4] sm:$0xff]
  %v209 = vld [vmem:[%s1 + $0x4cc] sm:$0xf]
  %v210 = vld [vmem:[%s1 + $0x4d0] sm:$0xff]
  %v211 = vld [vmem:[%s1 + $0x4d8] sm:$0xff]
  %v212 = vld [vmem:[%s1 + $0x4e0] sm:$0xff]
  %v213 = vld [vmem:[%s1 + $0x4e8] sm:$0xf]
  %v214 = vld [vmem:[%s1 + $0x4ec] sm:$0xff]
  %v215 = vld [vmem:[%s1 + $0x4f4] sm:$0xff]
  %v216 = vld [vmem:[%s1 + $0x4fc] sm:$0xff]
  %v217 = vld [vmem:[%s1 + $0x504] sm:$0xf]
  %v218 = vld [vmem:[%s1 + $0x508] sm:$0xff]
  %v219 = vld [vmem:[%s1 + $0x510] sm:$0xff]
  %v220 = vld [vmem:[%s1 + $0x518] sm:$0xff]
  %v221 = vld [vmem:[%s1 + $0x520] sm:$0xf]
  %v222 = vld [vmem:[%s1 + $0x524] sm:$0xff]
  %v223 = vld [vmem:[%s1 + $0x52c] sm:$0xff]
  %v224 = vld [vmem:[%s1 + $0x534] sm:$0xff]
  %v225 = vld [vmem:[%s1 + $0x53c] sm:$0xf]
  %v226 = vld [vmem:[%s1 + $0x540] sm:$0xff]
  %v227 = vld [vmem:[%s1 + $0x548] sm:$0xff]
  %v228 = vld [vmem:[%s1 + $0x550] sm:$0xff]
  %v229 = vld [vmem:[%s1 + $0x558] sm:$0xf]
  %v230 = vld [vmem:[%s1 + $0x55c] sm:$0xff]
  %v231 = vld [vmem:[%s1 + $0x564] sm:$0xff]
  %v232 = vld [vmem:[%s1 + $0x56c] sm:$0xff]
  %v233 = vld [vmem:[%s1 + $0x574] sm:$0xf]
  %v234 = vld [vmem:[%s1 + $0x578] sm:$0xff]
  %v235 = vld [vmem:[%s1 + $0x580] sm:$0xff]
  %v236 = vld [vmem:[%s1 + $0x588] sm:$0xff]
  %v237 = vld [vmem:[%s1 + $0x590] sm:$0xf]
  %v238 = vld [vmem:[%s1 + $0x594] sm:$0xff]
  %v239 = vld [vmem:[%s1 + $0x59c] sm:$0xff]
  %v240 = vld [vmem:[%s1 + $0x5a4] sm:$0xff]
  %v241 = vld [vmem:[%s1 + $0x5ac] sm:$0xf]
  %v242 = vld [vmem:[%s1 + $0x5b0] sm:$0xff]
  %v243 = vld [vmem:[%s1 + $0x5b8] sm:$0xff]
  %v244 = vld [vmem:[%s1 + $0x5c0] sm:$0xff]
  %v245 = vld [vmem:[%s1 + $0x5c8] sm:$0xf]
  %v246 = vld [vmem:[%s1 + $0x5cc] sm:$0xff]
  %v247 = vld [vmem:[%s1 + $0x5d4] sm:$0xff]
  %v248 = vld [vmem:[%s1 + $0x5dc] sm:$0xff]
  %v249 = vld [vmem:[%s1 + $0x5e4] sm:$0xf]
  %v250 = vld [vmem:[%s1 + $0x5e8] sm:$0xff]
  %v251 = vld [vmem:[%s1 + $0x5f0] sm:$0xff]
  %v252 = vld [vmem:[%s1 + $0x5f8] sm:$0xff]
  %v253 = vld [vmem:[%s1 + $0x600] sm:$0xf]
  %v254 = vld [vmem:[%s1 + $0x604] sm:$0xff]
  %v255 = vld [vmem:[%s1 + $0x60c] sm:$0xff]
  %v256 = vld [vmem:[%s1 + $0x614] sm:$0xff]
  %v257 = vld [vmem:[%s1 + $0x61c] sm:$0xf]
  %v258 = vld [vmem:[%s1 + $0x620] sm:$0xff]
  %v259 = vld [vmem:[%s1 + $0x628] sm:$0xff]
  %v260 = vld [vmem:[%s1 + $0x630] sm:$0xff]
  %v261 = vld [vmem:[%s1 + $0x638] sm:$0xf]
  %v262 = vld [vmem:[%s1 + $0x63c] sm:$0xff]
  %v263 = vld [vmem:[%s1 + $0x644] sm:$0xff]
  %v264 = vld [vmem:[%s1 + $0x64c] sm:$0xff]
  %v265 = vld [vmem:[%s1 + $0x654] sm:$0xf]
  %v266 = vld [vmem:[%s1 + $0x658] sm:$0xff]
  %v267 = vld [vmem:[%s1 + $0x660] sm:$0xff]
  %v268 = vld [vmem:[%s1 + $0x668] sm:$0xff]
  %v269 = vld [vmem:[%s1 + $0x670] sm:$0xf]
  %v270 = vld [vmem:[%s1 + $0x674] sm:$0xff]
  %v271 = vld [vmem:[%s1 + $0x67c] sm:$0xff]
  %v272 = vld [vmem:[%s1 + $0x684] sm:$0xff]
  %v273 = vld [vmem:[%s1 + $0x68c] sm:$0xf]
  %v274 = vld [vmem:[%s1 + $0x690] sm:$0xff]
  %v275 = vld [vmem:[%s1 + $0x698] sm:$0xff]
  %v276 = vld [vmem:[%s1 + $0x6a0] sm:$0xff]
  %v277 = vld [vmem:[%s1 + $0x6a8] sm:$0xf]
  %v278 = vld [vmem:[%s1 + $0x6ac] sm:$0xff]
  %v279 = vld [vmem:[%s1 + $0x6b4] sm:$0xff]
  %v280 = vld [vmem:[%s1 + $0x6bc] sm:$0xff]
  %v281 = vld [vmem:[%s1 + $0x6c4] sm:$0xf]
  %v282 = vld [vmem:[%s1 + $0x6c8] sm:$0xff]
  %v283 = vld [vmem:[%s1 + $0x6d0] sm:$0xff]
  %v284 = vld [vmem:[%s1 + $0x6d8] sm:$0xff]
  %v285 = vld [vmem:[%s1 + $0x6e0] sm:$0xf]
  %v286 = vld [vmem:[%s1 + $0x6e4] sm:$0xff]
  %v287 = vld [vmem:[%s1 + $0x6ec] sm:$0xff]
  %v288 = vld [vmem:[%s1 + $0x6f4] sm:$0xff]
  %v289 = vld [vmem:[%s1 + $0x6fc] sm:$0xf]
  %v290 = vld [vmem:[%s1 + $0x700] sm:$0xff]
  %v291 = vld [vmem:[%s1 + $0x708] sm:$0xff]
  %v292 = vld [vmem:[%s1 + $0x710] sm:$0xff]
  %v293 = vld [vmem:[%s1 + $0x718] sm:$0xf]
  %v294 = vld [vmem:[%s1 + $0x71c] sm:$0xff]
  %v295 = vld [vmem:[%s1 + $0x724] sm:$0xff]
  %v296 = vld [vmem:[%s1 + $0x72c] sm:$0xff]
  %v297 = vld [vmem:[%s1 + $0x734] sm:$0xf]
  %v298 = vld [vmem:[%s1 + $0x738] sm:$0xff]
  %v299 = vld [vmem:[%s1 + $0x740] sm:$0xff]
  %v300 = vld [vmem:[%s1 + $0x748] sm:$0xff]
  %v301 = vld [vmem:[%s1 + $0x750] sm:$0xf]
  %v302 = vld [vmem:[%s1 + $0x754] sm:$0xff]
  %v303 = vld [vmem:[%s1 + $0x75c] sm:$0xff]
  %v304 = vld [vmem:[%s1 + $0x764] sm:$0xff]
  %v305 = vld [vmem:[%s1 + $0x76c] sm:$0xf]
  %v306 = vld [vmem:[%s1 + $0x770] sm:$0xff]
  %v307 = vld [vmem:[%s1 + $0x778] sm:$0xff]
  %v308 = vld [vmem:[%s1 + $0x780] sm:$0xff]
  %v309 = vld [vmem:[%s1 + $0x788] sm:$0xf]
  %v310 = vld [vmem:[%s1 + $0x78c] sm:$0xff]
  %v311 = vld [vmem:[%s1 + $0x794] sm:$0xff]
  %v312 = vld [vmem:[%s1 + $0x79c] sm:$0xff]
  %v313 = vld [vmem:[%s1 + $0x7a4] sm:$0xf]
  %v314 = vld [vmem:[%s1 + $0x7a8] sm:$0xff]
  %v315 = vld [vmem:[%s1 + $0x7b0] sm:$0xff]
  %v316 = vld [vmem:[%s1 + $0x7b8] sm:$0xff]
  %v317 = vld [vmem:[%s1 + $0x7c0] sm:$0xf]
  %v318 = vld [vmem:[%s1 + $0x7c4] sm:$0xff]
  %v319 = vld [vmem:[%s1 + $0x7cc] sm:$0xff]
  %v320 = vld [vmem:[%s1 + $0x7d4] sm:$0xff]
  %v321 = vld [vmem:[%s1 + $0x7dc] sm:$0xf]
  %v322 = vld [vmem:[%s1 + $0x7e0] sm:$0xff]
  %v323 = vld [vmem:[%s1 + $0x7e8] sm:$0xff]
  %v324 = vld [vmem:[%s1 + $0x7f0] sm:$0xff]
  %v325 = vld [vmem:[%s1 + $0x7f8] sm:$0xf]
  %v326 = vld [vmem:[%s1 + $0x7fc] sm:$0xff]
  %v327 = vld [vmem:[%s1 + $0x804] sm:$0xff]
  %v328 = vld [vmem:[%s1 + $0x80c] sm:$0xff]
  %v329 = vld [vmem:[%s1 + $0x814] sm:$0xf]
  %v330 = vld [vmem:[%s1 + $0x818] sm:$0xff]
  %v331 = vld [vmem:[%s1 + $0x820] sm:$0xff]
  %v332 = vld [vmem:[%s1 + $0x828] sm:$0xff]
  %v333 = vld [vmem:[%s1 + $0x830] sm:$0xf]
  %v334 = vld [vmem:[%s1 + $0x834] sm:$0xff]
  %v335 = vld [vmem:[%s1 + $0x83c] sm:$0xff]
  %v336 = vld [vmem:[%s1 + $0x844] sm:$0xff]
  %v337 = vld [vmem:[%s1 + $0x84c] sm:$0xf]
  %v338 = vld [vmem:[%s1 + $0x850] sm:$0xff]
  %v339 = vld [vmem:[%s1 + $0x858] sm:$0xff]
  %v340 = vld [vmem:[%s1 + $0x860] sm:$0xff]
  %v341 = vld [vmem:[%s1 + $0x868] sm:$0xf]
  %v342 = vld [vmem:[%s1 + $0x86c] sm:$0xff]
  %v343 = vld [vmem:[%s1 + $0x874] sm:$0xff]
  %v344 = vld [vmem:[%s1 + $0x87c] sm:$0xff]
  %v345 = vld [vmem:[%s1 + $0x884] sm:$0xf]
  %v346 = vld [vmem:[%s1 + $0x888] sm:$0xff]
  %v347 = vld [vmem:[%s1 + $0x890] sm:$0xff]
  %v348 = vld [vmem:[%s1 + $0x898] sm:$0xff]
  %v349 = vld [vmem:[%s1 + $0x8a0] sm:$0xf]
  %v350 = vld [vmem:[%s1 + $0x8a4] sm:$0xff]
  %v351 = vld [vmem:[%s1 + $0x8ac] sm:$0xff]
  %v352 = vld [vmem:[%s1 + $0x8b4] sm:$0xff]
  %v353 = vld [vmem:[%s1 + $0x8bc] sm:$0xf]
  %v354 = vld [vmem:[%s1 + $0x8c0] sm:$0xff]
  %v355 = vld [vmem:[%s1 + $0x8c8] sm:$0xff]
  %v356 = vld [vmem:[%s1 + $0x8d0] sm:$0xff]
  %v357 = vld [vmem:[%s1 + $0x8d8] sm:$0xf]
  %v358 = vld [vmem:[%s1 + $0x8dc] sm:$0xff]
  %v359 = vld [vmem:[%s1 + $0x8e4] sm:$0xff]
  %v360 = vld [vmem:[%s1 + $0x8ec] sm:$0xff]
  %v361 = vld [vmem:[%s1 + $0x8f4] sm:$0xf]
  %v362 = vld [vmem:[%s1 + $0x8f8] sm:$0xff]
  %v363 = vld [vmem:[%s1 + $0x900] sm:$0xff]
  %v364 = vld [vmem:[%s1 + $0x908] sm:$0xff]
  %v365 = vld [vmem:[%s1 + $0x910] sm:$0xf]
  %v366 = vld [vmem:[%s1 + $0x914] sm:$0xff]
  %v367 = vld [vmem:[%s1 + $0x91c] sm:$0xff]
  %v368 = vld [vmem:[%s1 + $0x924] sm:$0xff]
  %v369 = vld [vmem:[%s1 + $0x92c] sm:$0xf]
  %v370 = vld [vmem:[%s1 + $0x930] sm:$0xff]
  %v371 = vld [vmem:[%s1 + $0x938] sm:$0xff]
  %v372 = vld [vmem:[%s1 + $0x940] sm:$0xff]
  %v373 = vld [vmem:[%s1 + $0x948] sm:$0xf]
  %v374 = vld [vmem:[%s1 + $0x94c] sm:$0xff]
  %v375 = vld [vmem:[%s1 + $0x954] sm:$0xff]
  %v376 = vld [vmem:[%s1 + $0x95c] sm:$0xff]
  %v377 = vld [vmem:[%s1 + $0x964] sm:$0xf]
  %v378 = vld [vmem:[%s1 + $0x968] sm:$0xff]
  %v379 = vld [vmem:[%s1 + $0x970] sm:$0xff]
  %v380 = vld [vmem:[%s1 + $0x978] sm:$0xff]
  %v381 = vld [vmem:[%s1 + $0x980] sm:$0xf]
  %v382 = vld [vmem:[%s1 + $0x984] sm:$0xff]
  %v383 = vld [vmem:[%s1 + $0x98c] sm:$0xff]
  %v384 = vld [vmem:[%s1 + $0x994] sm:$0xff]
  %v385 = vld [vmem:[%s1 + $0x99c] sm:$0xf]
  %v386 = vld [vmem:[%s1 + $0x9a0] sm:$0xff]
  %v387 = vld [vmem:[%s1 + $0x9a8] sm:$0xff]
  %v388 = vld [vmem:[%s1 + $0x9b0] sm:$0xff]
  %v389 = vld [vmem:[%s1 + $0x9b8] sm:$0xf]
  %v390 = vld [vmem:[%s1 + $0x9bc] sm:$0xff]
  %v391 = vld [vmem:[%s1 + $0x9c4] sm:$0xff]
  %v392 = vld [vmem:[%s1 + $0x9cc] sm:$0xff]
  %v393 = vld [vmem:[%s1 + $0x9d4] sm:$0xf]
  %v394 = vld [vmem:[%s1 + $0x9d8] sm:$0xff]
  %v395 = vld [vmem:[%s1 + $0x9e0] sm:$0xff]
  %v396 = vld [vmem:[%s1 + $0x9e8] sm:$0xff]
  %v397 = vld [vmem:[%s1 + $0x9f0] sm:$0xf]
  %v398 = vld [vmem:[%s1 + $0x9f4] sm:$0xff]
  %v399 = vld [vmem:[%s1 + $0x9fc] sm:$0xff]
  %v400 = vld [vmem:[%s1 + $0xa04] sm:$0xff]
  %v401 = vld [vmem:[%s1 + $0xa0c] sm:$0xf]
  %v402 = vld [vmem:[%s1 + $0xa10] sm:$0xff]
  %v403 = vld [vmem:[%s1 + $0xa18] sm:$0xff]
  %v404 = vld [vmem:[%s1 + $0xa20] sm:$0xff]
  %v405 = vld [vmem:[%s1 + $0xa28] sm:$0xf]
  %v406 = vld [vmem:[%s1 + $0xa2c] sm:$0xff]
  %v407 = vld [vmem:[%s1 + $0xa34] sm:$0xff]
  %v408 = vld [vmem:[%s1 + $0xa3c] sm:$0xff]
  %v409 = vld [vmem:[%s1 + $0xa44] sm:$0xf]
  %v410 = vld [vmem:[%s1 + $0xa48] sm:$0xff]
  %v411 = vld [vmem:[%s1 + $0xa50] sm:$0xff]
  %v412 = vld [vmem:[%s1 + $0xa58] sm:$0xff]
  %v413 = vld [vmem:[%s1 + $0xa60] sm:$0xf]
  %v414 = vld [vmem:[%s1 + $0xa64] sm:$0xff]
  %v415 = vld [vmem:[%s1 + $0xa6c] sm:$0xff]
  %v416 = vld [vmem:[%s1 + $0xa74] sm:$0xff]
  %v417 = vld [vmem:[%s1 + $0xa7c] sm:$0xf]
  %v418 = vld [vmem:[%s1 + $0xa80] sm:$0xff]
  %v419 = vld [vmem:[%s1 + $0xa88] sm:$0xff]
  %v420 = vld [vmem:[%s1 + $0xa90] sm:$0xff]
  %v421 = vld [vmem:[%s1 + $0xa98] sm:$0xf]
  %v422 = vld [vmem:[%s1 + $0xa9c] sm:$0xff]
  %v423 = vld [vmem:[%s1 + $0xaa4] sm:$0xff]
  %v424 = vld [vmem:[%s1 + $0xaac] sm:$0xff]
  %v425 = vld [vmem:[%s1 + $0xab4] sm:$0xf]
  %v426 = vld [vmem:[%s2] sm:$0x7f]
  %v428 = vperm.slane %v426, 0
  %v429 = vperm.slane %v426, 1
  %v430 = vperm.slane %v426, 2
  %v431 = vperm.slane %v426, 3
  %v432 = vperm.slane %v426, 4
  %v433 = vperm.slane %v426, 5
  %v434 = vperm.slane %v426, 6
  %443 = vst [vmem:[#allocation1] ss:$9 sm:$0xff] %v33
  %v444 = vld [vmem:[#allocation1] sm:$0xff]
  %v445 = vld [vmem:[#allocation1 + $0x9] sm:$0xff]
  %v446 = vld [vmem:[#allocation1 + $0x12] sm:$0xff]
  %v447 = vld [vmem:[#allocation1 + $0x1b] sm:$0xff]
  %v448 = vld [vmem:[#allocation1 + $0x24] sm:$0xff]
  %v449 = vld [vmem:[#allocation1 + $0x2d] sm:$0xff]
  %v450 = vld [vmem:[#allocation1 + $0x36] sm:$0xff]
  %v849 = vunpack.c.l.b16 %v34
  %v850 = vunpack.c.h.b16 %v34
  %v851 = vunpack.c.l.b16 %v35
  %v852 = vunpack.c.h.b16 %v35
  %v853 = vunpack.c.l.b16 %v36
  %v854 = vunpack.c.h.b16 %v36
  %v855 = vunpack.c.l.b16 %v37
  %v856 = vunpack.c.l.b16 %v38
  %v857 = vunpack.c.h.b16 %v38
  %v858 = vunpack.c.l.b16 %v39
  %v859 = vunpack.c.h.b16 %v39
  %v860 = vunpack.c.l.b16 %v40
  %v861 = vunpack.c.h.b16 %v40
  %v862 = vunpack.c.l.b16 %v41
  %v863 = vunpack.c.l.b16 %v42
  %v864 = vunpack.c.h.b16 %v42
  %v865 = vunpack.c.l.b16 %v43
  %v866 = vunpack.c.h.b16 %v43
  %v867 = vunpack.c.l.b16 %v44
  %v868 = vunpack.c.h.b16 %v44
  %v869 = vunpack.c.l.b16 %v45
  %v870 = vunpack.c.l.b16 %v46
  %v871 = vunpack.c.h.b16 %v46
  %v872 = vunpack.c.l.b16 %v47
  %v873 = vunpack.c.h.b16 %v47
  %v874 = vunpack.c.l.b16 %v48
  %v875 = vunpack.c.h.b16 %v48
  %v876 = vunpack.c.l.b16 %v49
  %v877 = vunpack.c.l.b16 %v50
  %v878 = vunpack.c.h.b16 %v50
  %v879 = vunpack.c.l.b16 %v51
  %v880 = vunpack.c.h.b16 %v51
  %v881 = vunpack.c.l.b16 %v52
  %v882 = vunpack.c.h.b16 %v52
  %v883 = vunpack.c.l.b16 %v53
  %v884 = vunpack.c.l.b16 %v54
  %v885 = vunpack.c.h.b16 %v54
  %v886 = vunpack.c.l.b16 %v55
  %v887 = vunpack.c.h.b16 %v55
  %v888 = vunpack.c.l.b16 %v56
  %v889 = vunpack.c.h.b16 %v56
  %v890 = vunpack.c.l.b16 %v57
  %v891 = vunpack.c.l.b16 %v58
  %v892 = vunpack.c.h.b16 %v58
  %v893 = vunpack.c.l.b16 %v59
  %v894 = vunpack.c.h.b16 %v59
  %v895 = vunpack.c.l.b16 %v60
  %v896 = vunpack.c.h.b16 %v60
  %v897 = vunpack.c.l.b16 %v61
  %v898 = vunpack.c.l.b16 %v62
  %v899 = vunpack.c.h.b16 %v62
  %v900 = vunpack.c.l.b16 %v63
  %v901 = vunpack.c.h.b16 %v63
  %v902 = vunpack.c.l.b16 %v64
  %v903 = vunpack.c.h.b16 %v64
  %v904 = vunpack.c.l.b16 %v65
  %v905 = vunpack.c.l.b16 %v66
  %v906 = vunpack.c.h.b16 %v66
  %v907 = vunpack.c.l.b16 %v67
  %v908 = vunpack.c.h.b16 %v67
  %v909 = vunpack.c.l.b16 %v68
  %v910 = vunpack.c.h.b16 %v68
  %v911 = vunpack.c.l.b16 %v69
  %v912 = vunpack.c.l.b16 %v70
  %v913 = vunpack.c.h.b16 %v70
  %v914 = vunpack.c.l.b16 %v71
  %v915 = vunpack.c.h.b16 %v71
  %v916 = vunpack.c.l.b16 %v72
  %v917 = vunpack.c.h.b16 %v72
  %v918 = vunpack.c.l.b16 %v73
  %v919 = vunpack.c.l.b16 %v74
  %v920 = vunpack.c.h.b16 %v74
  %v921 = vunpack.c.l.b16 %v75
  %v922 = vunpack.c.h.b16 %v75
  %v923 = vunpack.c.l.b16 %v76
  %v924 = vunpack.c.h.b16 %v76
  %v925 = vunpack.c.l.b16 %v77
  %v926 = vunpack.c.l.b16 %v78
  %v927 = vunpack.c.h.b16 %v78
  %v928 = vunpack.c.l.b16 %v79
  %v929 = vunpack.c.h.b16 %v79
  %v930 = vunpack.c.l.b16 %v80
  %v931 = vunpack.c.h.b16 %v80
  %v932 = vunpack.c.l.b16 %v81
  %v933 = vunpack.c.l.b16 %v82
  %v934 = vunpack.c.h.b16 %v82
  %v935 = vunpack.c.l.b16 %v83
  %v936 = vunpack.c.h.b16 %v83
  %v937 = vunpack.c.l.b16 %v84
  %v938 = vunpack.c.h.b16 %v84
  %v939 = vunpack.c.l.b16 %v85
  %v940 = vunpack.c.l.b16 %v86
  %v941 = vunpack.c.h.b16 %v86
  %v942 = vunpack.c.l.b16 %v87
  %v943 = vunpack.c.h.b16 %v87
  %v944 = vunpack.c.l.b16 %v88
  %v945 = vunpack.c.h.b16 %v88
  %v946 = vunpack.c.l.b16 %v89
  %v947 = vunpack.c.l.b16 %v90
  %v948 = vunpack.c.h.b16 %v90
  %v949 = vunpack.c.l.b16 %v91
  %v950 = vunpack.c.h.b16 %v91
  %v951 = vunpack.c.l.b16 %v92
  %v952 = vunpack.c.h.b16 %v92
  %v953 = vunpack.c.l.b16 %v93
  %v954 = vunpack.c.l.b16 %v94
  %v955 = vunpack.c.h.b16 %v94
  %v956 = vunpack.c.l.b16 %v95
  %v957 = vunpack.c.h.b16 %v95
  %v958 = vunpack.c.l.b16 %v96
  %v959 = vunpack.c.h.b16 %v96
  %v960 = vunpack.c.l.b16 %v97
  %v961 = vunpack.c.l.b16 %v98
  %v962 = vunpack.c.h.b16 %v98
  %v963 = vunpack.c.l.b16 %v99
  %v964 = vunpack.c.h.b16 %v99
  %v965 = vunpack.c.l.b16 %v100
  %v966 = vunpack.c.h.b16 %v100
  %v967 = vunpack.c.l.b16 %v101
  %v968 = vunpack.c.l.b16 %v102
  %v969 = vunpack.c.h.b16 %v102
  %v970 = vunpack.c.l.b16 %v103
  %v971 = vunpack.c.h.b16 %v103
  %v972 = vunpack.c.l.b16 %v104
  %v973 = vunpack.c.h.b16 %v104
  %v974 = vunpack.c.l.b16 %v105
  %v975 = vunpack.c.l.b16 %v106
  %v976 = vunpack.c.h.b16 %v106
  %v977 = vunpack.c.l.b16 %v107
  %v978 = vunpack.c.h.b16 %v107
  %v979 = vunpack.c.l.b16 %v108
  %v980 = vunpack.c.h.b16 %v108
  %v981 = vunpack.c.l.b16 %v109
  %v982 = vunpack.c.l.b16 %v110
  %v983 = vunpack.c.h.b16 %v110
  %v984 = vunpack.c.l.b16 %v111
  %v985 = vunpack.c.h.b16 %v111
  %v986 = vunpack.c.l.b16 %v112
  %v987 = vunpack.c.h.b16 %v112
  %v988 = vunpack.c.l.b16 %v113
  %v989 = vunpack.c.l.b16 %v114
  %v990 = vunpack.c.h.b16 %v114
  %v991 = vunpack.c.l.b16 %v115
  %v992 = vunpack.c.h.b16 %v115
  %v993 = vunpack.c.l.b16 %v116
  %v994 = vunpack.c.h.b16 %v116
  %v995 = vunpack.c.l.b16 %v117
  %v996 = vunpack.c.l.b16 %v118
  %v997 = vunpack.c.h.b16 %v118
  %v998 = vunpack.c.l.b16 %v119
  %v999 = vunpack.c.h.b16 %v119
  %v1000 = vunpack.c.l.b16 %v120
  %v1001 = vunpack.c.h.b16 %v120
  %v1002 = vunpack.c.l.b16 %v121
  %v1003 = vunpack.c.l.b16 %v122
  %v1004 = vunpack.c.h.b16 %v122
  %v1005 = vunpack.c.l.b16 %v123
  %v1006 = vunpack.c.h.b16 %v123
  %v1007 = vunpack.c.l.b16 %v124
  %v1008 = vunpack.c.h.b16 %v124
  %v1009 = vunpack.c.l.b16 %v125
  %v1010 = vunpack.c.l.b16 %v126
  %v1011 = vunpack.c.h.b16 %v126
  %v1012 = vunpack.c.l.b16 %v127
  %v1013 = vunpack.c.h.b16 %v127
  %v1014 = vunpack.c.l.b16 %v128
  %v1015 = vunpack.c.h.b16 %v128
  %v1016 = vunpack.c.l.b16 %v129
  %v1017 = vunpack.c.l.b16 %v130
  %v1018 = vunpack.c.h.b16 %v130
  %v1019 = vunpack.c.l.b16 %v131
  %v1020 = vunpack.c.h.b16 %v131
  %v1021 = vunpack.c.l.b16 %v132
  %v1022 = vunpack.c.h.b16 %v132
  %v1023 = vunpack.c.l.b16 %v133
  %v1024 = vunpack.c.l.b16 %v134
  %v1025 = vunpack.c.h.b16 %v134
  %v1026 = vunpack.c.l.b16 %v135
  %v1027 = vunpack.c.h.b16 %v135
  %v1028 = vunpack.c.l.b16 %v136
  %v1029 = vunpack.c.h.b16 %v136
  %v1030 = vunpack.c.l.b16 %v137
  %v1031 = vunpack.c.l.b16 %v138
  %v1032 = vunpack.c.h.b16 %v138
  %v1033 = vunpack.c.l.b16 %v139
  %v1034 = vunpack.c.h.b16 %v139
  %v1035 = vunpack.c.l.b16 %v140
  %v1036 = vunpack.c.h.b16 %v140
  %v1037 = vunpack.c.l.b16 %v141
  %v1038 = vunpack.c.l.b16 %v142
  %v1039 = vunpack.c.h.b16 %v142
  %v1040 = vunpack.c.l.b16 %v143
  %v1041 = vunpack.c.h.b16 %v143
  %v1042 = vunpack.c.l.b16 %v144
  %v1043 = vunpack.c.h.b16 %v144
  %v1044 = vunpack.c.l.b16 %v145
  %v1045 = vunpack.c.l.b16 %v146
  %v1046 = vunpack.c.h.b16 %v146
  %v1047 = vunpack.c.l.b16 %v147
  %v1048 = vunpack.c.h.b16 %v147
  %v1049 = vunpack.c.l.b16 %v148
  %v1050 = vunpack.c.h.b16 %v148
  %v1051 = vunpack.c.l.b16 %v149
  %v1052 = vunpack.c.l.b16 %v150
  %v1053 = vunpack.c.h.b16 %v150
  %v1054 = vunpack.c.l.b16 %v151
  %v1055 = vunpack.c.h.b16 %v151
  %v1056 = vunpack.c.l.b16 %v152
  %v1057 = vunpack.c.h.b16 %v152
  %v1058 = vunpack.c.l.b16 %v153
  %v1059 = vunpack.c.l.b16 %v154
  %v1060 = vunpack.c.h.b16 %v154
  %v1061 = vunpack.c.l.b16 %v155
  %v1062 = vunpack.c.h.b16 %v155
  %v1063 = vunpack.c.l.b16 %v156
  %v1064 = vunpack.c.h.b16 %v156
  %v1065 = vunpack.c.l.b16 %v157
  %v1066 = vunpack.c.l.b16 %v158
  %v1067 = vunpack.c.h.b16 %v158
  %v1068 = vunpack.c.l.b16 %v159
  %v1069 = vunpack.c.h.b16 %v159
  %v1070 = vunpack.c.l.b16 %v160
  %v1071 = vunpack.c.h.b16 %v160
  %v1072 = vunpack.c.l.b16 %v161
  %v1073 = vunpack.c.l.b16 %v162
  %v1074 = vunpack.c.h.b16 %v162
  %v1075 = vunpack.c.l.b16 %v163
  %v1076 = vunpack.c.h.b16 %v163
  %v1077 = vunpack.c.l.b16 %v164
  %v1078 = vunpack.c.h.b16 %v164
  %v1079 = vunpack.c.l.b16 %v165
  %v1080 = vunpack.c.l.b16 %v166
  %v1081 = vunpack.c.h.b16 %v166
  %v1082 = vunpack.c.l.b16 %v167
  %v1083 = vunpack.c.h.b16 %v167
  %v1084 = vunpack.c.l.b16 %v168
  %v1085 = vunpack.c.h.b16 %v168
  %v1086 = vunpack.c.l.b16 %v169
  %v1087 = vunpack.c.l.b16 %v170
  %v1088 = vunpack.c.h.b16 %v170
  %v1089 = vunpack.c.l.b16 %v171
  %v1090 = vunpack.c.h.b16 %v171
  %v1091 = vunpack.c.l.b16 %v172
  %v1092 = vunpack.c.h.b16 %v172
  %v1093 = vunpack.c.l.b16 %v173
  %v1094 = vunpack.c.l.b16 %v174
  %v1095 = vunpack.c.h.b16 %v174
  %v1096 = vunpack.c.l.b16 %v175
  %v1097 = vunpack.c.h.b16 %v175
  %v1098 = vunpack.c.l.b16 %v176
  %v1099 = vunpack.c.h.b16 %v176
  %v1100 = vunpack.c.l.b16 %v177
  %v1101 = vunpack.c.l.b16 %v178
  %v1102 = vunpack.c.h.b16 %v178
  %v1103 = vunpack.c.l.b16 %v179
  %v1104 = vunpack.c.h.b16 %v179
  %v1105 = vunpack.c.l.b16 %v180
  %v1106 = vunpack.c.h.b16 %v180
  %v1107 = vunpack.c.l.b16 %v181
  %v1108 = vunpack.c.l.b16 %v182
  %v1109 = vunpack.c.h.b16 %v182
  %v1110 = vunpack.c.l.b16 %v183
  %v1111 = vunpack.c.h.b16 %v183
  %v1112 = vunpack.c.l.b16 %v184
  %v1113 = vunpack.c.h.b16 %v184
  %v1114 = vunpack.c.l.b16 %v185
  %v1115 = vunpack.c.l.b16 %v186
  %v1116 = vunpack.c.h.b16 %v186
  %v1117 = vunpack.c.l.b16 %v187
  %v1118 = vunpack.c.h.b16 %v187
  %v1119 = vunpack.c.l.b16 %v188
  %v1120 = vunpack.c.h.b16 %v188
  %v1121 = vunpack.c.l.b16 %v189
  %v1122 = vunpack.c.l.b16 %v190
  %v1123 = vunpack.c.h.b16 %v190
  %v1124 = vunpack.c.l.b16 %v191
  %v1125 = vunpack.c.h.b16 %v191
  %v1126 = vunpack.c.l.b16 %v192
  %v1127 = vunpack.c.h.b16 %v192
  %v1128 = vunpack.c.l.b16 %v193
  %v1129 = vunpack.c.l.b16 %v194
  %v1130 = vunpack.c.h.b16 %v194
  %v1131 = vunpack.c.l.b16 %v195
  %v1132 = vunpack.c.h.b16 %v195
  %v1133 = vunpack.c.l.b16 %v196
  %v1134 = vunpack.c.h.b16 %v196
  %v1135 = vunpack.c.l.b16 %v197
  %v1136 = vunpack.c.l.b16 %v198
  %v1137 = vunpack.c.h.b16 %v198
  %v1138 = vunpack.c.l.b16 %v199
  %v1139 = vunpack.c.h.b16 %v199
  %v1140 = vunpack.c.l.b16 %v200
  %v1141 = vunpack.c.h.b16 %v200
  %v1142 = vunpack.c.l.b16 %v201
  %v1143 = vunpack.c.l.b16 %v202
  %v1144 = vunpack.c.h.b16 %v202
  %v1145 = vunpack.c.l.b16 %v203
  %v1146 = vunpack.c.h.b16 %v203
  %v1147 = vunpack.c.l.b16 %v204
  %v1148 = vunpack.c.h.b16 %v204
  %v1149 = vunpack.c.l.b16 %v205
  %v1150 = vunpack.c.l.b16 %v206
  %v1151 = vunpack.c.h.b16 %v206
  %v1152 = vunpack.c.l.b16 %v207
  %v1153 = vunpack.c.h.b16 %v207
  %v1154 = vunpack.c.l.b16 %v208
  %v1155 = vunpack.c.h.b16 %v208
  %v1156 = vunpack.c.l.b16 %v209
  %v1157 = vunpack.c.l.b16 %v210
  %v1158 = vunpack.c.h.b16 %v210
  %v1159 = vunpack.c.l.b16 %v211
  %v1160 = vunpack.c.h.b16 %v211
  %v1161 = vunpack.c.l.b16 %v212
  %v1162 = vunpack.c.h.b16 %v212
  %v1163 = vunpack.c.l.b16 %v213
  %v1164 = vunpack.c.l.b16 %v214
  %v1165 = vunpack.c.h.b16 %v214
  %v1166 = vunpack.c.l.b16 %v215
  %v1167 = vunpack.c.h.b16 %v215
  %v1168 = vunpack.c.l.b16 %v216
  %v1169 = vunpack.c.h.b16 %v216
  %v1170 = vunpack.c.l.b16 %v217
  %v1171 = vunpack.c.l.b16 %v218
  %v1172 = vunpack.c.h.b16 %v218
  %v1173 = vunpack.c.l.b16 %v219
  %v1174 = vunpack.c.h.b16 %v219
  %v1175 = vunpack.c.l.b16 %v220
  %v1176 = vunpack.c.h.b16 %v220
  %v1177 = vunpack.c.l.b16 %v221
  %v1178 = vunpack.c.l.b16 %v222
  %v1179 = vunpack.c.h.b16 %v222
  %v1180 = vunpack.c.l.b16 %v223
  %v1181 = vunpack.c.h.b16 %v223
  %v1182 = vunpack.c.l.b16 %v224
  %v1183 = vunpack.c.h.b16 %v224
  %v1184 = vunpack.c.l.b16 %v225
  %v1185 = vunpack.c.l.b16 %v226
  %v1186 = vunpack.c.h.b16 %v226
  %v1187 = vunpack.c.l.b16 %v227
  %v1188 = vunpack.c.h.b16 %v227
  %v1189 = vunpack.c.l.b16 %v228
  %v1190 = vunpack.c.h.b16 %v228
  %v1191 = vunpack.c.l.b16 %v229
  %v1192 = vunpack.c.l.b16 %v230
  %v1193 = vunpack.c.h.b16 %v230
  %v1194 = vunpack.c.l.b16 %v231
  %v1195 = vunpack.c.h.b16 %v231
  %v1196 = vunpack.c.l.b16 %v232
  %v1197 = vunpack.c.h.b16 %v232
  %v1198 = vunpack.c.l.b16 %v233
  %v1199 = vunpack.c.l.b16 %v234
  %v1200 = vunpack.c.h.b16 %v234
  %v1201 = vunpack.c.l.b16 %v235
  %v1202 = vunpack.c.h.b16 %v235
  %v1203 = vunpack.c.l.b16 %v236
  %v1204 = vunpack.c.h.b16 %v236
  %v1205 = vunpack.c.l.b16 %v237
  %v1206 = vunpack.c.l.b16 %v238
  %v1207 = vunpack.c.h.b16 %v238
  %v1208 = vunpack.c.l.b16 %v239
  %v1209 = vunpack.c.h.b16 %v239
  %v1210 = vunpack.c.l.b16 %v240
  %v1211 = vunpack.c.h.b16 %v240
  %v1212 = vunpack.c.l.b16 %v241
  %v1213 = vunpack.c.l.b16 %v242
  %v1214 = vunpack.c.h.b16 %v242
  %v1215 = vunpack.c.l.b16 %v243
  %v1216 = vunpack.c.h.b16 %v243
  %v1217 = vunpack.c.l.b16 %v244
  %v1218 = vunpack.c.h.b16 %v244
  %v1219 = vunpack.c.l.b16 %v245
  %v1220 = vunpack.c.l.b16 %v246
  %v1221 = vunpack.c.h.b16 %v246
  %v1222 = vunpack.c.l.b16 %v247
  %v1223 = vunpack.c.h.b16 %v247
  %v1224 = vunpack.c.l.b16 %v248
  %v1225 = vunpack.c.h.b16 %v248
  %v1226 = vunpack.c.l.b16 %v249
  %v1227 = vunpack.c.l.b16 %v250
  %v1228 = vunpack.c.h.b16 %v250
  %v1229 = vunpack.c.l.b16 %v251
  %v1230 = vunpack.c.h.b16 %v251
  %v1231 = vunpack.c.l.b16 %v252
  %v1232 = vunpack.c.h.b16 %v252
  %v1233 = vunpack.c.l.b16 %v253
  %v1234 = vunpack.c.l.b16 %v254
  %v1235 = vunpack.c.h.b16 %v254
  %v1236 = vunpack.c.l.b16 %v255
  %v1237 = vunpack.c.h.b16 %v255
  %v1238 = vunpack.c.l.b16 %v256
  %v1239 = vunpack.c.h.b16 %v256
  %v1240 = vunpack.c.l.b16 %v257
  %v1241 = vunpack.c.l.b16 %v258
  %v1242 = vunpack.c.h.b16 %v258
  %v1243 = vunpack.c.l.b16 %v259
  %v1244 = vunpack.c.h.b16 %v259
  %v1245 = vunpack.c.l.b16 %v260
  %v1246 = vunpack.c.h.b16 %v260
  %v1247 = vunpack.c.l.b16 %v261
  %v1248 = vunpack.c.l.b16 %v262
  %v1249 = vunpack.c.h.b16 %v262
  %v1250 = vunpack.c.l.b16 %v263
  %v1251 = vunpack.c.h.b16 %v263
  %v1252 = vunpack.c.l.b16 %v264
  %v1253 = vunpack.c.h.b16 %v264
  %v1254 = vunpack.c.l.b16 %v265
  %v1255 = vunpack.c.l.b16 %v266
  %v1256 = vunpack.c.h.b16 %v266
  %v1257 = vunpack.c.l.b16 %v267
  %v1258 = vunpack.c.h.b16 %v267
  %v1259 = vunpack.c.l.b16 %v268
  %v1260 = vunpack.c.h.b16 %v268
  %v1261 = vunpack.c.l.b16 %v269
  %v1262 = vunpack.c.l.b16 %v270
  %v1263 = vunpack.c.h.b16 %v270
  %v1264 = vunpack.c.l.b16 %v271
  %v1265 = vunpack.c.h.b16 %v271
  %v1266 = vunpack.c.l.b16 %v272
  %v1267 = vunpack.c.h.b16 %v272
  %v1268 = vunpack.c.l.b16 %v273
  %v1269 = vunpack.c.l.b16 %v274
  %v1270 = vunpack.c.h.b16 %v274
  %v1271 = vunpack.c.l.b16 %v275
  %v1272 = vunpack.c.h.b16 %v275
  %v1273 = vunpack.c.l.b16 %v276
  %v1274 = vunpack.c.h.b16 %v276
  %v1275 = vunpack.c.l.b16 %v277
  %v1276 = vunpack.c.l.b16 %v278
  %v1277 = vunpack.c.h.b16 %v278
  %v1278 = vunpack.c.l.b16 %v279
  %v1279 = vunpack.c.h.b16 %v279
  %v1280 = vunpack.c.l.b16 %v280
  %v1281 = vunpack.c.h.b16 %v280
  %v1282 = vunpack.c.l.b16 %v281
  %v1283 = vunpack.c.l.b16 %v282
  %v1284 = vunpack.c.h.b16 %v282
  %v1285 = vunpack.c.l.b16 %v283
  %v1286 = vunpack.c.h.b16 %v283
  %v1287 = vunpack.c.l.b16 %v284
  %v1288 = vunpack.c.h.b16 %v284
  %v1289 = vunpack.c.l.b16 %v285
  %v1290 = vunpack.c.l.b16 %v286
  %v1291 = vunpack.c.h.b16 %v286
  %v1292 = vunpack.c.l.b16 %v287
  %v1293 = vunpack.c.h.b16 %v287
  %v1294 = vunpack.c.l.b16 %v288
  %v1295 = vunpack.c.h.b16 %v288
  %v1296 = vunpack.c.l.b16 %v289
  %v1297 = vunpack.c.l.b16 %v290
  %v1298 = vunpack.c.h.b16 %v290
  %v1299 = vunpack.c.l.b16 %v291
  %v1300 = vunpack.c.h.b16 %v291
  %v1301 = vunpack.c.l.b16 %v292
  %v1302 = vunpack.c.h.b16 %v292
  %v1303 = vunpack.c.l.b16 %v293
  %v1304 = vunpack.c.l.b16 %v294
  %v1305 = vunpack.c.h.b16 %v294
  %v1306 = vunpack.c.l.b16 %v295
  %v1307 = vunpack.c.h.b16 %v295
  %v1308 = vunpack.c.l.b16 %v296
  %v1309 = vunpack.c.h.b16 %v296
  %v1310 = vunpack.c.l.b16 %v297
  %v1311 = vunpack.c.l.b16 %v298
  %v1312 = vunpack.c.h.b16 %v298
  %v1313 = vunpack.c.l.b16 %v299
  %v1314 = vunpack.c.h.b16 %v299
  %v1315 = vunpack.c.l.b16 %v300
  %v1316 = vunpack.c.h.b16 %v300
  %v1317 = vunpack.c.l.b16 %v301
  %v1318 = vunpack.c.l.b16 %v302
  %v1319 = vunpack.c.h.b16 %v302
  %v1320 = vunpack.c.l.b16 %v303
  %v1321 = vunpack.c.h.b16 %v303
  %v1322 = vunpack.c.l.b16 %v304
  %v1323 = vunpack.c.h.b16 %v304
  %v1324 = vunpack.c.l.b16 %v305
  %v1325 = vunpack.c.l.b16 %v306
  %v1326 = vunpack.c.h.b16 %v306
  %v1327 = vunpack.c.l.b16 %v307
  %v1328 = vunpack.c.h.b16 %v307
  %v1329 = vunpack.c.l.b16 %v308
  %v1330 = vunpack.c.h.b16 %v308
  %v1331 = vunpack.c.l.b16 %v309
  %v1332 = vunpack.c.l.b16 %v310
  %v1333 = vunpack.c.h.b16 %v310
  %v1334 = vunpack.c.l.b16 %v311
  %v1335 = vunpack.c.h.b16 %v311
  %v1336 = vunpack.c.l.b16 %v312
  %v1337 = vunpack.c.h.b16 %v312
  %v1338 = vunpack.c.l.b16 %v313
  %v1339 = vunpack.c.l.b16 %v314
  %v1340 = vunpack.c.h.b16 %v314
  %v1341 = vunpack.c.l.b16 %v315
  %v1342 = vunpack.c.h.b16 %v315
  %v1343 = vunpack.c.l.b16 %v316
  %v1344 = vunpack.c.h.b16 %v316
  %v1345 = vunpack.c.l.b16 %v317
  %v1346 = vunpack.c.l.b16 %v318
  %v1347 = vunpack.c.h.b16 %v318
  %v1348 = vunpack.c.l.b16 %v319
  %v1349 = vunpack.c.h.b16 %v319
  %v1350 = vunpack.c.l.b16 %v320
  %v1351 = vunpack.c.h.b16 %v320
  %v1352 = vunpack.c.l.b16 %v321
  %v1353 = vunpack.c.l.b16 %v322
  %v1354 = vunpack.c.h.b16 %v322
  %v1355 = vunpack.c.l.b16 %v323
  %v1356 = vunpack.c.h.b16 %v323
  %v1357 = vunpack.c.l.b16 %v324
  %v1358 = vunpack.c.h.b16 %v324
  %v1359 = vunpack.c.l.b16 %v325
  %v1360 = vunpack.c.l.b16 %v326
  %v1361 = vunpack.c.h.b16 %v326
  %v1362 = vunpack.c.l.b16 %v327
  %v1363 = vunpack.c.h.b16 %v327
  %v1364 = vunpack.c.l.b16 %v328
  %v1365 = vunpack.c.h.b16 %v328
  %v1366 = vunpack.c.l.b16 %v329
  %v1367 = vunpack.c.l.b16 %v330
  %v1368 = vunpack.c.h.b16 %v330
  %v1369 = vunpack.c.l.b16 %v331
  %v1370 = vunpack.c.h.b16 %v331
  %v1371 = vunpack.c.l.b16 %v332
  %v1372 = vunpack.c.h.b16 %v332
  %v1373 = vunpack.c.l.b16 %v333
  %v1374 = vunpack.c.l.b16 %v334
  %v1375 = vunpack.c.h.b16 %v334
  %v1376 = vunpack.c.l.b16 %v335
  %v1377 = vunpack.c.h.b16 %v335
  %v1378 = vunpack.c.l.b16 %v336
  %v1379 = vunpack.c.h.b16 %v336
  %v1380 = vunpack.c.l.b16 %v337
  %v1381 = vunpack.c.l.b16 %v338
  %v1382 = vunpack.c.h.b16 %v338
  %v1383 = vunpack.c.l.b16 %v339
  %v1384 = vunpack.c.h.b16 %v339
  %v1385 = vunpack.c.l.b16 %v340
  %v1386 = vunpack.c.h.b16 %v340
  %v1387 = vunpack.c.l.b16 %v341
  %v1388 = vunpack.c.l.b16 %v342
  %v1389 = vunpack.c.h.b16 %v342
  %v1390 = vunpack.c.l.b16 %v343
  %v1391 = vunpack.c.h.b16 %v343
  %v1392 = vunpack.c.l.b16 %v344
  %v1393 = vunpack.c.h.b16 %v344
  %v1394 = vunpack.c.l.b16 %v345
  %v1395 = vunpack.c.l.b16 %v346
  %v1396 = vunpack.c.h.b16 %v346
  %v1397 = vunpack.c.l.b16 %v347
  %v1398 = vunpack.c.h.b16 %v347
  %v1399 = vunpack.c.l.b16 %v348
  %v1400 = vunpack.c.h.b16 %v348
  %v1401 = vunpack.c.l.b16 %v349
  %v1402 = vunpack.c.l.b16 %v350
  %v1403 = vunpack.c.h.b16 %v350
  %v1404 = vunpack.c.l.b16 %v351
  %v1405 = vunpack.c.h.b16 %v351
  %v1406 = vunpack.c.l.b16 %v352
  %v1407 = vunpack.c.h.b16 %v352
  %v1408 = vunpack.c.l.b16 %v353
  %v1409 = vunpack.c.l.b16 %v354
  %v1410 = vunpack.c.h.b16 %v354
  %v1411 = vunpack.c.l.b16 %v355
  %v1412 = vunpack.c.h.b16 %v355
  %v1413 = vunpack.c.l.b16 %v356
  %v1414 = vunpack.c.h.b16 %v356
  %v1415 = vunpack.c.l.b16 %v357
  %v1416 = vunpack.c.l.b16 %v358
  %v1417 = vunpack.c.h.b16 %v358
  %v1418 = vunpack.c.l.b16 %v359
  %v1419 = vunpack.c.h.b16 %v359
  %v1420 = vunpack.c.l.b16 %v360
  %v1421 = vunpack.c.h.b16 %v360
  %v1422 = vunpack.c.l.b16 %v361
  %v1423 = vunpack.c.l.b16 %v362
  %v1424 = vunpack.c.h.b16 %v362
  %v1425 = vunpack.c.l.b16 %v363
  %v1426 = vunpack.c.h.b16 %v363
  %v1427 = vunpack.c.l.b16 %v364
  %v1428 = vunpack.c.h.b16 %v364
  %v1429 = vunpack.c.l.b16 %v365
  %v1430 = vunpack.c.l.b16 %v366
  %v1431 = vunpack.c.h.b16 %v366
  %v1432 = vunpack.c.l.b16 %v367
  %v1433 = vunpack.c.h.b16 %v367
  %v1434 = vunpack.c.l.b16 %v368
  %v1435 = vunpack.c.h.b16 %v368
  %v1436 = vunpack.c.l.b16 %v369
  %v1437 = vunpack.c.l.b16 %v370
  %v1438 = vunpack.c.h.b16 %v370
  %v1439 = vunpack.c.l.b16 %v371
  %v1440 = vunpack.c.h.b16 %v371
  %v1441 = vunpack.c.l.b16 %v372
  %v1442 = vunpack.c.h.b16 %v372
  %v1443 = vunpack.c.l.b16 %v373
  %v1444 = vunpack.c.l.b16 %v374
  %v1445 = vunpack.c.h.b16 %v374
  %v1446 = vunpack.c.l.b16 %v375
  %v1447 = vunpack.c.h.b16 %v375
  %v1448 = vunpack.c.l.b16 %v376
  %v1449 = vunpack.c.h.b16 %v376
  %v1450 = vunpack.c.l.b16 %v377
  %v1451 = vunpack.c.l.b16 %v378
  %v1452 = vunpack.c.h.b16 %v378
  %v1453 = vunpack.c.l.b16 %v379
  %v1454 = vunpack.c.h.b16 %v379
  %v1455 = vunpack.c.l.b16 %v380
  %v1456 = vunpack.c.h.b16 %v380
  %v1457 = vunpack.c.l.b16 %v381
  %v1458 = vunpack.c.l.b16 %v382
  %v1459 = vunpack.c.h.b16 %v382
  %v1460 = vunpack.c.l.b16 %v383
  %v1461 = vunpack.c.h.b16 %v383
  %v1462 = vunpack.c.l.b16 %v384
  %v1463 = vunpack.c.h.b16 %v384
  %v1464 = vunpack.c.l.b16 %v385
  %v1465 = vunpack.c.l.b16 %v386
  %v1466 = vunpack.c.h.b16 %v386
  %v1467 = vunpack.c.l.b16 %v387
  %v1468 = vunpack.c.h.b16 %v387
  %v1469 = vunpack.c.l.b16 %v388
  %v1470 = vunpack.c.h.b16 %v388
  %v1471 = vunpack.c.l.b16 %v389
  %v1472 = vunpack.c.l.b16 %v390
  %v1473 = vunpack.c.h.b16 %v390
  %v1474 = vunpack.c.l.b16 %v391
  %v1475 = vunpack.c.h.b16 %v391
  %v1476 = vunpack.c.l.b16 %v392
  %v1477 = vunpack.c.h.b16 %v392
  %v1478 = vunpack.c.l.b16 %v393
  %v1479 = vunpack.c.l.b16 %v394
  %v1480 = vunpack.c.h.b16 %v394
  %v1481 = vunpack.c.l.b16 %v395
  %v1482 = vunpack.c.h.b16 %v395
  %v1483 = vunpack.c.l.b16 %v396
  %v1484 = vunpack.c.h.b16 %v396
  %v1485 = vunpack.c.l.b16 %v397
  %v1486 = vunpack.c.l.b16 %v398
  %v1487 = vunpack.c.h.b16 %v398
  %v1488 = vunpack.c.l.b16 %v399
  %v1489 = vunpack.c.h.b16 %v399
  %v1490 = vunpack.c.l.b16 %v400
  %v1491 = vunpack.c.h.b16 %v400
  %v1492 = vunpack.c.l.b16 %v401
  %v1493 = vunpack.c.l.b16 %v402
  %v1494 = vunpack.c.h.b16 %v402
  %v1495 = vunpack.c.l.b16 %v403
  %v1496 = vunpack.c.h.b16 %v403
  %v1497 = vunpack.c.l.b16 %v404
  %v1498 = vunpack.c.h.b16 %v404
  %v1499 = vunpack.c.l.b16 %v405
  %v1500 = vunpack.c.l.b16 %v406
  %v1501 = vunpack.c.h.b16 %v406
  %v1502 = vunpack.c.l.b16 %v407
  %v1503 = vunpack.c.h.b16 %v407
  %v1504 = vunpack.c.l.b16 %v408
  %v1505 = vunpack.c.h.b16 %v408
  %v1506 = vunpack.c.l.b16 %v409
  %v1507 = vunpack.c.l.b16 %v410
  %v1508 = vunpack.c.h.b16 %v410
  %v1509 = vunpack.c.l.b16 %v411
  %v1510 = vunpack.c.h.b16 %v411
  %v1511 = vunpack.c.l.b16 %v412
  %v1512 = vunpack.c.h.b16 %v412
  %v1513 = vunpack.c.l.b16 %v413
  %v1514 = vunpack.c.l.b16 %v414
  %v1515 = vunpack.c.h.b16 %v414
  %v1516 = vunpack.c.l.b16 %v415
  %v1517 = vunpack.c.h.b16 %v415
  %v1518 = vunpack.c.l.b16 %v416
  %v1519 = vunpack.c.h.b16 %v416
  %v1520 = vunpack.c.l.b16 %v417
  %v1521 = vunpack.c.l.b16 %v418
  %v1522 = vunpack.c.h.b16 %v418
  %v1523 = vunpack.c.l.b16 %v419
  %v1524 = vunpack.c.h.b16 %v419
  %v1525 = vunpack.c.l.b16 %v420
  %v1526 = vunpack.c.h.b16 %v420
  %v1527 = vunpack.c.l.b16 %v421
  %v1528 = vunpack.c.l.b16 %v422
  %v1529 = vunpack.c.h.b16 %v422
  %v1530 = vunpack.c.l.b16 %v423
  %v1531 = vunpack.c.h.b16 %v423
  %v1532 = vunpack.c.l.b16 %v424
  %v1533 = vunpack.c.h.b16 %v424
  %v1534 = vunpack.c.l.b16 %v425
  %v1535 = vpack.c.b16 %v856, %v849
  %v1536 = vpack.c.b16 %v857, %v850
  %v1537 = vpack.c.b16 %v858, %v851
  %v1538 = vpack.c.b16 %v859, %v852
  %v1539 = vpack.c.b16 %v860, %v853
  %v1540 = vpack.c.b16 %v861, %v854
  %v1541 = vpack.c.b16 %v862, %v855
  %v1542 = vpack.c.b16 %v870, %v863
  %v1543 = vpack.c.b16 %v871, %v864
  %v1544 = vpack.c.b16 %v872, %v865
  %v1545 = vpack.c.b16 %v873, %v866
  %v1546 = vpack.c.b16 %v874, %v867
  %v1547 = vpack.c.b16 %v875, %v868
  %v1548 = vpack.c.b16 %v876, %v869
  %v1549 = vpack.c.b16 %v884, %v877
  %v1550 = vpack.c.b16 %v885, %v878
  %v1551 = vpack.c.b16 %v886, %v879
  %v1552 = vpack.c.b16 %v887, %v880
  %v1553 = vpack.c.b16 %v888, %v881
  %v1554 = vpack.c.b16 %v889, %v882
  %v1555 = vpack.c.b16 %v890, %v883
  %v1556 = vpack.c.b16 %v898, %v891
  %v1557 = vpack.c.b16 %v899, %v892
  %v1558 = vpack.c.b16 %v900, %v893
  %v1559 = vpack.c.b16 %v901, %v894
  %v1560 = vpack.c.b16 %v902, %v895
  %v1561 = vpack.c.b16 %v903, %v896
  %v1562 = vpack.c.b16 %v904, %v897
  %v1563 = vpack.c.b16 %v912, %v905
  %v1564 = vpack.c.b16 %v913, %v906
  %v1565 = vpack.c.b16 %v914, %v907
  %v1566 = vpack.c.b16 %v915, %v908
  %v1567 = vpack.c.b16 %v916, %v909
  %v1568 = vpack.c.b16 %v917, %v910
  %v1569 = vpack.c.b16 %v918, %v911
  %v1570 = vpack.c.b16 %v926, %v919
  %v1571 = vpack.c.b16 %v927, %v920
  %v1572 = vpack.c.b16 %v928, %v921
  %v1573 = vpack.c.b16 %v929, %v922
  %v1574 = vpack.c.b16 %v930, %v923
  %v1575 = vpack.c.b16 %v931, %v924
  %v1576 = vpack.c.b16 %v932, %v925
  %v1577 = vpack.c.b16 %v940, %v933
  %v1578 = vpack.c.b16 %v941, %v934
  %v1579 = vpack.c.b16 %v942, %v935
  %v1580 = vpack.c.b16 %v943, %v936
  %v1581 = vpack.c.b16 %v944, %v937
  %v1582 = vpack.c.b16 %v945, %v938
  %v1583 = vpack.c.b16 %v946, %v939
  %v1584 = vpack.c.b16 %v954, %v947
  %v1585 = vpack.c.b16 %v955, %v948
  %v1586 = vpack.c.b16 %v956, %v949
  %v1587 = vpack.c.b16 %v957, %v950
  %v1588 = vpack.c.b16 %v958, %v951
  %v1589 = vpack.c.b16 %v959, %v952
  %v1590 = vpack.c.b16 %v960, %v953
  %v1591 = vpack.c.b16 %v968, %v961
  %v1592 = vpack.c.b16 %v969, %v962
  %v1593 = vpack.c.b16 %v970, %v963
  %v1594 = vpack.c.b16 %v971, %v964
  %v1595 = vpack.c.b16 %v972, %v965
  %v1596 = vpack.c.b16 %v973, %v966
  %v1597 = vpack.c.b16 %v974, %v967
  %v1598 = vpack.c.b16 %v982, %v975
  %v1599 = vpack.c.b16 %v983, %v976
  %v1600 = vpack.c.b16 %v984, %v977
  %v1601 = vpack.c.b16 %v985, %v978
  %v1602 = vpack.c.b16 %v986, %v979
  %v1603 = vpack.c.b16 %v987, %v980
  %v1604 = vpack.c.b16 %v988, %v981
  %v1605 = vpack.c.b16 %v996, %v989
  %v1606 = vpack.c.b16 %v997, %v990
  %v1607 = vpack.c.b16 %v998, %v991
  %v1608 = vpack.c.b16 %v999, %v992
  %v1609 = vpack.c.b16 %v1000, %v993
  %v1610 = vpack.c.b16 %v1001, %v994
  %v1611 = vpack.c.b16 %v1002, %v995
  %v1612 = vpack.c.b16 %v1010, %v1003
  %v1613 = vpack.c.b16 %v1011, %v1004
  %v1614 = vpack.c.b16 %v1012, %v1005
  %v1615 = vpack.c.b16 %v1013, %v1006
  %v1616 = vpack.c.b16 %v1014, %v1007
  %v1617 = vpack.c.b16 %v1015, %v1008
  %v1618 = vpack.c.b16 %v1016, %v1009
  %v1619 = vpack.c.b16 %v1024, %v1017
  %v1620 = vpack.c.b16 %v1025, %v1018
  %v1621 = vpack.c.b16 %v1026, %v1019
  %v1622 = vpack.c.b16 %v1027, %v1020
  %v1623 = vpack.c.b16 %v1028, %v1021
  %v1624 = vpack.c.b16 %v1029, %v1022
  %v1625 = vpack.c.b16 %v1030, %v1023
  %v1626 = vpack.c.b16 %v1038, %v1031
  %v1627 = vpack.c.b16 %v1039, %v1032
  %v1628 = vpack.c.b16 %v1040, %v1033
  %v1629 = vpack.c.b16 %v1041, %v1034
  %v1630 = vpack.c.b16 %v1042, %v1035
  %v1631 = vpack.c.b16 %v1043, %v1036
  %v1632 = vpack.c.b16 %v1044, %v1037
  %v1633 = vpack.c.b16 %v1052, %v1045
  %v1634 = vpack.c.b16 %v1053, %v1046
  %v1635 = vpack.c.b16 %v1054, %v1047
  %v1636 = vpack.c.b16 %v1055, %v1048
  %v1637 = vpack.c.b16 %v1056, %v1049
  %v1638 = vpack.c.b16 %v1057, %v1050
  %v1639 = vpack.c.b16 %v1058, %v1051
  %v1640 = vpack.c.b16 %v1066, %v1059
  %v1641 = vpack.c.b16 %v1067, %v1060
  %v1642 = vpack.c.b16 %v1068, %v1061
  %v1643 = vpack.c.b16 %v1069, %v1062
  %v1644 = vpack.c.b16 %v1070, %v1063
  %v1645 = vpack.c.b16 %v1071, %v1064
  %v1646 = vpack.c.b16 %v1072, %v1065
  %v1647 = vpack.c.b16 %v1080, %v1073
  %v1648 = vpack.c.b16 %v1081, %v1074
  %v1649 = vpack.c.b16 %v1082, %v1075
  %v1650 = vpack.c.b16 %v1083, %v1076
  %v1651 = vpack.c.b16 %v1084, %v1077
  %v1652 = vpack.c.b16 %v1085, %v1078
  %v1653 = vpack.c.b16 %v1086, %v1079
  %v1654 = vpack.c.b16 %v1094, %v1087
  %v1655 = vpack.c.b16 %v1095, %v1088
  %v1656 = vpack.c.b16 %v1096, %v1089
  %v1657 = vpack.c.b16 %v1097, %v1090
  %v1658 = vpack.c.b16 %v1098, %v1091
  %v1659 = vpack.c.b16 %v1099, %v1092
  %v1660 = vpack.c.b16 %v1100, %v1093
  %v1661 = vpack.c.b16 %v1108, %v1101
  %v1662 = vpack.c.b16 %v1109, %v1102
  %v1663 = vpack.c.b16 %v1110, %v1103
  %v1664 = vpack.c.b16 %v1111, %v1104
  %v1665 = vpack.c.b16 %v1112, %v1105
  %v1666 = vpack.c.b16 %v1113, %v1106
  %v1667 = vpack.c.b16 %v1114, %v1107
  %v1668 = vpack.c.b16 %v1122, %v1115
  %v1669 = vpack.c.b16 %v1123, %v1116
  %v1670 = vpack.c.b16 %v1124, %v1117
  %v1671 = vpack.c.b16 %v1125, %v1118
  %v1672 = vpack.c.b16 %v1126, %v1119
  %v1673 = vpack.c.b16 %v1127, %v1120
  %v1674 = vpack.c.b16 %v1128, %v1121
  %v1675 = vpack.c.b16 %v1136, %v1129
  %v1676 = vpack.c.b16 %v1137, %v1130
  %v1677 = vpack.c.b16 %v1138, %v1131
  %v1678 = vpack.c.b16 %v1139, %v1132
  %v1679 = vpack.c.b16 %v1140, %v1133
  %v1680 = vpack.c.b16 %v1141, %v1134
  %v1681 = vpack.c.b16 %v1142, %v1135
  %v1682 = vpack.c.b16 %v1150, %v1143
  %v1683 = vpack.c.b16 %v1151, %v1144
  %v1684 = vpack.c.b16 %v1152, %v1145
  %v1685 = vpack.c.b16 %v1153, %v1146
  %v1686 = vpack.c.b16 %v1154, %v1147
  %v1687 = vpack.c.b16 %v1155, %v1148
  %v1688 = vpack.c.b16 %v1156, %v1149
  %v1689 = vpack.c.b16 %v1164, %v1157
  %v1690 = vpack.c.b16 %v1165, %v1158
  %v1691 = vpack.c.b16 %v1166, %v1159
  %v1692 = vpack.c.b16 %v1167, %v1160
  %v1693 = vpack.c.b16 %v1168, %v1161
  %v1694 = vpack.c.b16 %v1169, %v1162
  %v1695 = vpack.c.b16 %v1170, %v1163
  %v1696 = vpack.c.b16 %v1178, %v1171
  %v1697 = vpack.c.b16 %v1179, %v1172
  %v1698 = vpack.c.b16 %v1180, %v1173
  %v1699 = vpack.c.b16 %v1181, %v1174
  %v1700 = vpack.c.b16 %v1182, %v1175
  %v1701 = vpack.c.b16 %v1183, %v1176
  %v1702 = vpack.c.b16 %v1184, %v1177
  %v1703 = vpack.c.b16 %v1192, %v1185
  %v1704 = vpack.c.b16 %v1193, %v1186
  %v1705 = vpack.c.b16 %v1194, %v1187
  %v1706 = vpack.c.b16 %v1195, %v1188
  %v1707 = vpack.c.b16 %v1196, %v1189
  %v1708 = vpack.c.b16 %v1197, %v1190
  %v1709 = vpack.c.b16 %v1198, %v1191
  %v1710 = vpack.c.b16 %v1206, %v1199
  %v1711 = vpack.c.b16 %v1207, %v1200
  %v1712 = vpack.c.b16 %v1208, %v1201
  %v1713 = vpack.c.b16 %v1209, %v1202
  %v1714 = vpack.c.b16 %v1210, %v1203
  %v1715 = vpack.c.b16 %v1211, %v1204
  %v1716 = vpack.c.b16 %v1212, %v1205
  %v1717 = vpack.c.b16 %v1220, %v1213
  %v1718 = vpack.c.b16 %v1221, %v1214
  %v1719 = vpack.c.b16 %v1222, %v1215
  %v1720 = vpack.c.b16 %v1223, %v1216
  %v1721 = vpack.c.b16 %v1224, %v1217
  %v1722 = vpack.c.b16 %v1225, %v1218
  %v1723 = vpack.c.b16 %v1226, %v1219
  %v1724 = vpack.c.b16 %v1234, %v1227
  %v1725 = vpack.c.b16 %v1235, %v1228
  %v1726 = vpack.c.b16 %v1236, %v1229
  %v1727 = vpack.c.b16 %v1237, %v1230
  %v1728 = vpack.c.b16 %v1238, %v1231
  %v1729 = vpack.c.b16 %v1239, %v1232
  %v1730 = vpack.c.b16 %v1240, %v1233
  %v1731 = vpack.c.b16 %v1248, %v1241
  %v1732 = vpack.c.b16 %v1249, %v1242
  %v1733 = vpack.c.b16 %v1250, %v1243
  %v1734 = vpack.c.b16 %v1251, %v1244
  %v1735 = vpack.c.b16 %v1252, %v1245
  %v1736 = vpack.c.b16 %v1253, %v1246
  %v1737 = vpack.c.b16 %v1254, %v1247
  %v1738 = vpack.c.b16 %v1262, %v1255
  %v1739 = vpack.c.b16 %v1263, %v1256
  %v1740 = vpack.c.b16 %v1264, %v1257
  %v1741 = vpack.c.b16 %v1265, %v1258
  %v1742 = vpack.c.b16 %v1266, %v1259
  %v1743 = vpack.c.b16 %v1267, %v1260
  %v1744 = vpack.c.b16 %v1268, %v1261
  %v1745 = vpack.c.b16 %v1276, %v1269
  %v1746 = vpack.c.b16 %v1277, %v1270
  %v1747 = vpack.c.b16 %v1278, %v1271
  %v1748 = vpack.c.b16 %v1279, %v1272
  %v1749 = vpack.c.b16 %v1280, %v1273
  %v1750 = vpack.c.b16 %v1281, %v1274
  %v1751 = vpack.c.b16 %v1282, %v1275
  %v1752 = vpack.c.b16 %v1290, %v1283
  %v1753 = vpack.c.b16 %v1291, %v1284
  %v1754 = vpack.c.b16 %v1292, %v1285
  %v1755 = vpack.c.b16 %v1293, %v1286
  %v1756 = vpack.c.b16 %v1294, %v1287
  %v1757 = vpack.c.b16 %v1295, %v1288
  %v1758 = vpack.c.b16 %v1296, %v1289
  %v1759 = vpack.c.b16 %v1304, %v1297
  %v1760 = vpack.c.b16 %v1305, %v1298
  %v1761 = vpack.c.b16 %v1306, %v1299
  %v1762 = vpack.c.b16 %v1307, %v1300
  %v1763 = vpack.c.b16 %v1308, %v1301
  %v1764 = vpack.c.b16 %v1309, %v1302
  %v1765 = vpack.c.b16 %v1310, %v1303
  %v1766 = vpack.c.b16 %v1318, %v1311
  %v1767 = vpack.c.b16 %v1319, %v1312
  %v1768 = vpack.c.b16 %v1320, %v1313
  %v1769 = vpack.c.b16 %v1321, %v1314
  %v1770 = vpack.c.b16 %v1322, %v1315
  %v1771 = vpack.c.b16 %v1323, %v1316
  %v1772 = vpack.c.b16 %v1324, %v1317
  %v1773 = vpack.c.b16 %v1332, %v1325
  %v1774 = vpack.c.b16 %v1333, %v1326
  %v1775 = vpack.c.b16 %v1334, %v1327
  %v1776 = vpack.c.b16 %v1335, %v1328
  %v1777 = vpack.c.b16 %v1336, %v1329
  %v1778 = vpack.c.b16 %v1337, %v1330
  %v1779 = vpack.c.b16 %v1338, %v1331
  %v1780 = vpack.c.b16 %v1346, %v1339
  %v1781 = vpack.c.b16 %v1347, %v1340
  %v1782 = vpack.c.b16 %v1348, %v1341
  %v1783 = vpack.c.b16 %v1349, %v1342
  %v1784 = vpack.c.b16 %v1350, %v1343
  %v1785 = vpack.c.b16 %v1351, %v1344
  %v1786 = vpack.c.b16 %v1352, %v1345
  %v1787 = vpack.c.b16 %v1360, %v1353
  %v1788 = vpack.c.b16 %v1361, %v1354
  %v1789 = vpack.c.b16 %v1362, %v1355
  %v1790 = vpack.c.b16 %v1363, %v1356
  %v1791 = vpack.c.b16 %v1364, %v1357
  %v1792 = vpack.c.b16 %v1365, %v1358
  %v1793 = vpack.c.b16 %v1366, %v1359
  %v1794 = vpack.c.b16 %v1374, %v1367
  %v1795 = vpack.c.b16 %v1375, %v1368
  %v1796 = vpack.c.b16 %v1376, %v1369
  %v1797 = vpack.c.b16 %v1377, %v1370
  %v1798 = vpack.c.b16 %v1378, %v1371
  %v1799 = vpack.c.b16 %v1379, %v1372
  %v1800 = vpack.c.b16 %v1380, %v1373
  %v1801 = vpack.c.b16 %v1388, %v1381
  %v1802 = vpack.c.b16 %v1389, %v1382
  %v1803 = vpack.c.b16 %v1390, %v1383
  %v1804 = vpack.c.b16 %v1391, %v1384
  %v1805 = vpack.c.b16 %v1392, %v1385
  %v1806 = vpack.c.b16 %v1393, %v1386
  %v1807 = vpack.c.b16 %v1394, %v1387
  %v1808 = vpack.c.b16 %v1402, %v1395
  %v1809 = vpack.c.b16 %v1403, %v1396
  %v1810 = vpack.c.b16 %v1404, %v1397
  %v1811 = vpack.c.b16 %v1405, %v1398
  %v1812 = vpack.c.b16 %v1406, %v1399
  %v1813 = vpack.c.b16 %v1407, %v1400
  %v1814 = vpack.c.b16 %v1408, %v1401
  %v1815 = vpack.c.b16 %v1416, %v1409
  %v1816 = vpack.c.b16 %v1417, %v1410
  %v1817 = vpack.c.b16 %v1418, %v1411
  %v1818 = vpack.c.b16 %v1419, %v1412
  %v1819 = vpack.c.b16 %v1420, %v1413
  %v1820 = vpack.c.b16 %v1421, %v1414
  %v1821 = vpack.c.b16 %v1422, %v1415
  %v1822 = vpack.c.b16 %v1430, %v1423
  %v1823 = vpack.c.b16 %v1431, %v1424
  %v1824 = vpack.c.b16 %v1432, %v1425
  %v1825 = vpack.c.b16 %v1433, %v1426
  %v1826 = vpack.c.b16 %v1434, %v1427
  %v1827 = vpack.c.b16 %v1435, %v1428
  %v1828 = vpack.c.b16 %v1436, %v1429
  %v1829 = vpack.c.b16 %v1444, %v1437
  %v1830 = vpack.c.b16 %v1445, %v1438
  %v1831 = vpack.c.b16 %v1446, %v1439
  %v1832 = vpack.c.b16 %v1447, %v1440
  %v1833 = vpack.c.b16 %v1448, %v1441
  %v1834 = vpack.c.b16 %v1449, %v1442
  %v1835 = vpack.c.b16 %v1450, %v1443
  %v1836 = vpack.c.b16 %v1458, %v1451
  %v1837 = vpack.c.b16 %v1459, %v1452
  %v1838 = vpack.c.b16 %v1460, %v1453
  %v1839 = vpack.c.b16 %v1461, %v1454
  %v1840 = vpack.c.b16 %v1462, %v1455
  %v1841 = vpack.c.b16 %v1463, %v1456
  %v1842 = vpack.c.b16 %v1464, %v1457
  %v1843 = vpack.c.b16 %v1472, %v1465
  %v1844 = vpack.c.b16 %v1473, %v1466
  %v1845 = vpack.c.b16 %v1474, %v1467
  %v1846 = vpack.c.b16 %v1475, %v1468
  %v1847 = vpack.c.b16 %v1476, %v1469
  %v1848 = vpack.c.b16 %v1477, %v1470
  %v1849 = vpack.c.b16 %v1478, %v1471
  %v1850 = vpack.c.b16 %v1486, %v1479
  %v1851 = vpack.c.b16 %v1487, %v1480
  %v1852 = vpack.c.b16 %v1488, %v1481
  %v1853 = vpack.c.b16 %v1489, %v1482
  %v1854 = vpack.c.b16 %v1490, %v1483
  %v1855 = vpack.c.b16 %v1491, %v1484
  %v1856 = vpack.c.b16 %v1492, %v1485
  %v1857 = vpack.c.b16 %v1500, %v1493
  %v1858 = vpack.c.b16 %v1501, %v1494
  %v1859 = vpack.c.b16 %v1502, %v1495
  %v1860 = vpack.c.b16 %v1503, %v1496
  %v1861 = vpack.c.b16 %v1504, %v1497
  %v1862 = vpack.c.b16 %v1505, %v1498
  %v1863 = vpack.c.b16 %v1506, %v1499
  %v1864 = vpack.c.b16 %v1514, %v1507
  %v1865 = vpack.c.b16 %v1515, %v1508
  %v1866 = vpack.c.b16 %v1516, %v1509
  %v1867 = vpack.c.b16 %v1517, %v1510
  %v1868 = vpack.c.b16 %v1518, %v1511
  %v1869 = vpack.c.b16 %v1519, %v1512
  %v1870 = vpack.c.b16 %v1520, %v1513
  %v1871 = vpack.c.b16 %v1528, %v1521
  %v1872 = vpack.c.b16 %v1529, %v1522
  %v1873 = vpack.c.b16 %v1530, %v1523
  %v1874 = vpack.c.b16 %v1531, %v1524
  %v1875 = vpack.c.b16 %v1532, %v1525
  %v1876 = vpack.c.b16 %v1533, %v1526
  %v1877 = vpack.c.b16 %v1534, %v1527
  %vm2221 = vcmask 130048
  %v2222 = vsel %vm2221, %v450, 0
  %2224 = vmatpush.bf16.msra.mxu0 %v1584
  %2225 = vmatpush.bf16.msra.mxu0 %v1577
  %2226 = vmatpush.bf16.msra.mxu0 %v1570
  %2227 = vmatpush.bf16.msra.mxu0 %v1563
  %2228 = vmatpush.bf16.msra.mxu0 %v1556
  %2229 = vmatpush.bf16.msra.mxu0 %v1549
  %2230 = vmatpush.bf16.msra.mxu0 %v1542
  %2231 = vmatpush.bf16.msra.mxu0 %v1535
  %2232 = vmatmul.bf16.gmra.mxu0 %v444
  %v2233 = vpop.f32.mrf.mxu0
  %v2234 = vadd.f32 %v428, %v2233
  %v2235 = vpop.f32.mrf.mxu0
  %2236 = vdwg.mxu0
  %2237 = vmatpush.bf16.msra.mxu0 %v1640
  %2238 = vmatpush.bf16.msra.mxu0 %v1633
  %2239 = vmatpush.bf16.msra.mxu0 %v1626
  %2240 = vmatpush.bf16.msra.mxu0 %v1619
  %2241 = vmatpush.bf16.msra.mxu0 %v1612
  %2242 = vmatpush.bf16.msra.mxu0 %v1605
  %2243 = vmatpush.bf16.msra.mxu0 %v1598
  %2244 = vmatpush.bf16.msra.mxu0 %v1591
  %2245 = vmatmul.bf16.gmra.mxu0 %v445
  %v2246 = vpop.f32.mrf.mxu0
  %v2247 = vadd.f32 %v2234, %v2246
  %v2248 = vpop.f32.mrf.mxu0
  %2249 = vdwg.mxu0
  %2250 = vmatpush.bf16.msra.mxu0 %v1696
  %2251 = vmatpush.bf16.msra.mxu0 %v1689
  %2252 = vmatpush.bf16.msra.mxu0 %v1682
  %2253 = vmatpush.bf16.msra.mxu0 %v1675
  %2254 = vmatpush.bf16.msra.mxu0 %v1668
  %2255 = vmatpush.bf16.msra.mxu0 %v1661
  %2256 = vmatpush.bf16.msra.mxu0 %v1654
  %2257 = vmatpush.bf16.msra.mxu0 %v1647
  %2258 = vmatmul.bf16.gmra.mxu0 %v446
  %v2259 = vpop.f32.mrf.mxu0
  %v2260 = vadd.f32 %v2247, %v2259
  %v2261 = vpop.f32.mrf.mxu0
  %2262 = vdwg.mxu0
  %2263 = vmatpush.bf16.msra.mxu0 %v1752
  %2264 = vmatpush.bf16.msra.mxu0 %v1745
  %2265 = vmatpush.bf16.msra.mxu0 %v1738
  %2266 = vmatpush.bf16.msra.mxu0 %v1731
  %2267 = vmatpush.bf16.msra.mxu0 %v1724
  %2268 = vmatpush.bf16.msra.mxu0 %v1717
  %2269 = vmatpush.bf16.msra.mxu0 %v1710
  %2270 = vmatpush.bf16.msra.mxu0 %v1703
  %2271 = vmatmul.bf16.gmra.mxu0 %v447
  %v2272 = vpop.f32.mrf.mxu0
  %v2273 = vadd.f32 %v2260, %v2272
  %v2274 = vpop.f32.mrf.mxu0
  %2275 = vdwg.mxu0
  %2276 = vmatpush.bf16.msra.mxu0 %v1808
  %2277 = vmatpush.bf16.msra.mxu0 %v1801
  %2278 = vmatpush.bf16.msra.mxu0 %v1794
  %2279 = vmatpush.bf16.msra.mxu0 %v1787
  %2280 = vmatpush.bf16.msra.mxu0 %v1780
  %2281 = vmatpush.bf16.msra.mxu0 %v1773
  %2282 = vmatpush.bf16.msra.mxu0 %v1766
  %2283 = vmatpush.bf16.msra.mxu0 %v1759
  %2284 = vmatmul.bf16.gmra.mxu0 %v448
  %v2285 = vpop.f32.mrf.mxu0
  %v2286 = vadd.f32 %v2273, %v2285
  %v2287 = vpop.f32.mrf.mxu0
  %2288 = vdwg.mxu0
  %2289 = vmatpush.bf16.msra.mxu0 %v1864
  %2290 = vmatpush.bf16.msra.mxu0 %v1857
  %2291 = vmatpush.bf16.msra.mxu0 %v1850
  %2292 = vmatpush.bf16.msra.mxu0 %v1843
  %2293 = vmatpush.bf16.msra.mxu0 %v1836
  %2294 = vmatpush.bf16.msra.mxu0 %v1829
  %2295 = vmatpush.bf16.msra.mxu0 %v1822
  %2296 = vmatpush.bf16.msra.mxu0 %v1815
  %2297 = vmatmul.bf16.gmra.mxu0 %v449
  %v2298 = vpop.f32.mrf.mxu0
  %v2299 = vadd.f32 %v2286, %v2298
  %v2300 = vpop.f32.mrf.mxu0
  %2301 = vdwg.mxu0
  %2302 = vmatpush.bf16.msra.mxu0 0
  %2303 = vmatpush.bf16.msra.mxu0 0
  %2304 = vmatpush.bf16.msra.mxu0 0
  %2305 = vmatpush.bf16.msra.mxu0 0
  %2306 = vmatpush.bf16.msra.mxu0 0
  %2307 = vmatpush.bf16.msra.mxu0 0
  %2308 = vmatpush.bf16.msra.mxu0 0
  %2309 = vmatpush.bf16.msra.mxu0 %v1871
  %2310 = vmatmul.bf16.gmra.mxu0 %v2222
  %v2311 = vpop.f32.mrf.mxu0
  %v2312 = vadd.f32 %v2299, %v2311
  %v2313 = vpop.f32.mrf.mxu0
  %2314 = vdwg.mxu0
  %2315 = vmatpush.bf16.msra.mxu0 %v1585
  %2316 = vmatpush.bf16.msra.mxu0 %v1578
  %2317 = vmatpush.bf16.msra.mxu0 %v1571
  %2318 = vmatpush.bf16.msra.mxu0 %v1564
  %2319 = vmatpush.bf16.msra.mxu0 %v1557
  %2320 = vmatpush.bf16.msra.mxu0 %v1550
  %2321 = vmatpush.bf16.msra.mxu0 %v1543
  %2322 = vmatpush.bf16.msra.mxu0 %v1536
  %2323 = vmatmul.bf16.gmra.mxu0 %v444
  %v2324 = vpop.f32.mrf.mxu0
  %v2325 = vadd.f32 %v429, %v2324
  %v2326 = vpop.f32.mrf.mxu0
  %2327 = vdwg.mxu0
  %2328 = vmatpush.bf16.msra.mxu0 %v1641
  %2329 = vmatpush.bf16.msra.mxu0 %v1634
  %2330 = vmatpush.bf16.msra.mxu0 %v1627
  %2331 = vmatpush.bf16.msra.mxu0 %v1620
  %2332 = vmatpush.bf16.msra.mxu0 %v1613
  %2333 = vmatpush.bf16.msra.mxu0 %v1606
  %2334 = vmatpush.bf16.msra.mxu0 %v1599
  %2335 = vmatpush.bf16.msra.mxu0 %v1592
  %2336 = vmatmul.bf16.gmra.mxu0 %v445
  %v2337 = vpop.f32.mrf.mxu0
  %v2338 = vadd.f32 %v2325, %v2337
  %v2339 = vpop.f32.mrf.mxu0
  %2340 = vdwg.mxu0
  %2341 = vmatpush.bf16.msra.mxu0 %v1697
  %2342 = vmatpush.bf16.msra.mxu0 %v1690
  %2343 = vmatpush.bf16.msra.mxu0 %v1683
  %2344 = vmatpush.bf16.msra.mxu0 %v1676
  %2345 = vmatpush.bf16.msra.mxu0 %v1669
  %2346 = vmatpush.bf16.msra.mxu0 %v1662
  %2347 = vmatpush.bf16.msra.mxu0 %v1655
  %2348 = vmatpush.bf16.msra.mxu0 %v1648
  %2349 = vmatmul.bf16.gmra.mxu0 %v446
  %v2350 = vpop.f32.mrf.mxu0
  %v2351 = vadd.f32 %v2338, %v2350
  %v2352 = vpop.f32.mrf.mxu0
  %2353 = vdwg.mxu0
  %2354 = vmatpush.bf16.msra.mxu0 %v1753
  %2355 = vmatpush.bf16.msra.mxu0 %v1746
  %2356 = vmatpush.bf16.msra.mxu0 %v1739
  %2357 = vmatpush.bf16.msra.mxu0 %v1732
  %2358 = vmatpush.bf16.msra.mxu0 %v1725
  %2359 = vmatpush.bf16.msra.mxu0 %v1718
  %2360 = vmatpush.bf16.msra.mxu0 %v1711
  %2361 = vmatpush.bf16.msra.mxu0 %v1704
  %2362 = vmatmul.bf16.gmra.mxu0 %v447
  %v2363 = vpop.f32.mrf.mxu0
  %v2364 = vadd.f32 %v2351, %v2363
  %v2365 = vpop.f32.mrf.mxu0
  %2366 = vdwg.mxu0
  %2367 = vmatpush.bf16.msra.mxu0 %v1809
  %2368 = vmatpush.bf16.msra.mxu0 %v1802
  %2369 = vmatpush.bf16.msra.mxu0 %v1795
  %2370 = vmatpush.bf16.msra.mxu0 %v1788
  %2371 = vmatpush.bf16.msra.mxu0 %v1781
  %2372 = vmatpush.bf16.msra.mxu0 %v1774
  %2373 = vmatpush.bf16.msra.mxu0 %v1767
  %2374 = vmatpush.bf16.msra.mxu0 %v1760
  %2375 = vmatmul.bf16.gmra.mxu0 %v448
  %v2376 = vpop.f32.mrf.mxu0
  %v2377 = vadd.f32 %v2364, %v2376
  %v2378 = vpop.f32.mrf.mxu0
  %2379 = vdwg.mxu0
  %2380 = vmatpush.bf16.msra.mxu0 %v1865
  %2381 = vmatpush.bf16.msra.mxu0 %v1858
  %2382 = vmatpush.bf16.msra.mxu0 %v1851
  %2383 = vmatpush.bf16.msra.mxu0 %v1844
  %2384 = vmatpush.bf16.msra.mxu0 %v1837
  %2385 = vmatpush.bf16.msra.mxu0 %v1830
  %2386 = vmatpush.bf16.msra.mxu0 %v1823
  %2387 = vmatpush.bf16.msra.mxu0 %v1816
  %2388 = vmatmul.bf16.gmra.mxu0 %v449
  %v2389 = vpop.f32.mrf.mxu0
  %v2390 = vadd.f32 %v2377, %v2389
  %v2391 = vpop.f32.mrf.mxu0
  %2392 = vdwg.mxu0
  %2393 = vmatpush.bf16.msra.mxu0 0
  %2394 = vmatpush.bf16.msra.mxu0 0
  %2395 = vmatpush.bf16.msra.mxu0 0
  %2396 = vmatpush.bf16.msra.mxu0 0
  %2397 = vmatpush.bf16.msra.mxu0 0
  %2398 = vmatpush.bf16.msra.mxu0 0
  %2399 = vmatpush.bf16.msra.mxu0 0
  %2400 = vmatpush.bf16.msra.mxu0 %v1872
  %2401 = vmatmul.bf16.gmra.mxu0 %v2222
  %v2402 = vpop.f32.mrf.mxu0
  %v2403 = vadd.f32 %v2390, %v2402
  %v2404 = vpop.f32.mrf.mxu0
  %2405 = vdwg.mxu0
  %2406 = vmatpush.bf16.msra.mxu0 %v1586
  %2407 = vmatpush.bf16.msra.mxu0 %v1579
  %2408 = vmatpush.bf16.msra.mxu0 %v1572
  %2409 = vmatpush.bf16.msra.mxu0 %v1565
  %2410 = vmatpush.bf16.msra.mxu0 %v1558
  %2411 = vmatpush.bf16.msra.mxu0 %v1551
  %2412 = vmatpush.bf16.msra.mxu0 %v1544
  %2413 = vmatpush.bf16.msra.mxu0 %v1537
  %2414 = vmatmul.bf16.gmra.mxu0 %v444
  %v2415 = vpop.f32.mrf.mxu0
  %v2416 = vadd.f32 %v430, %v2415
  %v2417 = vpop.f32.mrf.mxu0
  %2418 = vdwg.mxu0
  %2419 = vmatpush.bf16.msra.mxu0 %v1642
  %2420 = vmatpush.bf16.msra.mxu0 %v1635
  %2421 = vmatpush.bf16.msra.mxu0 %v1628
  %2422 = vmatpush.bf16.msra.mxu0 %v1621
  %2423 = vmatpush.bf16.msra.mxu0 %v1614
  %2424 = vmatpush.bf16.msra.mxu0 %v1607
  %2425 = vmatpush.bf16.msra.mxu0 %v1600
  %2426 = vmatpush.bf16.msra.mxu0 %v1593
  %2427 = vmatmul.bf16.gmra.mxu0 %v445
  %v2428 = vpop.f32.mrf.mxu0
  %v2429 = vadd.f32 %v2416, %v2428
  %v2430 = vpop.f32.mrf.mxu0
  %2431 = vdwg.mxu0
  %2432 = vmatpush.bf16.msra.mxu0 %v1698
  %2433 = vmatpush.bf16.msra.mxu0 %v1691
  %2434 = vmatpush.bf16.msra.mxu0 %v1684
  %2435 = vmatpush.bf16.msra.mxu0 %v1677
  %2436 = vmatpush.bf16.msra.mxu0 %v1670
  %2437 = vmatpush.bf16.msra.mxu0 %v1663
  %2438 = vmatpush.bf16.msra.mxu0 %v1656
  %2439 = vmatpush.bf16.msra.mxu0 %v1649
  %2440 = vmatmul.bf16.gmra.mxu0 %v446
  %v2441 = vpop.f32.mrf.mxu0
  %v2442 = vadd.f32 %v2429, %v2441
  %v2443 = vpop.f32.mrf.mxu0
  %2444 = vdwg.mxu0
  %2445 = vmatpush.bf16.msra.mxu0 %v1754
  %2446 = vmatpush.bf16.msra.mxu0 %v1747
  %2447 = vmatpush.bf16.msra.mxu0 %v1740
  %2448 = vmatpush.bf16.msra.mxu0 %v1733
  %2449 = vmatpush.bf16.msra.mxu0 %v1726
  %2450 = vmatpush.bf16.msra.mxu0 %v1719
  %2451 = vmatpush.bf16.msra.mxu0 %v1712
  %2452 = vmatpush.bf16.msra.mxu0 %v1705
  %2453 = vmatmul.bf16.gmra.mxu0 %v447
  %v2454 = vpop.f32.mrf.mxu0
  %v2455 = vadd.f32 %v2442, %v2454
  %v2456 = vpop.f32.mrf.mxu0
  %2457 = vdwg.mxu0
  %2458 = vmatpush.bf16.msra.mxu0 %v1810
  %2459 = vmatpush.bf16.msra.mxu0 %v1803
  %2460 = vmatpush.bf16.msra.mxu0 %v1796
  %2461 = vmatpush.bf16.msra.mxu0 %v1789
  %2462 = vmatpush.bf16.msra.mxu0 %v1782
  %2463 = vmatpush.bf16.msra.mxu0 %v1775
  %2464 = vmatpush.bf16.msra.mxu0 %v1768
  %2465 = vmatpush.bf16.msra.mxu0 %v1761
  %2466 = vmatmul.bf16.gmra.mxu0 %v448
  %v2467 = vpop.f32.mrf.mxu0
  %v2468 = vadd.f32 %v2455, %v2467
  %v2469 = vpop.f32.mrf.mxu0
  %2470 = vdwg.mxu0
  %2471 = vmatpush.bf16.msra.mxu0 %v1866
  %2472 = vmatpush.bf16.msra.mxu0 %v1859
  %2473 = vmatpush.bf16.msra.mxu0 %v1852
  %2474 = vmatpush.bf16.msra.mxu0 %v1845
  %2475 = vmatpush.bf16.msra.mxu0 %v1838
  %2476 = vmatpush.bf16.msra.mxu0 %v1831
  %2477 = vmatpush.bf16.msra.mxu0 %v1824
  %2478 = vmatpush.bf16.msra.mxu0 %v1817
  %2479 = vmatmul.bf16.gmra.mxu0 %v449
  %v2480 = vpop.f32.mrf.mxu0
  %v2481 = vadd.f32 %v2468, %v2480
  %v2482 = vpop.f32.mrf.mxu0
  %2483 = vdwg.mxu0
  %2484 = vmatpush.bf16.msra.mxu0 0
  %2485 = vmatpush.bf16.msra.mxu0 0
  %2486 = vmatpush.bf16.msra.mxu0 0
  %2487 = vmatpush.bf16.msra.mxu0 0
  %2488 = vmatpush.bf16.msra.mxu0 0
  %2489 = vmatpush.bf16.msra.mxu0 0
  %2490 = vmatpush.bf16.msra.mxu0 0
  %2491 = vmatpush.bf16.msra.mxu0 %v1873
  %2492 = vmatmul.bf16.gmra.mxu0 %v2222
  %v2493 = vpop.f32.mrf.mxu0
  %v2494 = vadd.f32 %v2481, %v2493
  %v2495 = vpop.f32.mrf.mxu0
  %2496 = vdwg.mxu0
  %2497 = vmatpush.bf16.msra.mxu0 %v1587
  %2498 = vmatpush.bf16.msra.mxu0 %v1580
  %2499 = vmatpush.bf16.msra.mxu0 %v1573
  %2500 = vmatpush.bf16.msra.mxu0 %v1566
  %2501 = vmatpush.bf16.msra.mxu0 %v1559
  %2502 = vmatpush.bf16.msra.mxu0 %v1552
  %2503 = vmatpush.bf16.msra.mxu0 %v1545
  %2504 = vmatpush.bf16.msra.mxu0 %v1538
  %2505 = vmatmul.bf16.gmra.mxu0 %v444
  %v2506 = vpop.f32.mrf.mxu0
  %v2507 = vadd.f32 %v431, %v2506
  %v2508 = vpop.f32.mrf.mxu0
  %2509 = vdwg.mxu0
  %2510 = vmatpush.bf16.msra.mxu0 %v1643
  %2511 = vmatpush.bf16.msra.mxu0 %v1636
  %2512 = vmatpush.bf16.msra.mxu0 %v1629
  %2513 = vmatpush.bf16.msra.mxu0 %v1622
  %2514 = vmatpush.bf16.msra.mxu0 %v1615
  %2515 = vmatpush.bf16.msra.mxu0 %v1608
  %2516 = vmatpush.bf16.msra.mxu0 %v1601
  %2517 = vmatpush.bf16.msra.mxu0 %v1594
  %2518 = vmatmul.bf16.gmra.mxu0 %v445
  %v2519 = vpop.f32.mrf.mxu0
  %v2520 = vadd.f32 %v2507, %v2519
  %v2521 = vpop.f32.mrf.mxu0
  %2522 = vdwg.mxu0
  %2523 = vmatpush.bf16.msra.mxu0 %v1699
  %2524 = vmatpush.bf16.msra.mxu0 %v1692
  %2525 = vmatpush.bf16.msra.mxu0 %v1685
  %2526 = vmatpush.bf16.msra.mxu0 %v1678
  %2527 = vmatpush.bf16.msra.mxu0 %v1671
  %2528 = vmatpush.bf16.msra.mxu0 %v1664
  %2529 = vmatpush.bf16.msra.mxu0 %v1657
  %2530 = vmatpush.bf16.msra.mxu0 %v1650
  %2531 = vmatmul.bf16.gmra.mxu0 %v446
  %v2532 = vpop.f32.mrf.mxu0
  %v2533 = vadd.f32 %v2520, %v2532
  %v2534 = vpop.f32.mrf.mxu0
  %2535 = vdwg.mxu0
  %2536 = vmatpush.bf16.msra.mxu0 %v1755
  %2537 = vmatpush.bf16.msra.mxu0 %v1748
  %2538 = vmatpush.bf16.msra.mxu0 %v1741
  %2539 = vmatpush.bf16.msra.mxu0 %v1734
  %2540 = vmatpush.bf16.msra.mxu0 %v1727
  %2541 = vmatpush.bf16.msra.mxu0 %v1720
  %2542 = vmatpush.bf16.msra.mxu0 %v1713
  %2543 = vmatpush.bf16.msra.mxu0 %v1706
  %2544 = vmatmul.bf16.gmra.mxu0 %v447
  %v2545 = vpop.f32.mrf.mxu0
  %v2546 = vadd.f32 %v2533, %v2545
  %v2547 = vpop.f32.mrf.mxu0
  %2548 = vdwg.mxu0
  %2549 = vmatpush.bf16.msra.mxu0 %v1811
  %2550 = vmatpush.bf16.msra.mxu0 %v1804
  %2551 = vmatpush.bf16.msra.mxu0 %v1797
  %2552 = vmatpush.bf16.msra.mxu0 %v1790
  %2553 = vmatpush.bf16.msra.mxu0 %v1783
  %2554 = vmatpush.bf16.msra.mxu0 %v1776
  %2555 = vmatpush.bf16.msra.mxu0 %v1769
  %2556 = vmatpush.bf16.msra.mxu0 %v1762
  %2557 = vmatmul.bf16.gmra.mxu0 %v448
  %v2558 = vpop.f32.mrf.mxu0
  %v2559 = vadd.f32 %v2546, %v2558
  %v2560 = vpop.f32.mrf.mxu0
  %2561 = vdwg.mxu0
  %2562 = vmatpush.bf16.msra.mxu0 %v1867
  %2563 = vmatpush.bf16.msra.mxu0 %v1860
  %2564 = vmatpush.bf16.msra.mxu0 %v1853
  %2565 = vmatpush.bf16.msra.mxu0 %v1846
  %2566 = vmatpush.bf16.msra.mxu0 %v1839
  %2567 = vmatpush.bf16.msra.mxu0 %v1832
  %2568 = vmatpush.bf16.msra.mxu0 %v1825
  %2569 = vmatpush.bf16.msra.mxu0 %v1818
  %2570 = vmatmul.bf16.gmra.mxu0 %v449
  %v2571 = vpop.f32.mrf.mxu0
  %v2572 = vadd.f32 %v2559, %v2571
  %v2573 = vpop.f32.mrf.mxu0
  %2574 = vdwg.mxu0
  %2575 = vmatpush.bf16.msra.mxu0 0
  %2576 = vmatpush.bf16.msra.mxu0 0
  %2577 = vmatpush.bf16.msra.mxu0 0
  %2578 = vmatpush.bf16.msra.mxu0 0
  %2579 = vmatpush.bf16.msra.mxu0 0
  %2580 = vmatpush.bf16.msra.mxu0 0
  %2581 = vmatpush.bf16.msra.mxu0 0
  %2582 = vmatpush.bf16.msra.mxu0 %v1874
  %2583 = vmatmul.bf16.gmra.mxu0 %v2222
  %v2584 = vpop.f32.mrf.mxu0
  %v2585 = vadd.f32 %v2572, %v2584
  %v2586 = vpop.f32.mrf.mxu0
  %2587 = vdwg.mxu0
  %2588 = vmatpush.bf16.msra.mxu0 %v1588
  %2589 = vmatpush.bf16.msra.mxu0 %v1581
  %2590 = vmatpush.bf16.msra.mxu0 %v1574
  %2591 = vmatpush.bf16.msra.mxu0 %v1567
  %2592 = vmatpush.bf16.msra.mxu0 %v1560
  %2593 = vmatpush.bf16.msra.mxu0 %v1553
  %2594 = vmatpush.bf16.msra.mxu0 %v1546
  %2595 = vmatpush.bf16.msra.mxu0 %v1539
  %2596 = vmatmul.bf16.gmra.mxu0 %v444
  %v2597 = vpop.f32.mrf.mxu0
  %v2598 = vadd.f32 %v432, %v2597
  %v2599 = vpop.f32.mrf.mxu0
  %2600 = vdwg.mxu0
  %2601 = vmatpush.bf16.msra.mxu0 %v1644
  %2602 = vmatpush.bf16.msra.mxu0 %v1637
  %2603 = vmatpush.bf16.msra.mxu0 %v1630
  %2604 = vmatpush.bf16.msra.mxu0 %v1623
  %2605 = vmatpush.bf16.msra.mxu0 %v1616
  %2606 = vmatpush.bf16.msra.mxu0 %v1609
  %2607 = vmatpush.bf16.msra.mxu0 %v1602
  %2608 = vmatpush.bf16.msra.mxu0 %v1595
  %2609 = vmatmul.bf16.gmra.mxu0 %v445
  %v2610 = vpop.f32.mrf.mxu0
  %v2611 = vadd.f32 %v2598, %v2610
  %v2612 = vpop.f32.mrf.mxu0
  %2613 = vdwg.mxu0
  %2614 = vmatpush.bf16.msra.mxu0 %v1700
  %2615 = vmatpush.bf16.msra.mxu0 %v1693
  %2616 = vmatpush.bf16.msra.mxu0 %v1686
  %2617 = vmatpush.bf16.msra.mxu0 %v1679
  %2618 = vmatpush.bf16.msra.mxu0 %v1672
  %2619 = vmatpush.bf16.msra.mxu0 %v1665
  %2620 = vmatpush.bf16.msra.mxu0 %v1658
  %2621 = vmatpush.bf16.msra.mxu0 %v1651
  %2622 = vmatmul.bf16.gmra.mxu0 %v446
  %v2623 = vpop.f32.mrf.mxu0
  %v2624 = vadd.f32 %v2611, %v2623
  %v2625 = vpop.f32.mrf.mxu0
  %2626 = vdwg.mxu0
  %2627 = vmatpush.bf16.msra.mxu0 %v1756
  %2628 = vmatpush.bf16.msra.mxu0 %v1749
  %2629 = vmatpush.bf16.msra.mxu0 %v1742
  %2630 = vmatpush.bf16.msra.mxu0 %v1735
  %2631 = vmatpush.bf16.msra.mxu0 %v1728
  %2632 = vmatpush.bf16.msra.mxu0 %v1721
  %2633 = vmatpush.bf16.msra.mxu0 %v1714
  %2634 = vmatpush.bf16.msra.mxu0 %v1707
  %2635 = vmatmul.bf16.gmra.mxu0 %v447
  %v2636 = vpop.f32.mrf.mxu0
  %v2637 = vadd.f32 %v2624, %v2636
  %v2638 = vpop.f32.mrf.mxu0
  %2639 = vdwg.mxu0
  %2640 = vmatpush.bf16.msra.mxu0 %v1812
  %2641 = vmatpush.bf16.msra.mxu0 %v1805
  %2642 = vmatpush.bf16.msra.mxu0 %v1798
  %2643 = vmatpush.bf16.msra.mxu0 %v1791
  %2644 = vmatpush.bf16.msra.mxu0 %v1784
  %2645 = vmatpush.bf16.msra.mxu0 %v1777
  %2646 = vmatpush.bf16.msra.mxu0 %v1770
  %2647 = vmatpush.bf16.msra.mxu0 %v1763
  %2648 = vmatmul.bf16.gmra.mxu0 %v448
  %v2649 = vpop.f32.mrf.mxu0
  %v2650 = vadd.f32 %v2637, %v2649
  %v2651 = vpop.f32.mrf.mxu0
  %2652 = vdwg.mxu0
  %2653 = vmatpush.bf16.msra.mxu0 %v1868
  %2654 = vmatpush.bf16.msra.mxu0 %v1861
  %2655 = vmatpush.bf16.msra.mxu0 %v1854
  %2656 = vmatpush.bf16.msra.mxu0 %v1847
  %2657 = vmatpush.bf16.msra.mxu0 %v1840
  %2658 = vmatpush.bf16.msra.mxu0 %v1833
  %2659 = vmatpush.bf16.msra.mxu0 %v1826
  %2660 = vmatpush.bf16.msra.mxu0 %v1819
  %2661 = vmatmul.bf16.gmra.mxu0 %v449
  %v2662 = vpop.f32.mrf.mxu0
  %v2663 = vadd.f32 %v2650, %v2662
  %v2664 = vpop.f32.mrf.mxu0
  %2665 = vdwg.mxu0
  %2666 = vmatpush.bf16.msra.mxu0 0
  %2667 = vmatpush.bf16.msra.mxu0 0
  %2668 = vmatpush.bf16.msra.mxu0 0
  %2669 = vmatpush.bf16.msra.mxu0 0
  %2670 = vmatpush.bf16.msra.mxu0 0
  %2671 = vmatpush.bf16.msra.mxu0 0
  %2672 = vmatpush.bf16.msra.mxu0 0
  %2673 = vmatpush.bf16.msra.mxu0 %v1875
  %2674 = vmatmul.bf16.gmra.mxu0 %v2222
  %v2675 = vpop.f32.mrf.mxu0
  %v2676 = vadd.f32 %v2663, %v2675
  %v2677 = vpop.f32.mrf.mxu0
  %2678 = vdwg.mxu0
  %2679 = vmatpush.bf16.msra.mxu0 %v1589
  %2680 = vmatpush.bf16.msra.mxu0 %v1582
  %2681 = vmatpush.bf16.msra.mxu0 %v1575
  %2682 = vmatpush.bf16.msra.mxu0 %v1568
  %2683 = vmatpush.bf16.msra.mxu0 %v1561
  %2684 = vmatpush.bf16.msra.mxu0 %v1554
  %2685 = vmatpush.bf16.msra.mxu0 %v1547
  %2686 = vmatpush.bf16.msra.mxu0 %v1540
  %2687 = vmatmul.bf16.gmra.mxu0 %v444
  %v2688 = vpop.f32.mrf.mxu0
  %v2689 = vadd.f32 %v433, %v2688
  %v2690 = vpop.f32.mrf.mxu0
  %2691 = vdwg.mxu0
  %2692 = vmatpush.bf16.msra.mxu0 %v1645
  %2693 = vmatpush.bf16.msra.mxu0 %v1638
  %2694 = vmatpush.bf16.msra.mxu0 %v1631
  %2695 = vmatpush.bf16.msra.mxu0 %v1624
  %2696 = vmatpush.bf16.msra.mxu0 %v1617
  %2697 = vmatpush.bf16.msra.mxu0 %v1610
  %2698 = vmatpush.bf16.msra.mxu0 %v1603
  %2699 = vmatpush.bf16.msra.mxu0 %v1596
  %2700 = vmatmul.bf16.gmra.mxu0 %v445
  %v2701 = vpop.f32.mrf.mxu0
  %v2702 = vadd.f32 %v2689, %v2701
  %v2703 = vpop.f32.mrf.mxu0
  %2704 = vdwg.mxu0
  %2705 = vmatpush.bf16.msra.mxu0 %v1701
  %2706 = vmatpush.bf16.msra.mxu0 %v1694
  %2707 = vmatpush.bf16.msra.mxu0 %v1687
  %2708 = vmatpush.bf16.msra.mxu0 %v1680
  %2709 = vmatpush.bf16.msra.mxu0 %v1673
  %2710 = vmatpush.bf16.msra.mxu0 %v1666
  %2711 = vmatpush.bf16.msra.mxu0 %v1659
  %2712 = vmatpush.bf16.msra.mxu0 %v1652
  %2713 = vmatmul.bf16.gmra.mxu0 %v446
  %v2714 = vpop.f32.mrf.mxu0
  %v2715 = vadd.f32 %v2702, %v2714
  %v2716 = vpop.f32.mrf.mxu0
  %2717 = vdwg.mxu0
  %2718 = vmatpush.bf16.msra.mxu0 %v1757
  %2719 = vmatpush.bf16.msra.mxu0 %v1750
  %2720 = vmatpush.bf16.msra.mxu0 %v1743
  %2721 = vmatpush.bf16.msra.mxu0 %v1736
  %2722 = vmatpush.bf16.msra.mxu0 %v1729
  %2723 = vmatpush.bf16.msra.mxu0 %v1722
  %2724 = vmatpush.bf16.msra.mxu0 %v1715
  %2725 = vmatpush.bf16.msra.mxu0 %v1708
  %2726 = vmatmul.bf16.gmra.mxu0 %v447
  %v2727 = vpop.f32.mrf.mxu0
  %v2728 = vadd.f32 %v2715, %v2727
  %v2729 = vpop.f32.mrf.mxu0
  %2730 = vdwg.mxu0
  %2731 = vmatpush.bf16.msra.mxu0 %v1813
  %2732 = vmatpush.bf16.msra.mxu0 %v1806
  %2733 = vmatpush.bf16.msra.mxu0 %v1799
  %2734 = vmatpush.bf16.msra.mxu0 %v1792
  %2735 = vmatpush.bf16.msra.mxu0 %v1785
  %2736 = vmatpush.bf16.msra.mxu0 %v1778
  %2737 = vmatpush.bf16.msra.mxu0 %v1771
  %2738 = vmatpush.bf16.msra.mxu0 %v1764
  %2739 = vmatmul.bf16.gmra.mxu0 %v448
  %v2740 = vpop.f32.mrf.mxu0
  %v2741 = vadd.f32 %v2728, %v2740
  %v2742 = vpop.f32.mrf.mxu0
  %2743 = vdwg.mxu0
  %2744 = vmatpush.bf16.msra.mxu0 %v1869
  %2745 = vmatpush.bf16.msra.mxu0 %v1862
  %2746 = vmatpush.bf16.msra.mxu0 %v1855
  %2747 = vmatpush.bf16.msra.mxu0 %v1848
  %2748 = vmatpush.bf16.msra.mxu0 %v1841
  %2749 = vmatpush.bf16.msra.mxu0 %v1834
  %2750 = vmatpush.bf16.msra.mxu0 %v1827
  %2751 = vmatpush.bf16.msra.mxu0 %v1820
  %2752 = vmatmul.bf16.gmra.mxu0 %v449
  %v2753 = vpop.f32.mrf.mxu0
  %v2754 = vadd.f32 %v2741, %v2753
  %v2755 = vpop.f32.mrf.mxu0
  %2756 = vdwg.mxu0
  %2757 = vmatpush.bf16.msra.mxu0 0
  %2758 = vmatpush.bf16.msra.mxu0 0
  %2759 = vmatpush.bf16.msra.mxu0 0
  %2760 = vmatpush.bf16.msra.mxu0 0
  %2761 = vmatpush.bf16.msra.mxu0 0
  %2762 = vmatpush.bf16.msra.mxu0 0
  %2763 = vmatpush.bf16.msra.mxu0 0
  %2764 = vmatpush.bf16.msra.mxu0 %v1876
  %2765 = vmatmul.bf16.gmra.mxu0 %v2222
  %v2766 = vpop.f32.mrf.mxu0
  %v2767 = vadd.f32 %v2754, %v2766
  %v2768 = vpop.f32.mrf.mxu0
  %2769 = vdwg.mxu0
  %2770 = vmatpush.bf16.msra.mxu0 %v1590
  %2771 = vmatpush.bf16.msra.mxu0 %v1583
  %2772 = vmatpush.bf16.msra.mxu0 %v1576
  %2773 = vmatpush.bf16.msra.mxu0 %v1569
  %2774 = vmatpush.bf16.msra.mxu0 %v1562
  %2775 = vmatpush.bf16.msra.mxu0 %v1555
  %2776 = vmatpush.bf16.msra.mxu0 %v1548
  %2777 = vmatpush.bf16.msra.mxu0 %v1541
  %2778 = vmatmul.bf16.gmra.mxu0 %v444
  %v2779 = vpop.f32.mrf.mxu0
  %v2780 = vadd.f32 %v434, %v2779
  %v2781 = vpop.f32.mrf.mxu0
  %2782 = vdwg.mxu0
  %2783 = vmatpush.bf16.msra.mxu0 %v1646
  %2784 = vmatpush.bf16.msra.mxu0 %v1639
  %2785 = vmatpush.bf16.msra.mxu0 %v1632
  %2786 = vmatpush.bf16.msra.mxu0 %v1625
  %2787 = vmatpush.bf16.msra.mxu0 %v1618
  %2788 = vmatpush.bf16.msra.mxu0 %v1611
  %2789 = vmatpush.bf16.msra.mxu0 %v1604
  %2790 = vmatpush.bf16.msra.mxu0 %v1597
  %2791 = vmatmul.bf16.gmra.mxu0 %v445
  %v2792 = vpop.f32.mrf.mxu0
  %v2793 = vadd.f32 %v2780, %v2792
  %v2794 = vpop.f32.mrf.mxu0
  %2795 = vdwg.mxu0
  %2796 = vmatpush.bf16.msra.mxu0 %v1702
  %2797 = vmatpush.bf16.msra.mxu0 %v1695
  %2798 = vmatpush.bf16.msra.mxu0 %v1688
  %2799 = vmatpush.bf16.msra.mxu0 %v1681
  %2800 = vmatpush.bf16.msra.mxu0 %v1674
  %2801 = vmatpush.bf16.msra.mxu0 %v1667
  %2802 = vmatpush.bf16.msra.mxu0 %v1660
  %2803 = vmatpush.bf16.msra.mxu0 %v1653
  %2804 = vmatmul.bf16.gmra.mxu0 %v446
  %v2805 = vpop.f32.mrf.mxu0
  %v2806 = vadd.f32 %v2793, %v2805
  %v2807 = vpop.f32.mrf.mxu0
  %2808 = vdwg.mxu0
  %2809 = vmatpush.bf16.msra.mxu0 %v1758
  %2810 = vmatpush.bf16.msra.mxu0 %v1751
  %2811 = vmatpush.bf16.msra.mxu0 %v1744
  %2812 = vmatpush.bf16.msra.mxu0 %v1737
  %2813 = vmatpush.bf16.msra.mxu0 %v1730
  %2814 = vmatpush.bf16.msra.mxu0 %v1723
  %2815 = vmatpush.bf16.msra.mxu0 %v1716
  %2816 = vmatpush.bf16.msra.mxu0 %v1709
  %2817 = vmatmul.bf16.gmra.mxu0 %v447
  %v2818 = vpop.f32.mrf.mxu0
  %v2819 = vadd.f32 %v2806, %v2818
  %v2820 = vpop.f32.mrf.mxu0
  %2821 = vdwg.mxu0
  %2822 = vmatpush.bf16.msra.mxu0 %v1814
  %2823 = vmatpush.bf16.msra.mxu0 %v1807
  %2824 = vmatpush.bf16.msra.mxu0 %v1800
  %2825 = vmatpush.bf16.msra.mxu0 %v1793
  %2826 = vmatpush.bf16.msra.mxu0 %v1786
  %2827 = vmatpush.bf16.msra.mxu0 %v1779
  %2828 = vmatpush.bf16.msra.mxu0 %v1772
  %2829 = vmatpush.bf16.msra.mxu0 %v1765
  %2830 = vmatmul.bf16.gmra.mxu0 %v448
  %v2831 = vpop.f32.mrf.mxu0
  %v2832 = vadd.f32 %v2819, %v2831
  %v2833 = vpop.f32.mrf.mxu0
  %2834 = vdwg.mxu0
  %2835 = vmatpush.bf16.msra.mxu0 %v1870
  %2836 = vmatpush.bf16.msra.mxu0 %v1863
  %2837 = vmatpush.bf16.msra.mxu0 %v1856
  %2838 = vmatpush.bf16.msra.mxu0 %v1849
  %2839 = vmatpush.bf16.msra.mxu0 %v1842
  %2840 = vmatpush.bf16.msra.mxu0 %v1835
  %2841 = vmatpush.bf16.msra.mxu0 %v1828
  %2842 = vmatpush.bf16.msra.mxu0 %v1821
  %2843 = vmatmul.bf16.gmra.mxu0 %v449
  %v2844 = vpop.f32.mrf.mxu0
  %v2845 = vadd.f32 %v2832, %v2844
  %v2846 = vpop.f32.mrf.mxu0
  %2847 = vdwg.mxu0
  %2848 = vmatpush.bf16.msra.mxu0 0
  %2849 = vmatpush.bf16.msra.mxu0 0
  %2850 = vmatpush.bf16.msra.mxu0 0
  %2851 = vmatpush.bf16.msra.mxu0 0
  %2852 = vmatpush.bf16.msra.mxu0 0
  %2853 = vmatpush.bf16.msra.mxu0 0
  %2854 = vmatpush.bf16.msra.mxu0 0
  %2855 = vmatpush.bf16.msra.mxu0 %v1877
  %2856 = vmatmul.bf16.gmra.mxu0 %v2222
  %v2857 = vpop.f32.mrf.mxu0
  %v2858 = vadd.f32 %v2845, %v2857
  %v2859 = vpop.f32.mrf.mxu0
  %2860 = vdwg.mxu0
  %v2861 = vmax.f32 %v2312, 0.0
  %v2862 = vmax.f32 %v2403, 0.0
  %v2863 = vmax.f32 %v2494, 0.0
  %v2864 = vmax.f32 %v2585, 0.0
  %v2865 = vmax.f32 %v2676, 0.0
  %v2866 = vmax.f32 %v2767, 0.0
  %v2867 = vmax.f32 %v2858, 0.0
  %v2868 = vpack.c.bf16 %v2861, %v2861
  %v2869 = vpack.c.bf16 %v2862, %v2862
  %v2870 = vpack.c.bf16 %v2863, %v2863
  %v2871 = vpack.c.bf16 %v2864, %v2864
  %v2872 = vpack.c.bf16 %v2865, %v2865
  %v2873 = vpack.c.bf16 %v2866, %v2866
  %v2874 = vpack.c.bf16 %v2867, %v2867
  %v2875 = vld [vmem:[%s3] sm:$0xff]
  %v2876 = vld [vmem:[%s3 + $0x8] sm:$0xff]
  %v2877 = vld [vmem:[%s3 + $0x10] sm:$0xff]
  %v2878 = vld [vmem:[%s3 + $0x18] sm:$0xff]
  %v2879 = vld [vmem:[%s3 + $0x20] sm:$0xff]
  %v2880 = vld [vmem:[%s3 + $0x28] sm:$0xff]
  %v2881 = vld [vmem:[%s3 + $0x30] sm:$0xff]
  %v2882 = vld [vmem:[%s3 + $0x38] sm:$0xff]
  %v2883 = vld [vmem:[%s3 + $0x40] sm:$0xff]
  %v2884 = vld [vmem:[%s3 + $0x48] sm:$0xff]
  %v2885 = vld [vmem:[%s3 + $0x50] sm:$0xff]
  %v2886 = vld [vmem:[%s3 + $0x58] sm:$0xff]
  %v2887 = vld [vmem:[%s3 + $0x60] sm:$0xff]
  %v2888 = vld [vmem:[%s3 + $0x68] sm:$0xff]
  %v2889 = vld [vmem:[%s3 + $0x70] sm:$0xff]
  %v2890 = vld [vmem:[%s3 + $0x78] sm:$0xff]
  %v2891 = vld [vmem:[%s3 + $0x80] sm:$0xff]
  %v2892 = vld [vmem:[%s3 + $0x88] sm:$0xff]
  %v2893 = vld [vmem:[%s3 + $0x90] sm:$0xff]
  %v2894 = vld [vmem:[%s3 + $0x98] sm:$0xff]
  %v2895 = vld [vmem:[%s3 + $0xa0] sm:$0xff]
  %v2896 = vld [vmem:[%s3 + $0xa8] sm:$0xff]
  %v2897 = vld [vmem:[%s3 + $0xb0] sm:$0xff]
  %v2898 = vld [vmem:[%s3 + $0xb8] sm:$0xff]
  %v2899 = vld [vmem:[%s3 + $0xc0] sm:$0xff]
  %v2900 = vld [vmem:[%s3 + $0xc8] sm:$0xff]
  %v2901 = vld [vmem:[%s3 + $0xd0] sm:$0xff]
  %v2902 = vld [vmem:[%s3 + $0xd8] sm:$0xff]
  %v2903 = vld [vmem:[%s3 + $0xe0] sm:$0xff]
  %v2904 = vld [vmem:[%s3 + $0xe8] sm:$0xff]
  %v2905 = vld [vmem:[%s3 + $0xf0] sm:$0xff]
  %v2906 = vld [vmem:[%s3 + $0xf8] sm:$0xff]
  %v2907 = vld [vmem:[%s3 + $0x100] sm:$0xff]
  %v2908 = vld [vmem:[%s3 + $0x108] sm:$0xff]
  %v2909 = vld [vmem:[%s3 + $0x110] sm:$0xff]
  %v2910 = vld [vmem:[%s3 + $0x118] sm:$0xff]
  %v2911 = vld [vmem:[%s3 + $0x120] sm:$0xff]
  %v2912 = vld [vmem:[%s3 + $0x128] sm:$0xff]
  %v2913 = vld [vmem:[%s3 + $0x130] sm:$0xff]
  %v2914 = vld [vmem:[%s3 + $0x138] sm:$0xff]
  %v2915 = vld [vmem:[%s3 + $0x140] sm:$0xff]
  %v2916 = vld [vmem:[%s3 + $0x148] sm:$0xff]
  %v2917 = vld [vmem:[%s3 + $0x150] sm:$0xff]
  %v2918 = vld [vmem:[%s3 + $0x158] sm:$0xff]
  %v2919 = vld [vmem:[%s3 + $0x160] sm:$0xff]
  %v2920 = vld [vmem:[%s3 + $0x168] sm:$0xff]
  %v2921 = vld [vmem:[%s3 + $0x170] sm:$0xff]
  %v2922 = vld [vmem:[%s3 + $0x178] sm:$0xff]
  %v2923 = vld [vmem:[%s3 + $0x180] sm:$0xff]
  %v2924 = vld [vmem:[%s3 + $0x188] sm:$0xff]
  %v2925 = vld [vmem:[%s3 + $0x190] sm:$0xff]
  %v2926 = vld [vmem:[%s3 + $0x198] sm:$0xff]
  %v2927 = vld [vmem:[%s3 + $0x1a0] sm:$0xff]
  %v2928 = vld [vmem:[%s3 + $0x1a8] sm:$0xff]
  %v2929 = vld [vmem:[%s3 + $0x1b0] sm:$0xff]
  %v2930 = vld [vmem:[%s3 + $0x1b8] sm:$0xff]
  %v2931 = vld [vmem:[%s3 + $0x1c0] sm:$0xff]
  %v2932 = vld [vmem:[%s3 + $0x1c8] sm:$0xff]
  %v2933 = vld [vmem:[%s3 + $0x1d0] sm:$0xff]
  %v2934 = vld [vmem:[%s3 + $0x1d8] sm:$0xff]
  %v2935 = vld [vmem:[%s3 + $0x1e0] sm:$0xff]
  %v2936 = vld [vmem:[%s3 + $0x1e8] sm:$0xff]
  %v2937 = vld [vmem:[%s3 + $0x1f0] sm:$0xff]
  %v2938 = vld [vmem:[%s3 + $0x1f8] sm:$0xff]
  %v2939 = vld [vmem:[%s3 + $0x200] sm:$0xff]
  %v2940 = vld [vmem:[%s3 + $0x208] sm:$0xff]
  %v2941 = vld [vmem:[%s3 + $0x210] sm:$0xff]
  %v2942 = vld [vmem:[%s3 + $0x218] sm:$0xff]
  %v2943 = vld [vmem:[%s3 + $0x220] sm:$0xff]
  %v2944 = vld [vmem:[%s3 + $0x228] sm:$0xff]
  %v2945 = vld [vmem:[%s3 + $0x230] sm:$0xff]
  %v2946 = vld [vmem:[%s3 + $0x238] sm:$0xff]
  %v2947 = vld [vmem:[%s3 + $0x240] sm:$0xff]
  %v2948 = vld [vmem:[%s3 + $0x248] sm:$0xff]
  %v2949 = vld [vmem:[%s3 + $0x250] sm:$0xff]
  %v2950 = vld [vmem:[%s3 + $0x258] sm:$0xff]
  %v2951 = vld [vmem:[%s3 + $0x260] sm:$0xff]
  %v2952 = vld [vmem:[%s3 + $0x268] sm:$0xff]
  %v2953 = vld [vmem:[%s3 + $0x270] sm:$0xff]
  %v2954 = vld [vmem:[%s3 + $0x278] sm:$0xff]
  %v2955 = vld [vmem:[%s3 + $0x280] sm:$0xff]
  %v2956 = vld [vmem:[%s3 + $0x288] sm:$0xff]
  %v2957 = vld [vmem:[%s3 + $0x290] sm:$0xff]
  %v2958 = vld [vmem:[%s3 + $0x298] sm:$0xff]
  %v2959 = vld [vmem:[%s3 + $0x2a0] sm:$0xff]
  %v2960 = vld [vmem:[%s3 + $0x2a8] sm:$0xff]
  %v2961 = vld [vmem:[%s3 + $0x2b0] sm:$0xff]
  %v2962 = vld [vmem:[%s3 + $0x2b8] sm:$0xff]
  %v2963 = vld [vmem:[%s3 + $0x2c0] sm:$0xff]
  %v2964 = vld [vmem:[%s3 + $0x2c8] sm:$0xff]
  %v2965 = vld [vmem:[%s3 + $0x2d0] sm:$0xff]
  %v2966 = vld [vmem:[%s3 + $0x2d8] sm:$0xff]
  %v2967 = vld [vmem:[%s3 + $0x2e0] sm:$0xff]
  %v2968 = vld [vmem:[%s3 + $0x2e8] sm:$0xff]
  %v2969 = vld [vmem:[%s3 + $0x2f0] sm:$0xff]
  %v2970 = vld [vmem:[%s3 + $0x2f8] sm:$0xff]
  %v2971 = vld [vmem:[%s3 + $0x300] sm:$0xff]
  %v2972 = vld [vmem:[%s3 + $0x308] sm:$0xff]
  %v2973 = vld [vmem:[%s3 + $0x310] sm:$0xff]
  %v2974 = vld [vmem:[%s3 + $0x318] sm:$0xff]
  %v2975 = vld [vmem:[%s3 + $0x320] sm:$0xff]
  %v2976 = vld [vmem:[%s3 + $0x328] sm:$0xff]
  %v2977 = vld [vmem:[%s3 + $0x330] sm:$0xff]
  %v2978 = vld [vmem:[%s3 + $0x338] sm:$0xff]
  %v2979 = vld [vmem:[%s3 + $0x340] sm:$0xff]
  %v2980 = vld [vmem:[%s3 + $0x348] sm:$0xff]
  %v2981 = vld [vmem:[%s3 + $0x350] sm:$0xff]
  %v2982 = vld [vmem:[%s3 + $0x358] sm:$0xff]
  %v2983 = vld [vmem:[%s3 + $0x360] sm:$0xff]
  %v2984 = vld [vmem:[%s3 + $0x368] sm:$0xff]
  %v2985 = vld [vmem:[%s3 + $0x370] sm:$0xff]
  %v2986 = vld [vmem:[%s3 + $0x378] sm:$0xff]
  %v2987 = vld [vmem:[%s3 + $0x380] sm:$0xff]
  %v2988 = vld [vmem:[%s3 + $0x388] sm:$0xff]
  %v2989 = vld [vmem:[%s3 + $0x390] sm:$0xff]
  %v2990 = vld [vmem:[%s3 + $0x398] sm:$0xff]
  %v2991 = vld [vmem:[%s3 + $0x3a0] sm:$0xff]
  %v2992 = vld [vmem:[%s3 + $0x3a8] sm:$0xff]
  %v2993 = vld [vmem:[%s3 + $0x3b0] sm:$0xff]
  %v2994 = vld [vmem:[%s3 + $0x3b8] sm:$0xff]
  %v2995 = vld [vmem:[%s3 + $0x3c0] sm:$0xff]
  %v2996 = vld [vmem:[%s3 + $0x3c8] sm:$0xff]
  %v2997 = vld [vmem:[%s3 + $0x3d0] sm:$0xff]
  %v2998 = vld [vmem:[%s3 + $0x3d8] sm:$0xff]
  %v2999 = vld [vmem:[%s3 + $0x3e0] sm:$0xff]
  %v3000 = vld [vmem:[%s3 + $0x3e8] sm:$0xff]
  %v3001 = vld [vmem:[%s3 + $0x3f0] sm:$0xff]
  %v3002 = vld [vmem:[%s3 + $0x3f8] sm:$0xff]
  %v3003 = vld [vmem:[%s3 + $0x400] sm:$0xff]
  %v3004 = vld [vmem:[%s3 + $0x408] sm:$0xff]
  %v3005 = vld [vmem:[%s3 + $0x410] sm:$0xff]
  %v3006 = vld [vmem:[%s3 + $0x418] sm:$0xff]
  %v3007 = vld [vmem:[%s3 + $0x420] sm:$0xff]
  %v3008 = vld [vmem:[%s3 + $0x428] sm:$0xff]
  %v3009 = vld [vmem:[%s3 + $0x430] sm:$0xff]
  %v3010 = vld [vmem:[%s3 + $0x438] sm:$0xff]
  %v3011 = vld [vmem:[%s3 + $0x440] sm:$0xff]
  %v3012 = vld [vmem:[%s3 + $0x448] sm:$0xff]
  %v3013 = vld [vmem:[%s3 + $0x450] sm:$0xff]
  %v3014 = vld [vmem:[%s3 + $0x458] sm:$0xff]
  %v3015 = vld [vmem:[%s3 + $0x460] sm:$0xff]
  %v3016 = vld [vmem:[%s3 + $0x468] sm:$0xff]
  %v3017 = vld [vmem:[%s3 + $0x470] sm:$0xff]
  %v3018 = vld [vmem:[%s3 + $0x478] sm:$0xff]
  %v3019 = vld [vmem:[%s3 + $0x480] sm:$0xff]
  %v3020 = vld [vmem:[%s3 + $0x488] sm:$0xff]
  %v3021 = vld [vmem:[%s3 + $0x490] sm:$0xff]
  %v3022 = vld [vmem:[%s3 + $0x498] sm:$0xff]
  %v3023 = vld [vmem:[%s3 + $0x4a0] sm:$0xff]
  %v3024 = vld [vmem:[%s3 + $0x4a8] sm:$0xff]
  %v3025 = vld [vmem:[%s3 + $0x4b0] sm:$0xff]
  %v3026 = vld [vmem:[%s3 + $0x4b8] sm:$0xff]
  %v3027 = vld [vmem:[%s3 + $0x4c0] sm:$0xff]
  %v3028 = vld [vmem:[%s3 + $0x4c8] sm:$0xff]
  %v3029 = vld [vmem:[%s3 + $0x4d0] sm:$0xff]
  %v3030 = vld [vmem:[%s3 + $0x4d8] sm:$0xff]
  %v3031 = vld [vmem:[%s3 + $0x4e0] sm:$0xff]
  %v3032 = vld [vmem:[%s3 + $0x4e8] sm:$0xff]
  %v3033 = vld [vmem:[%s3 + $0x4f0] sm:$0xff]
  %v3034 = vld [vmem:[%s3 + $0x4f8] sm:$0xff]
  %v3035 = vld [vmem:[%s3 + $0x500] sm:$0xff]
  %v3036 = vld [vmem:[%s3 + $0x508] sm:$0xff]
  %v3037 = vld [vmem:[%s3 + $0x510] sm:$0xff]
  %v3038 = vld [vmem:[%s3 + $0x518] sm:$0xff]
  %v3039 = vld [vmem:[%s3 + $0x520] sm:$0xff]
  %v3040 = vld [vmem:[%s3 + $0x528] sm:$0xff]
  %v3041 = vld [vmem:[%s3 + $0x530] sm:$0xff]
  %v3042 = vld [vmem:[%s3 + $0x538] sm:$0xff]
  %v3043 = vld [vmem:[%s3 + $0x540] sm:$0xff]
  %v3044 = vld [vmem:[%s3 + $0x548] sm:$0xff]
  %v3045 = vld [vmem:[%s3 + $0x550] sm:$0xff]
  %v3046 = vld [vmem:[%s3 + $0x558] sm:$0xff]
  %v3047 = vld [vmem:[%s3 + $0x560] sm:$0xff]
  %v3048 = vld [vmem:[%s3 + $0x568] sm:$0xff]
  %v3049 = vld [vmem:[%s3 + $0x570] sm:$0xff]
  %v3050 = vld [vmem:[%s3 + $0x578] sm:$0xff]
  %v3051 = vld [vmem:[%s3 + $0x580] sm:$0xff]
  %v3052 = vld [vmem:[%s3 + $0x588] sm:$0xff]
  %v3053 = vld [vmem:[%s3 + $0x590] sm:$0xff]
  %v3054 = vld [vmem:[%s3 + $0x598] sm:$0xff]
  %v3055 = vld [vmem:[%s3 + $0x5a0] sm:$0xff]
  %v3056 = vld [vmem:[%s3 + $0x5a8] sm:$0xff]
  %v3057 = vld [vmem:[%s3 + $0x5b0] sm:$0xff]
  %v3058 = vld [vmem:[%s3 + $0x5b8] sm:$0xff]
  %v3059 = vld [vmem:[%s3 + $0x5c0] sm:$0xff]
  %v3060 = vld [vmem:[%s3 + $0x5c8] sm:$0xff]
  %v3061 = vld [vmem:[%s3 + $0x5d0] sm:$0xff]
  %v3062 = vld [vmem:[%s3 + $0x5d8] sm:$0xff]
  %v3063 = vld [vmem:[%s3 + $0x5e0] sm:$0xff]
  %v3064 = vld [vmem:[%s3 + $0x5e8] sm:$0xff]
  %v3065 = vld [vmem:[%s3 + $0x5f0] sm:$0xff]
  %v3066 = vld [vmem:[%s3 + $0x5f8] sm:$0xff]
  %v3067 = vld [vmem:[%s3 + $0x600] sm:$0xff]
  %v3068 = vld [vmem:[%s3 + $0x608] sm:$0xff]
  %v3069 = vld [vmem:[%s3 + $0x610] sm:$0xff]
  %v3070 = vld [vmem:[%s3 + $0x618] sm:$0xff]
  %v3071 = vld [vmem:[%s4] sm:$0xf]
  %v3073 = vperm.slane %v3071, 0
  %v3074 = vperm.slane %v3071, 1
  %v3075 = vperm.slane %v3071, 2
  %v3076 = vperm.slane %v3071, 3
  %v3277 = vunpack.c.l.b16 %v2875
  %v3278 = vunpack.c.h.b16 %v2875
  %v3279 = vunpack.c.l.b16 %v2876
  %v3280 = vunpack.c.h.b16 %v2876
  %v3281 = vunpack.c.l.b16 %v2877
  %v3282 = vunpack.c.h.b16 %v2877
  %v3283 = vunpack.c.l.b16 %v2878
  %v3284 = vunpack.c.h.b16 %v2878
  %v3285 = vunpack.c.l.b16 %v2879
  %v3286 = vunpack.c.h.b16 %v2879
  %v3287 = vunpack.c.l.b16 %v2880
  %v3288 = vunpack.c.h.b16 %v2880
  %v3289 = vunpack.c.l.b16 %v2881
  %v3290 = vunpack.c.h.b16 %v2881
  %v3291 = vunpack.c.l.b16 %v2882
  %v3292 = vunpack.c.h.b16 %v2882
  %v3293 = vunpack.c.l.b16 %v2883
  %v3294 = vunpack.c.h.b16 %v2883
  %v3295 = vunpack.c.l.b16 %v2884
  %v3296 = vunpack.c.h.b16 %v2884
  %v3297 = vunpack.c.l.b16 %v2885
  %v3298 = vunpack.c.h.b16 %v2885
  %v3299 = vunpack.c.l.b16 %v2886
  %v3300 = vunpack.c.h.b16 %v2886
  %v3301 = vunpack.c.l.b16 %v2887
  %v3302 = vunpack.c.h.b16 %v2887
  %v3303 = vunpack.c.l.b16 %v2888
  %v3304 = vunpack.c.h.b16 %v2888
  %v3305 = vunpack.c.l.b16 %v2889
  %v3306 = vunpack.c.h.b16 %v2889
  %v3307 = vunpack.c.l.b16 %v2890
  %v3308 = vunpack.c.h.b16 %v2890
  %v3309 = vunpack.c.l.b16 %v2891
  %v3310 = vunpack.c.h.b16 %v2891
  %v3311 = vunpack.c.l.b16 %v2892
  %v3312 = vunpack.c.h.b16 %v2892
  %v3313 = vunpack.c.l.b16 %v2893
  %v3314 = vunpack.c.h.b16 %v2893
  %v3315 = vunpack.c.l.b16 %v2894
  %v3316 = vunpack.c.h.b16 %v2894
  %v3317 = vunpack.c.l.b16 %v2895
  %v3318 = vunpack.c.h.b16 %v2895
  %v3319 = vunpack.c.l.b16 %v2896
  %v3320 = vunpack.c.h.b16 %v2896
  %v3321 = vunpack.c.l.b16 %v2897
  %v3322 = vunpack.c.h.b16 %v2897
  %v3323 = vunpack.c.l.b16 %v2898
  %v3324 = vunpack.c.h.b16 %v2898
  %v3325 = vunpack.c.l.b16 %v2899
  %v3326 = vunpack.c.h.b16 %v2899
  %v3327 = vunpack.c.l.b16 %v2900
  %v3328 = vunpack.c.h.b16 %v2900
  %v3329 = vunpack.c.l.b16 %v2901
  %v3330 = vunpack.c.h.b16 %v2901
  %v3331 = vunpack.c.l.b16 %v2902
  %v3332 = vunpack.c.h.b16 %v2902
  %v3333 = vunpack.c.l.b16 %v2903
  %v3334 = vunpack.c.h.b16 %v2903
  %v3335 = vunpack.c.l.b16 %v2904
  %v3336 = vunpack.c.h.b16 %v2904
  %v3337 = vunpack.c.l.b16 %v2905
  %v3338 = vunpack.c.h.b16 %v2905
  %v3339 = vunpack.c.l.b16 %v2906
  %v3340 = vunpack.c.h.b16 %v2906
  %v3341 = vunpack.c.l.b16 %v2907
  %v3342 = vunpack.c.h.b16 %v2907
  %v3343 = vunpack.c.l.b16 %v2908
  %v3344 = vunpack.c.h.b16 %v2908
  %v3345 = vunpack.c.l.b16 %v2909
  %v3346 = vunpack.c.h.b16 %v2909
  %v3347 = vunpack.c.l.b16 %v2910
  %v3348 = vunpack.c.h.b16 %v2910
  %v3349 = vunpack.c.l.b16 %v2911
  %v3350 = vunpack.c.h.b16 %v2911
  %v3351 = vunpack.c.l.b16 %v2912
  %v3352 = vunpack.c.h.b16 %v2912
  %v3353 = vunpack.c.l.b16 %v2913
  %v3354 = vunpack.c.h.b16 %v2913
  %v3355 = vunpack.c.l.b16 %v2914
  %v3356 = vunpack.c.h.b16 %v2914
  %v3357 = vunpack.c.l.b16 %v2915
  %v3358 = vunpack.c.h.b16 %v2915
  %v3359 = vunpack.c.l.b16 %v2916
  %v3360 = vunpack.c.h.b16 %v2916
  %v3361 = vunpack.c.l.b16 %v2917
  %v3362 = vunpack.c.h.b16 %v2917
  %v3363 = vunpack.c.l.b16 %v2918
  %v3364 = vunpack.c.h.b16 %v2918
  %v3365 = vunpack.c.l.b16 %v2919
  %v3366 = vunpack.c.h.b16 %v2919
  %v3367 = vunpack.c.l.b16 %v2920
  %v3368 = vunpack.c.h.b16 %v2920
  %v3369 = vunpack.c.l.b16 %v2921
  %v3370 = vunpack.c.h.b16 %v2921
  %v3371 = vunpack.c.l.b16 %v2922
  %v3372 = vunpack.c.h.b16 %v2922
  %v3373 = vunpack.c.l.b16 %v2923
  %v3374 = vunpack.c.h.b16 %v2923
  %v3375 = vunpack.c.l.b16 %v2924
  %v3376 = vunpack.c.h.b16 %v2924
  %v3377 = vunpack.c.l.b16 %v2925
  %v3378 = vunpack.c.h.b16 %v2925
  %v3379 = vunpack.c.l.b16 %v2926
  %v3380 = vunpack.c.h.b16 %v2926
  %v3381 = vunpack.c.l.b16 %v2927
  %v3382 = vunpack.c.h.b16 %v2927
  %v3383 = vunpack.c.l.b16 %v2928
  %v3384 = vunpack.c.h.b16 %v2928
  %v3385 = vunpack.c.l.b16 %v2929
  %v3386 = vunpack.c.h.b16 %v2929
  %v3387 = vunpack.c.l.b16 %v2930
  %v3388 = vunpack.c.h.b16 %v2930
  %v3389 = vunpack.c.l.b16 %v2931
  %v3390 = vunpack.c.h.b16 %v2931
  %v3391 = vunpack.c.l.b16 %v2932
  %v3392 = vunpack.c.h.b16 %v2932
  %v3393 = vunpack.c.l.b16 %v2933
  %v3394 = vunpack.c.h.b16 %v2933
  %v3395 = vunpack.c.l.b16 %v2934
  %v3396 = vunpack.c.h.b16 %v2934
  %v3397 = vunpack.c.l.b16 %v2935
  %v3398 = vunpack.c.h.b16 %v2935
  %v3399 = vunpack.c.l.b16 %v2936
  %v3400 = vunpack.c.h.b16 %v2936
  %v3401 = vunpack.c.l.b16 %v2937
  %v3402 = vunpack.c.h.b16 %v2937
  %v3403 = vunpack.c.l.b16 %v2938
  %v3404 = vunpack.c.h.b16 %v2938
  %v3405 = vunpack.c.l.b16 %v2939
  %v3406 = vunpack.c.h.b16 %v2939
  %v3407 = vunpack.c.l.b16 %v2940
  %v3408 = vunpack.c.h.b16 %v2940
  %v3409 = vunpack.c.l.b16 %v2941
  %v3410 = vunpack.c.h.b16 %v2941
  %v3411 = vunpack.c.l.b16 %v2942
  %v3412 = vunpack.c.h.b16 %v2942
  %v3413 = vunpack.c.l.b16 %v2943
  %v3414 = vunpack.c.h.b16 %v2943
  %v3415 = vunpack.c.l.b16 %v2944
  %v3416 = vunpack.c.h.b16 %v2944
  %v3417 = vunpack.c.l.b16 %v2945
  %v3418 = vunpack.c.h.b16 %v2945
  %v3419 = vunpack.c.l.b16 %v2946
  %v3420 = vunpack.c.h.b16 %v2946
  %v3421 = vunpack.c.l.b16 %v2947
  %v3422 = vunpack.c.h.b16 %v2947
  %v3423 = vunpack.c.l.b16 %v2948
  %v3424 = vunpack.c.h.b16 %v2948
  %v3425 = vunpack.c.l.b16 %v2949
  %v3426 = vunpack.c.h.b16 %v2949
  %v3427 = vunpack.c.l.b16 %v2950
  %v3428 = vunpack.c.h.b16 %v2950
  %v3429 = vunpack.c.l.b16 %v2951
  %v3430 = vunpack.c.h.b16 %v2951
  %v3431 = vunpack.c.l.b16 %v2952
  %v3432 = vunpack.c.h.b16 %v2952
  %v3433 = vunpack.c.l.b16 %v2953
  %v3434 = vunpack.c.h.b16 %v2953
  %v3435 = vunpack.c.l.b16 %v2954
  %v3436 = vunpack.c.h.b16 %v2954
  %v3437 = vunpack.c.l.b16 %v2955
  %v3438 = vunpack.c.h.b16 %v2955
  %v3439 = vunpack.c.l.b16 %v2956
  %v3440 = vunpack.c.h.b16 %v2956
  %v3441 = vunpack.c.l.b16 %v2957
  %v3442 = vunpack.c.h.b16 %v2957
  %v3443 = vunpack.c.l.b16 %v2958
  %v3444 = vunpack.c.h.b16 %v2958
  %v3445 = vunpack.c.l.b16 %v2959
  %v3446 = vunpack.c.h.b16 %v2959
  %v3447 = vunpack.c.l.b16 %v2960
  %v3448 = vunpack.c.h.b16 %v2960
  %v3449 = vunpack.c.l.b16 %v2961
  %v3450 = vunpack.c.h.b16 %v2961
  %v3451 = vunpack.c.l.b16 %v2962
  %v3452 = vunpack.c.h.b16 %v2962
  %v3453 = vunpack.c.l.b16 %v2963
  %v3454 = vunpack.c.h.b16 %v2963
  %v3455 = vunpack.c.l.b16 %v2964
  %v3456 = vunpack.c.h.b16 %v2964
  %v3457 = vunpack.c.l.b16 %v2965
  %v3458 = vunpack.c.h.b16 %v2965
  %v3459 = vunpack.c.l.b16 %v2966
  %v3460 = vunpack.c.h.b16 %v2966
  %v3461 = vunpack.c.l.b16 %v2967
  %v3462 = vunpack.c.h.b16 %v2967
  %v3463 = vunpack.c.l.b16 %v2968
  %v3464 = vunpack.c.h.b16 %v2968
  %v3465 = vunpack.c.l.b16 %v2969
  %v3466 = vunpack.c.h.b16 %v2969
  %v3467 = vunpack.c.l.b16 %v2970
  %v3468 = vunpack.c.h.b16 %v2970
  %v3469 = vunpack.c.l.b16 %v2971
  %v3470 = vunpack.c.h.b16 %v2971
  %v3471 = vunpack.c.l.b16 %v2972
  %v3472 = vunpack.c.h.b16 %v2972
  %v3473 = vunpack.c.l.b16 %v2973
  %v3474 = vunpack.c.h.b16 %v2973
  %v3475 = vunpack.c.l.b16 %v2974
  %v3476 = vunpack.c.h.b16 %v2974
  %v3477 = vunpack.c.l.b16 %v2975
  %v3478 = vunpack.c.h.b16 %v2975
  %v3479 = vunpack.c.l.b16 %v2976
  %v3480 = vunpack.c.h.b16 %v2976
  %v3481 = vunpack.c.l.b16 %v2977
  %v3482 = vunpack.c.h.b16 %v2977
  %v3483 = vunpack.c.l.b16 %v2978
  %v3484 = vunpack.c.h.b16 %v2978
  %v3485 = vunpack.c.l.b16 %v2979
  %v3486 = vunpack.c.h.b16 %v2979
  %v3487 = vunpack.c.l.b16 %v2980
  %v3488 = vunpack.c.h.b16 %v2980
  %v3489 = vunpack.c.l.b16 %v2981
  %v3490 = vunpack.c.h.b16 %v2981
  %v3491 = vunpack.c.l.b16 %v2982
  %v3492 = vunpack.c.h.b16 %v2982
  %v3493 = vunpack.c.l.b16 %v2983
  %v3494 = vunpack.c.h.b16 %v2983
  %v3495 = vunpack.c.l.b16 %v2984
  %v3496 = vunpack.c.h.b16 %v2984
  %v3497 = vunpack.c.l.b16 %v2985
  %v3498 = vunpack.c.h.b16 %v2985
  %v3499 = vunpack.c.l.b16 %v2986
  %v3500 = vunpack.c.h.b16 %v2986
  %v3501 = vunpack.c.l.b16 %v2987
  %v3502 = vunpack.c.h.b16 %v2987
  %v3503 = vunpack.c.l.b16 %v2988
  %v3504 = vunpack.c.h.b16 %v2988
  %v3505 = vunpack.c.l.b16 %v2989
  %v3506 = vunpack.c.h.b16 %v2989
  %v3507 = vunpack.c.l.b16 %v2990
  %v3508 = vunpack.c.h.b16 %v2990
  %v3509 = vunpack.c.l.b16 %v2991
  %v3510 = vunpack.c.h.b16 %v2991
  %v3511 = vunpack.c.l.b16 %v2992
  %v3512 = vunpack.c.h.b16 %v2992
  %v3513 = vunpack.c.l.b16 %v2993
  %v3514 = vunpack.c.h.b16 %v2993
  %v3515 = vunpack.c.l.b16 %v2994
  %v3516 = vunpack.c.h.b16 %v2994
  %v3517 = vunpack.c.l.b16 %v2995
  %v3518 = vunpack.c.h.b16 %v2995
  %v3519 = vunpack.c.l.b16 %v2996
  %v3520 = vunpack.c.h.b16 %v2996
  %v3521 = vunpack.c.l.b16 %v2997
  %v3522 = vunpack.c.h.b16 %v2997
  %v3523 = vunpack.c.l.b16 %v2998
  %v3524 = vunpack.c.h.b16 %v2998
  %v3525 = vunpack.c.l.b16 %v2999
  %v3526 = vunpack.c.h.b16 %v2999
  %v3527 = vunpack.c.l.b16 %v3000
  %v3528 = vunpack.c.h.b16 %v3000
  %v3529 = vunpack.c.l.b16 %v3001
  %v3530 = vunpack.c.h.b16 %v3001
  %v3531 = vunpack.c.l.b16 %v3002
  %v3532 = vunpack.c.h.b16 %v3002
  %v3533 = vunpack.c.l.b16 %v3003
  %v3534 = vunpack.c.h.b16 %v3003
  %v3535 = vunpack.c.l.b16 %v3004
  %v3536 = vunpack.c.h.b16 %v3004
  %v3537 = vunpack.c.l.b16 %v3005
  %v3538 = vunpack.c.h.b16 %v3005
  %v3539 = vunpack.c.l.b16 %v3006
  %v3540 = vunpack.c.h.b16 %v3006
  %v3541 = vunpack.c.l.b16 %v3007
  %v3542 = vunpack.c.h.b16 %v3007
  %v3543 = vunpack.c.l.b16 %v3008
  %v3544 = vunpack.c.h.b16 %v3008
  %v3545 = vunpack.c.l.b16 %v3009
  %v3546 = vunpack.c.h.b16 %v3009
  %v3547 = vunpack.c.l.b16 %v3010
  %v3548 = vunpack.c.h.b16 %v3010
  %v3549 = vunpack.c.l.b16 %v3011
  %v3550 = vunpack.c.h.b16 %v3011
  %v3551 = vunpack.c.l.b16 %v3012
  %v3552 = vunpack.c.h.b16 %v3012
  %v3553 = vunpack.c.l.b16 %v3013
  %v3554 = vunpack.c.h.b16 %v3013
  %v3555 = vunpack.c.l.b16 %v3014
  %v3556 = vunpack.c.h.b16 %v3014
  %v3557 = vunpack.c.l.b16 %v3015
  %v3558 = vunpack.c.h.b16 %v3015
  %v3559 = vunpack.c.l.b16 %v3016
  %v3560 = vunpack.c.h.b16 %v3016
  %v3561 = vunpack.c.l.b16 %v3017
  %v3562 = vunpack.c.h.b16 %v3017
  %v3563 = vunpack.c.l.b16 %v3018
  %v3564 = vunpack.c.h.b16 %v3018
  %v3565 = vunpack.c.l.b16 %v3019
  %v3566 = vunpack.c.h.b16 %v3019
  %v3567 = vunpack.c.l.b16 %v3020
  %v3568 = vunpack.c.h.b16 %v3020
  %v3569 = vunpack.c.l.b16 %v3021
  %v3570 = vunpack.c.h.b16 %v3021
  %v3571 = vunpack.c.l.b16 %v3022
  %v3572 = vunpack.c.h.b16 %v3022
  %v3573 = vunpack.c.l.b16 %v3023
  %v3574 = vunpack.c.h.b16 %v3023
  %v3575 = vunpack.c.l.b16 %v3024
  %v3576 = vunpack.c.h.b16 %v3024
  %v3577 = vunpack.c.l.b16 %v3025
  %v3578 = vunpack.c.h.b16 %v3025
  %v3579 = vunpack.c.l.b16 %v3026
  %v3580 = vunpack.c.h.b16 %v3026
  %v3581 = vunpack.c.l.b16 %v3027
  %v3582 = vunpack.c.h.b16 %v3027
  %v3583 = vunpack.c.l.b16 %v3028
  %v3584 = vunpack.c.h.b16 %v3028
  %v3585 = vunpack.c.l.b16 %v3029
  %v3586 = vunpack.c.h.b16 %v3029
  %v3587 = vunpack.c.l.b16 %v3030
  %v3588 = vunpack.c.h.b16 %v3030
  %v3589 = vunpack.c.l.b16 %v3031
  %v3590 = vunpack.c.h.b16 %v3031
  %v3591 = vunpack.c.l.b16 %v3032
  %v3592 = vunpack.c.h.b16 %v3032
  %v3593 = vunpack.c.l.b16 %v3033
  %v3594 = vunpack.c.h.b16 %v3033
  %v3595 = vunpack.c.l.b16 %v3034
  %v3596 = vunpack.c.h.b16 %v3034
  %v3597 = vunpack.c.l.b16 %v3035
  %v3598 = vunpack.c.h.b16 %v3035
  %v3599 = vunpack.c.l.b16 %v3036
  %v3600 = vunpack.c.h.b16 %v3036
  %v3601 = vunpack.c.l.b16 %v3037
  %v3602 = vunpack.c.h.b16 %v3037
  %v3603 = vunpack.c.l.b16 %v3038
  %v3604 = vunpack.c.h.b16 %v3038
  %v3605 = vunpack.c.l.b16 %v3039
  %v3606 = vunpack.c.h.b16 %v3039
  %v3607 = vunpack.c.l.b16 %v3040
  %v3608 = vunpack.c.h.b16 %v3040
  %v3609 = vunpack.c.l.b16 %v3041
  %v3610 = vunpack.c.h.b16 %v3041
  %v3611 = vunpack.c.l.b16 %v3042
  %v3612 = vunpack.c.h.b16 %v3042
  %v3613 = vunpack.c.l.b16 %v3043
  %v3614 = vunpack.c.h.b16 %v3043
  %v3615 = vunpack.c.l.b16 %v3044
  %v3616 = vunpack.c.h.b16 %v3044
  %v3617 = vunpack.c.l.b16 %v3045
  %v3618 = vunpack.c.h.b16 %v3045
  %v3619 = vunpack.c.l.b16 %v3046
  %v3620 = vunpack.c.h.b16 %v3046
  %v3621 = vunpack.c.l.b16 %v3047
  %v3622 = vunpack.c.h.b16 %v3047
  %v3623 = vunpack.c.l.b16 %v3048
  %v3624 = vunpack.c.h.b16 %v3048
  %v3625 = vunpack.c.l.b16 %v3049
  %v3626 = vunpack.c.h.b16 %v3049
  %v3627 = vunpack.c.l.b16 %v3050
  %v3628 = vunpack.c.h.b16 %v3050
  %v3629 = vunpack.c.l.b16 %v3051
  %v3630 = vunpack.c.h.b16 %v3051
  %v3631 = vunpack.c.l.b16 %v3052
  %v3632 = vunpack.c.h.b16 %v3052
  %v3633 = vunpack.c.l.b16 %v3053
  %v3634 = vunpack.c.h.b16 %v3053
  %v3635 = vunpack.c.l.b16 %v3054
  %v3636 = vunpack.c.h.b16 %v3054
  %v3637 = vunpack.c.l.b16 %v3055
  %v3638 = vunpack.c.h.b16 %v3055
  %v3639 = vunpack.c.l.b16 %v3056
  %v3640 = vunpack.c.h.b16 %v3056
  %v3641 = vunpack.c.l.b16 %v3057
  %v3642 = vunpack.c.h.b16 %v3057
  %v3643 = vunpack.c.l.b16 %v3058
  %v3644 = vunpack.c.h.b16 %v3058
  %v3645 = vunpack.c.l.b16 %v3059
  %v3646 = vunpack.c.h.b16 %v3059
  %v3647 = vunpack.c.l.b16 %v3060
  %v3648 = vunpack.c.h.b16 %v3060
  %v3649 = vunpack.c.l.b16 %v3061
  %v3650 = vunpack.c.h.b16 %v3061
  %v3651 = vunpack.c.l.b16 %v3062
  %v3652 = vunpack.c.h.b16 %v3062
  %v3653 = vunpack.c.l.b16 %v3063
  %v3654 = vunpack.c.h.b16 %v3063
  %v3655 = vunpack.c.l.b16 %v3064
  %v3656 = vunpack.c.h.b16 %v3064
  %v3657 = vunpack.c.l.b16 %v3065
  %v3658 = vunpack.c.h.b16 %v3065
  %v3659 = vunpack.c.l.b16 %v3066
  %v3660 = vunpack.c.h.b16 %v3066
  %v3661 = vunpack.c.l.b16 %v3067
  %v3662 = vunpack.c.h.b16 %v3067
  %v3663 = vunpack.c.l.b16 %v3068
  %v3664 = vunpack.c.h.b16 %v3068
  %v3665 = vunpack.c.l.b16 %v3069
  %v3666 = vunpack.c.h.b16 %v3069
  %v3667 = vunpack.c.l.b16 %v3070
  %v3668 = vunpack.c.h.b16 %v3070
  %v3669 = vpack.c.b16 %v3281, %v3277
  %v3670 = vpack.c.b16 %v3282, %v3278
  %v3671 = vpack.c.b16 %v3283, %v3279
  %v3672 = vpack.c.b16 %v3284, %v3280
  %v3673 = vpack.c.b16 %v3289, %v3285
  %v3674 = vpack.c.b16 %v3290, %v3286
  %v3675 = vpack.c.b16 %v3291, %v3287
  %v3676 = vpack.c.b16 %v3292, %v3288
  %v3677 = vpack.c.b16 %v3297, %v3293
  %v3678 = vpack.c.b16 %v3298, %v3294
  %v3679 = vpack.c.b16 %v3299, %v3295
  %v3680 = vpack.c.b16 %v3300, %v3296
  %v3681 = vpack.c.b16 %v3305, %v3301
  %v3682 = vpack.c.b16 %v3306, %v3302
  %v3683 = vpack.c.b16 %v3307, %v3303
  %v3684 = vpack.c.b16 %v3308, %v3304
  %v3685 = vpack.c.b16 %v3313, %v3309
  %v3686 = vpack.c.b16 %v3314, %v3310
  %v3687 = vpack.c.b16 %v3315, %v3311
  %v3688 = vpack.c.b16 %v3316, %v3312
  %v3689 = vpack.c.b16 %v3321, %v3317
  %v3690 = vpack.c.b16 %v3322, %v3318
  %v3691 = vpack.c.b16 %v3323, %v3319
  %v3692 = vpack.c.b16 %v3324, %v3320
  %v3693 = vpack.c.b16 %v3329, %v3325
  %v3694 = vpack.c.b16 %v3330, %v3326
  %v3695 = vpack.c.b16 %v3331, %v3327
  %v3696 = vpack.c.b16 %v3332, %v3328
  %v3697 = vpack.c.b16 %v3337, %v3333
  %v3698 = vpack.c.b16 %v3338, %v3334
  %v3699 = vpack.c.b16 %v3339, %v3335
  %v3700 = vpack.c.b16 %v3340, %v3336
  %v3701 = vpack.c.b16 %v3345, %v3341
  %v3702 = vpack.c.b16 %v3346, %v3342
  %v3703 = vpack.c.b16 %v3347, %v3343
  %v3704 = vpack.c.b16 %v3348, %v3344
  %v3705 = vpack.c.b16 %v3353, %v3349
  %v3706 = vpack.c.b16 %v3354, %v3350
  %v3707 = vpack.c.b16 %v3355, %v3351
  %v3708 = vpack.c.b16 %v3356, %v3352
  %v3709 = vpack.c.b16 %v3361, %v3357
  %v3710 = vpack.c.b16 %v3362, %v3358
  %v3711 = vpack.c.b16 %v3363, %v3359
  %v3712 = vpack.c.b16 %v3364, %v3360
  %v3713 = vpack.c.b16 %v3369, %v3365
  %v3714 = vpack.c.b16 %v3370, %v3366
  %v3715 = vpack.c.b16 %v3371, %v3367
  %v3716 = vpack.c.b16 %v3372, %v3368
  %v3717 = vpack.c.b16 %v3377, %v3373
  %v3718 = vpack.c.b16 %v3378, %v3374
  %v3719 = vpack.c.b16 %v3379, %v3375
  %v3720 = vpack.c.b16 %v3380, %v3376
  %v3721 = vpack.c.b16 %v3385, %v3381
  %v3722 = vpack.c.b16 %v3386, %v3382
  %v3723 = vpack.c.b16 %v3387, %v3383
  %v3724 = vpack.c.b16 %v3388, %v3384
  %v3725 = vpack.c.b16 %v3393, %v3389
  %v3726 = vpack.c.b16 %v3394, %v3390
  %v3727 = vpack.c.b16 %v3395, %v3391
  %v3728 = vpack.c.b16 %v3396, %v3392
  %v3729 = vpack.c.b16 %v3401, %v3397
  %v3730 = vpack.c.b16 %v3402, %v3398
  %v3731 = vpack.c.b16 %v3403, %v3399
  %v3732 = vpack.c.b16 %v3404, %v3400
  %v3733 = vpack.c.b16 %v3409, %v3405
  %v3734 = vpack.c.b16 %v3410, %v3406
  %v3735 = vpack.c.b16 %v3411, %v3407
  %v3736 = vpack.c.b16 %v3412, %v3408
  %v3737 = vpack.c.b16 %v3417, %v3413
  %v3738 = vpack.c.b16 %v3418, %v3414
  %v3739 = vpack.c.b16 %v3419, %v3415
  %v3740 = vpack.c.b16 %v3420, %v3416
  %v3741 = vpack.c.b16 %v3425, %v3421
  %v3742 = vpack.c.b16 %v3426, %v3422
  %v3743 = vpack.c.b16 %v3427, %v3423
  %v3744 = vpack.c.b16 %v3428, %v3424
  %v3745 = vpack.c.b16 %v3433, %v3429
  %v3746 = vpack.c.b16 %v3434, %v3430
  %v3747 = vpack.c.b16 %v3435, %v3431
  %v3748 = vpack.c.b16 %v3436, %v3432
  %v3749 = vpack.c.b16 %v3441, %v3437
  %v3750 = vpack.c.b16 %v3442, %v3438
  %v3751 = vpack.c.b16 %v3443, %v3439
  %v3752 = vpack.c.b16 %v3444, %v3440
  %v3753 = vpack.c.b16 %v3449, %v3445
  %v3754 = vpack.c.b16 %v3450, %v3446
  %v3755 = vpack.c.b16 %v3451, %v3447
  %v3756 = vpack.c.b16 %v3452, %v3448
  %v3757 = vpack.c.b16 %v3457, %v3453
  %v3758 = vpack.c.b16 %v3458, %v3454
  %v3759 = vpack.c.b16 %v3459, %v3455
  %v3760 = vpack.c.b16 %v3460, %v3456
  %v3761 = vpack.c.b16 %v3465, %v3461
  %v3762 = vpack.c.b16 %v3466, %v3462
  %v3763 = vpack.c.b16 %v3467, %v3463
  %v3764 = vpack.c.b16 %v3468, %v3464
  %v3765 = vpack.c.b16 %v3473, %v3469
  %v3766 = vpack.c.b16 %v3474, %v3470
  %v3767 = vpack.c.b16 %v3475, %v3471
  %v3768 = vpack.c.b16 %v3476, %v3472
  %v3769 = vpack.c.b16 %v3481, %v3477
  %v3770 = vpack.c.b16 %v3482, %v3478
  %v3771 = vpack.c.b16 %v3483, %v3479
  %v3772 = vpack.c.b16 %v3484, %v3480
  %v3773 = vpack.c.b16 %v3489, %v3485
  %v3774 = vpack.c.b16 %v3490, %v3486
  %v3775 = vpack.c.b16 %v3491, %v3487
  %v3776 = vpack.c.b16 %v3492, %v3488
  %v3777 = vpack.c.b16 %v3497, %v3493
  %v3778 = vpack.c.b16 %v3498, %v3494
  %v3779 = vpack.c.b16 %v3499, %v3495
  %v3780 = vpack.c.b16 %v3500, %v3496
  %v3781 = vpack.c.b16 %v3505, %v3501
  %v3782 = vpack.c.b16 %v3506, %v3502
  %v3783 = vpack.c.b16 %v3507, %v3503
  %v3784 = vpack.c.b16 %v3508, %v3504
  %v3785 = vpack.c.b16 %v3513, %v3509
  %v3786 = vpack.c.b16 %v3514, %v3510
  %v3787 = vpack.c.b16 %v3515, %v3511
  %v3788 = vpack.c.b16 %v3516, %v3512
  %v3789 = vpack.c.b16 %v3521, %v3517
  %v3790 = vpack.c.b16 %v3522, %v3518
  %v3791 = vpack.c.b16 %v3523, %v3519
  %v3792 = vpack.c.b16 %v3524, %v3520
  %v3793 = vpack.c.b16 %v3529, %v3525
  %v3794 = vpack.c.b16 %v3530, %v3526
  %v3795 = vpack.c.b16 %v3531, %v3527
  %v3796 = vpack.c.b16 %v3532, %v3528
  %v3797 = vpack.c.b16 %v3537, %v3533
  %v3798 = vpack.c.b16 %v3538, %v3534
  %v3799 = vpack.c.b16 %v3539, %v3535
  %v3800 = vpack.c.b16 %v3540, %v3536
  %v3801 = vpack.c.b16 %v3545, %v3541
  %v3802 = vpack.c.b16 %v3546, %v3542
  %v3803 = vpack.c.b16 %v3547, %v3543
  %v3804 = vpack.c.b16 %v3548, %v3544
  %v3805 = vpack.c.b16 %v3553, %v3549
  %v3806 = vpack.c.b16 %v3554, %v3550
  %v3807 = vpack.c.b16 %v3555, %v3551
  %v3808 = vpack.c.b16 %v3556, %v3552
  %v3809 = vpack.c.b16 %v3561, %v3557
  %v3810 = vpack.c.b16 %v3562, %v3558
  %v3811 = vpack.c.b16 %v3563, %v3559
  %v3812 = vpack.c.b16 %v3564, %v3560
  %v3813 = vpack.c.b16 %v3569, %v3565
  %v3814 = vpack.c.b16 %v3570, %v3566
  %v3815 = vpack.c.b16 %v3571, %v3567
  %v3816 = vpack.c.b16 %v3572, %v3568
  %v3817 = vpack.c.b16 %v3577, %v3573
  %v3818 = vpack.c.b16 %v3578, %v3574
  %v3819 = vpack.c.b16 %v3579, %v3575
  %v3820 = vpack.c.b16 %v3580, %v3576
  %v3821 = vpack.c.b16 %v3585, %v3581
  %v3822 = vpack.c.b16 %v3586, %v3582
  %v3823 = vpack.c.b16 %v3587, %v3583
  %v3824 = vpack.c.b16 %v3588, %v3584
  %v3825 = vpack.c.b16 %v3593, %v3589
  %v3826 = vpack.c.b16 %v3594, %v3590
  %v3827 = vpack.c.b16 %v3595, %v3591
  %v3828 = vpack.c.b16 %v3596, %v3592
  %v3829 = vpack.c.b16 %v3601, %v3597
  %v3830 = vpack.c.b16 %v3602, %v3598
  %v3831 = vpack.c.b16 %v3603, %v3599
  %v3832 = vpack.c.b16 %v3604, %v3600
  %v3833 = vpack.c.b16 %v3609, %v3605
  %v3834 = vpack.c.b16 %v3610, %v3606
  %v3835 = vpack.c.b16 %v3611, %v3607
  %v3836 = vpack.c.b16 %v3612, %v3608
  %v3837 = vpack.c.b16 %v3617, %v3613
  %v3838 = vpack.c.b16 %v3618, %v3614
  %v3839 = vpack.c.b16 %v3619, %v3615
  %v3840 = vpack.c.b16 %v3620, %v3616
  %v3841 = vpack.c.b16 %v3625, %v3621
  %v3842 = vpack.c.b16 %v3626, %v3622
  %v3843 = vpack.c.b16 %v3627, %v3623
  %v3844 = vpack.c.b16 %v3628, %v3624
  %v3845 = vpack.c.b16 %v3633, %v3629
  %v3846 = vpack.c.b16 %v3634, %v3630
  %v3847 = vpack.c.b16 %v3635, %v3631
  %v3848 = vpack.c.b16 %v3636, %v3632
  %v3849 = vpack.c.b16 %v3641, %v3637
  %v3850 = vpack.c.b16 %v3642, %v3638
  %v3851 = vpack.c.b16 %v3643, %v3639
  %v3852 = vpack.c.b16 %v3644, %v3640
  %v3853 = vpack.c.b16 %v3649, %v3645
  %v3854 = vpack.c.b16 %v3650, %v3646
  %v3855 = vpack.c.b16 %v3651, %v3647
  %v3856 = vpack.c.b16 %v3652, %v3648
  %v3857 = vpack.c.b16 %v3657, %v3653
  %v3858 = vpack.c.b16 %v3658, %v3654
  %v3859 = vpack.c.b16 %v3659, %v3655
  %v3860 = vpack.c.b16 %v3660, %v3656
  %v3861 = vpack.c.b16 %v3665, %v3661
  %v3862 = vpack.c.b16 %v3666, %v3662
  %v3863 = vpack.c.b16 %v3667, %v3663
  %v3864 = vpack.c.b16 %v3668, %v3664
  %v4062 = vsel %vm2221, %v2874, 0
  %4064 = vmatpush.bf16.msra.mxu0 %v3697
  %4065 = vmatpush.bf16.msra.mxu0 %v3693
  %4066 = vmatpush.bf16.msra.mxu0 %v3689
  %4067 = vmatpush.bf16.msra.mxu0 %v3685
  %4068 = vmatpush.bf16.msra.mxu0 %v3681
  %4069 = vmatpush.bf16.msra.mxu0 %v3677
  %4070 = vmatpush.bf16.msra.mxu0 %v3673
  %4071 = vmatpush.bf16.msra.mxu0 %v3669
  %4072 = vmatmul.bf16.gmra.mxu0 %v2868
  %v4073 = vpop.f32.mrf.mxu0
  %v4074 = vadd.f32 %v3073, %v4073
  %v4075 = vpop.f32.mrf.mxu0
  %4076 = vdwg.mxu0
  %4077 = vmatpush.bf16.msra.mxu0 %v3729
  %4078 = vmatpush.bf16.msra.mxu0 %v3725
  %4079 = vmatpush.bf16.msra.mxu0 %v3721
  %4080 = vmatpush.bf16.msra.mxu0 %v3717
  %4081 = vmatpush.bf16.msra.mxu0 %v3713
  %4082 = vmatpush.bf16.msra.mxu0 %v3709
  %4083 = vmatpush.bf16.msra.mxu0 %v3705
  %4084 = vmatpush.bf16.msra.mxu0 %v3701
  %4085 = vmatmul.bf16.gmra.mxu0 %v2869
  %v4086 = vpop.f32.mrf.mxu0
  %v4087 = vadd.f32 %v4074, %v4086
  %v4088 = vpop.f32.mrf.mxu0
  %4089 = vdwg.mxu0
  %4090 = vmatpush.bf16.msra.mxu0 %v3761
  %4091 = vmatpush.bf16.msra.mxu0 %v3757
  %4092 = vmatpush.bf16.msra.mxu0 %v3753
  %4093 = vmatpush.bf16.msra.mxu0 %v3749
  %4094 = vmatpush.bf16.msra.mxu0 %v3745
  %4095 = vmatpush.bf16.msra.mxu0 %v3741
  %4096 = vmatpush.bf16.msra.mxu0 %v3737
  %4097 = vmatpush.bf16.msra.mxu0 %v3733
  %4098 = vmatmul.bf16.gmra.mxu0 %v2870
  %v4099 = vpop.f32.mrf.mxu0
  %v4100 = vadd.f32 %v4087, %v4099
  %v4101 = vpop.f32.mrf.mxu0
  %4102 = vdwg.mxu0
  %4103 = vmatpush.bf16.msra.mxu0 %v3793
  %4104 = vmatpush.bf16.msra.mxu0 %v3789
  %4105 = vmatpush.bf16.msra.mxu0 %v3785
  %4106 = vmatpush.bf16.msra.mxu0 %v3781
  %4107 = vmatpush.bf16.msra.mxu0 %v3777
  %4108 = vmatpush.bf16.msra.mxu0 %v3773
  %4109 = vmatpush.bf16.msra.mxu0 %v3769
  %4110 = vmatpush.bf16.msra.mxu0 %v3765
  %4111 = vmatmul.bf16.gmra.mxu0 %v2871
  %v4112 = vpop.f32.mrf.mxu0
  %v4113 = vadd.f32 %v4100, %v4112
  %v4114 = vpop.f32.mrf.mxu0
  %4115 = vdwg.mxu0
  %4116 = vmatpush.bf16.msra.mxu0 %v3825
  %4117 = vmatpush.bf16.msra.mxu0 %v3821
  %4118 = vmatpush.bf16.msra.mxu0 %v3817
  %4119 = vmatpush.bf16.msra.mxu0 %v3813
  %4120 = vmatpush.bf16.msra.mxu0 %v3809
  %4121 = vmatpush.bf16.msra.mxu0 %v3805
  %4122 = vmatpush.bf16.msra.mxu0 %v3801
  %4123 = vmatpush.bf16.msra.mxu0 %v3797
  %4124 = vmatmul.bf16.gmra.mxu0 %v2872
  %v4125 = vpop.f32.mrf.mxu0
  %v4126 = vadd.f32 %v4113, %v4125
  %v4127 = vpop.f32.mrf.mxu0
  %4128 = vdwg.mxu0
  %4129 = vmatpush.bf16.msra.mxu0 %v3857
  %4130 = vmatpush.bf16.msra.mxu0 %v3853
  %4131 = vmatpush.bf16.msra.mxu0 %v3849
  %4132 = vmatpush.bf16.msra.mxu0 %v3845
  %4133 = vmatpush.bf16.msra.mxu0 %v3841
  %4134 = vmatpush.bf16.msra.mxu0 %v3837
  %4135 = vmatpush.bf16.msra.mxu0 %v3833
  %4136 = vmatpush.bf16.msra.mxu0 %v3829
  %4137 = vmatmul.bf16.gmra.mxu0 %v2873
  %v4138 = vpop.f32.mrf.mxu0
  %v4139 = vadd.f32 %v4126, %v4138
  %v4140 = vpop.f32.mrf.mxu0
  %4141 = vdwg.mxu0
  %4142 = vmatpush.bf16.msra.mxu0 0
  %4143 = vmatpush.bf16.msra.mxu0 0
  %4144 = vmatpush.bf16.msra.mxu0 0
  %4145 = vmatpush.bf16.msra.mxu0 0
  %4146 = vmatpush.bf16.msra.mxu0 0
  %4147 = vmatpush.bf16.msra.mxu0 0
  %4148 = vmatpush.bf16.msra.mxu0 0
  %4149 = vmatpush.bf16.msra.mxu0 %v3861
  %4150 = vmatmul.bf16.gmra.mxu0 %v4062
  %v4151 = vpop.f32.mrf.mxu0
  %v4152 = vadd.f32 %v4139, %v4151
  %v4153 = vpop.f32.mrf.mxu0
  %4154 = vdwg.mxu0
  %4155 = vmatpush.bf16.msra.mxu0 %v3698
  %4156 = vmatpush.bf16.msra.mxu0 %v3694
  %4157 = vmatpush.bf16.msra.mxu0 %v3690
  %4158 = vmatpush.bf16.msra.mxu0 %v3686
  %4159 = vmatpush.bf16.msra.mxu0 %v3682
  %4160 = vmatpush.bf16.msra.mxu0 %v3678
  %4161 = vmatpush.bf16.msra.mxu0 %v3674
  %4162 = vmatpush.bf16.msra.mxu0 %v3670
  %4163 = vmatmul.bf16.gmra.mxu0 %v2868
  %v4164 = vpop.f32.mrf.mxu0
  %v4165 = vadd.f32 %v3074, %v4164
  %v4166 = vpop.f32.mrf.mxu0
  %4167 = vdwg.mxu0
  %4168 = vmatpush.bf16.msra.mxu0 %v3730
  %4169 = vmatpush.bf16.msra.mxu0 %v3726
  %4170 = vmatpush.bf16.msra.mxu0 %v3722
  %4171 = vmatpush.bf16.msra.mxu0 %v3718
  %4172 = vmatpush.bf16.msra.mxu0 %v3714
  %4173 = vmatpush.bf16.msra.mxu0 %v3710
  %4174 = vmatpush.bf16.msra.mxu0 %v3706
  %4175 = vmatpush.bf16.msra.mxu0 %v3702
  %4176 = vmatmul.bf16.gmra.mxu0 %v2869
  %v4177 = vpop.f32.mrf.mxu0
  %v4178 = vadd.f32 %v4165, %v4177
  %v4179 = vpop.f32.mrf.mxu0
  %4180 = vdwg.mxu0
  %4181 = vmatpush.bf16.msra.mxu0 %v3762
  %4182 = vmatpush.bf16.msra.mxu0 %v3758
  %4183 = vmatpush.bf16.msra.mxu0 %v3754
  %4184 = vmatpush.bf16.msra.mxu0 %v3750
  %4185 = vmatpush.bf16.msra.mxu0 %v3746
  %4186 = vmatpush.bf16.msra.mxu0 %v3742
  %4187 = vmatpush.bf16.msra.mxu0 %v3738
  %4188 = vmatpush.bf16.msra.mxu0 %v3734
  %4189 = vmatmul.bf16.gmra.mxu0 %v2870
  %v4190 = vpop.f32.mrf.mxu0
  %v4191 = vadd.f32 %v4178, %v4190
  %v4192 = vpop.f32.mrf.mxu0
  %4193 = vdwg.mxu0
  %4194 = vmatpush.bf16.msra.mxu0 %v3794
  %4195 = vmatpush.bf16.msra.mxu0 %v3790
  %4196 = vmatpush.bf16.msra.mxu0 %v3786
  %4197 = vmatpush.bf16.msra.mxu0 %v3782
  %4198 = vmatpush.bf16.msra.mxu0 %v3778
  %4199 = vmatpush.bf16.msra.mxu0 %v3774
  %4200 = vmatpush.bf16.msra.mxu0 %v3770
  %4201 = vmatpush.bf16.msra.mxu0 %v3766
  %4202 = vmatmul.bf16.gmra.mxu0 %v2871
  %v4203 = vpop.f32.mrf.mxu0
  %v4204 = vadd.f32 %v4191, %v4203
  %v4205 = vpop.f32.mrf.mxu0
  %4206 = vdwg.mxu0
  %4207 = vmatpush.bf16.msra.mxu0 %v3826
  %4208 = vmatpush.bf16.msra.mxu0 %v3822
  %4209 = vmatpush.bf16.msra.mxu0 %v3818
  %4210 = vmatpush.bf16.msra.mxu0 %v3814
  %4211 = vmatpush.bf16.msra.mxu0 %v3810
  %4212 = vmatpush.bf16.msra.mxu0 %v3806
  %4213 = vmatpush.bf16.msra.mxu0 %v3802
  %4214 = vmatpush.bf16.msra.mxu0 %v3798
  %4215 = vmatmul.bf16.gmra.mxu0 %v2872
  %v4216 = vpop.f32.mrf.mxu0
  %v4217 = vadd.f32 %v4204, %v4216
  %v4218 = vpop.f32.mrf.mxu0
  %4219 = vdwg.mxu0
  %4220 = vmatpush.bf16.msra.mxu0 %v3858
  %4221 = vmatpush.bf16.msra.mxu0 %v3854
  %4222 = vmatpush.bf16.msra.mxu0 %v3850
  %4223 = vmatpush.bf16.msra.mxu0 %v3846
  %4224 = vmatpush.bf16.msra.mxu0 %v3842
  %4225 = vmatpush.bf16.msra.mxu0 %v3838
  %4226 = vmatpush.bf16.msra.mxu0 %v3834
  %4227 = vmatpush.bf16.msra.mxu0 %v3830
  %4228 = vmatmul.bf16.gmra.mxu0 %v2873
  %v4229 = vpop.f32.mrf.mxu0
  %v4230 = vadd.f32 %v4217, %v4229
  %v4231 = vpop.f32.mrf.mxu0
  %4232 = vdwg.mxu0
  %4233 = vmatpush.bf16.msra.mxu0 0
  %4234 = vmatpush.bf16.msra.mxu0 0
  %4235 = vmatpush.bf16.msra.mxu0 0
  %4236 = vmatpush.bf16.msra.mxu0 0
  %4237 = vmatpush.bf16.msra.mxu0 0
  %4238 = vmatpush.bf16.msra.mxu0 0
  %4239 = vmatpush.bf16.msra.mxu0 0
  %4240 = vmatpush.bf16.msra.mxu0 %v3862
  %4241 = vmatmul.bf16.gmra.mxu0 %v4062
  %v4242 = vpop.f32.mrf.mxu0
  %v4243 = vadd.f32 %v4230, %v4242
  %v4244 = vpop.f32.mrf.mxu0
  %4245 = vdwg.mxu0
  %4246 = vmatpush.bf16.msra.mxu0 %v3699
  %4247 = vmatpush.bf16.msra.mxu0 %v3695
  %4248 = vmatpush.bf16.msra.mxu0 %v3691
  %4249 = vmatpush.bf16.msra.mxu0 %v3687
  %4250 = vmatpush.bf16.msra.mxu0 %v3683
  %4251 = vmatpush.bf16.msra.mxu0 %v3679
  %4252 = vmatpush.bf16.msra.mxu0 %v3675
  %4253 = vmatpush.bf16.msra.mxu0 %v3671
  %4254 = vmatmul.bf16.gmra.mxu0 %v2868
  %v4255 = vpop.f32.mrf.mxu0
  %v4256 = vadd.f32 %v3075, %v4255
  %v4257 = vpop.f32.mrf.mxu0
  %4258 = vdwg.mxu0
  %4259 = vmatpush.bf16.msra.mxu0 %v3731
  %4260 = vmatpush.bf16.msra.mxu0 %v3727
  %4261 = vmatpush.bf16.msra.mxu0 %v3723
  %4262 = vmatpush.bf16.msra.mxu0 %v3719
  %4263 = vmatpush.bf16.msra.mxu0 %v3715
  %4264 = vmatpush.bf16.msra.mxu0 %v3711
  %4265 = vmatpush.bf16.msra.mxu0 %v3707
  %4266 = vmatpush.bf16.msra.mxu0 %v3703
  %4267 = vmatmul.bf16.gmra.mxu0 %v2869
  %v4268 = vpop.f32.mrf.mxu0
  %v4269 = vadd.f32 %v4256, %v4268
  %v4270 = vpop.f32.mrf.mxu0
  %4271 = vdwg.mxu0
  %4272 = vmatpush.bf16.msra.mxu0 %v3763
  %4273 = vmatpush.bf16.msra.mxu0 %v3759
  %4274 = vmatpush.bf16.msra.mxu0 %v3755
  %4275 = vmatpush.bf16.msra.mxu0 %v3751
  %4276 = vmatpush.bf16.msra.mxu0 %v3747
  %4277 = vmatpush.bf16.msra.mxu0 %v3743
  %4278 = vmatpush.bf16.msra.mxu0 %v3739
  %4279 = vmatpush.bf16.msra.mxu0 %v3735
  %4280 = vmatmul.bf16.gmra.mxu0 %v2870
  %v4281 = vpop.f32.mrf.mxu0
  %v4282 = vadd.f32 %v4269, %v4281
  %v4283 = vpop.f32.mrf.mxu0
  %4284 = vdwg.mxu0
  %4285 = vmatpush.bf16.msra.mxu0 %v3795
  %4286 = vmatpush.bf16.msra.mxu0 %v3791
  %4287 = vmatpush.bf16.msra.mxu0 %v3787
  %4288 = vmatpush.bf16.msra.mxu0 %v3783
  %4289 = vmatpush.bf16.msra.mxu0 %v3779
  %4290 = vmatpush.bf16.msra.mxu0 %v3775
  %4291 = vmatpush.bf16.msra.mxu0 %v3771
  %4292 = vmatpush.bf16.msra.mxu0 %v3767
  %4293 = vmatmul.bf16.gmra.mxu0 %v2871
  %v4294 = vpop.f32.mrf.mxu0
  %v4295 = vadd.f32 %v4282, %v4294
  %v4296 = vpop.f32.mrf.mxu0
  %4297 = vdwg.mxu0
  %4298 = vmatpush.bf16.msra.mxu0 %v3827
  %4299 = vmatpush.bf16.msra.mxu0 %v3823
  %4300 = vmatpush.bf16.msra.mxu0 %v3819
  %4301 = vmatpush.bf16.msra.mxu0 %v3815
  %4302 = vmatpush.bf16.msra.mxu0 %v3811
  %4303 = vmatpush.bf16.msra.mxu0 %v3807
  %4304 = vmatpush.bf16.msra.mxu0 %v3803
  %4305 = vmatpush.bf16.msra.mxu0 %v3799
  %4306 = vmatmul.bf16.gmra.mxu0 %v2872
  %v4307 = vpop.f32.mrf.mxu0
  %v4308 = vadd.f32 %v4295, %v4307
  %v4309 = vpop.f32.mrf.mxu0
  %4310 = vdwg.mxu0
  %4311 = vmatpush.bf16.msra.mxu0 %v3859
  %4312 = vmatpush.bf16.msra.mxu0 %v3855
  %4313 = vmatpush.bf16.msra.mxu0 %v3851
  %4314 = vmatpush.bf16.msra.mxu0 %v3847
  %4315 = vmatpush.bf16.msra.mxu0 %v3843
  %4316 = vmatpush.bf16.msra.mxu0 %v3839
  %4317 = vmatpush.bf16.msra.mxu0 %v3835
  %4318 = vmatpush.bf16.msra.mxu0 %v3831
  %4319 = vmatmul.bf16.gmra.mxu0 %v2873
  %v4320 = vpop.f32.mrf.mxu0
  %v4321 = vadd.f32 %v4308, %v4320
  %v4322 = vpop.f32.mrf.mxu0
  %4323 = vdwg.mxu0
  %4324 = vmatpush.bf16.msra.mxu0 0
  %4325 = vmatpush.bf16.msra.mxu0 0
  %4326 = vmatpush.bf16.msra.mxu0 0
  %4327 = vmatpush.bf16.msra.mxu0 0
  %4328 = vmatpush.bf16.msra.mxu0 0
  %4329 = vmatpush.bf16.msra.mxu0 0
  %4330 = vmatpush.bf16.msra.mxu0 0
  %4331 = vmatpush.bf16.msra.mxu0 %v3863
  %4332 = vmatmul.bf16.gmra.mxu0 %v4062
  %v4333 = vpop.f32.mrf.mxu0
  %v4334 = vadd.f32 %v4321, %v4333
  %v4335 = vpop.f32.mrf.mxu0
  %4336 = vdwg.mxu0
  %4337 = vmatpush.bf16.msra.mxu0 %v3700
  %4338 = vmatpush.bf16.msra.mxu0 %v3696
  %4339 = vmatpush.bf16.msra.mxu0 %v3692
  %4340 = vmatpush.bf16.msra.mxu0 %v3688
  %4341 = vmatpush.bf16.msra.mxu0 %v3684
  %4342 = vmatpush.bf16.msra.mxu0 %v3680
  %4343 = vmatpush.bf16.msra.mxu0 %v3676
  %4344 = vmatpush.bf16.msra.mxu0 %v3672
  %4345 = vmatmul.bf16.gmra.mxu0 %v2868
  %v4346 = vpop.f32.mrf.mxu0
  %v4347 = vadd.f32 %v3076, %v4346
  %v4348 = vpop.f32.mrf.mxu0
  %4349 = vdwg.mxu0
  %4350 = vmatpush.bf16.msra.mxu0 %v3732
  %4351 = vmatpush.bf16.msra.mxu0 %v3728
  %4352 = vmatpush.bf16.msra.mxu0 %v3724
  %4353 = vmatpush.bf16.msra.mxu0 %v3720
  %4354 = vmatpush.bf16.msra.mxu0 %v3716
  %4355 = vmatpush.bf16.msra.mxu0 %v3712
  %4356 = vmatpush.bf16.msra.mxu0 %v3708
  %4357 = vmatpush.bf16.msra.mxu0 %v3704
  %4358 = vmatmul.bf16.gmra.mxu0 %v2869
  %v4359 = vpop.f32.mrf.mxu0
  %v4360 = vadd.f32 %v4347, %v4359
  %v4361 = vpop.f32.mrf.mxu0
  %4362 = vdwg.mxu0
  %4363 = vmatpush.bf16.msra.mxu0 %v3764
  %4364 = vmatpush.bf16.msra.mxu0 %v3760
  %4365 = vmatpush.bf16.msra.mxu0 %v3756
  %4366 = vmatpush.bf16.msra.mxu0 %v3752
  %4367 = vmatpush.bf16.msra.mxu0 %v3748
  %4368 = vmatpush.bf16.msra.mxu0 %v3744
  %4369 = vmatpush.bf16.msra.mxu0 %v3740
  %4370 = vmatpush.bf16.msra.mxu0 %v3736
  %4371 = vmatmul.bf16.gmra.mxu0 %v2870
  %v4372 = vpop.f32.mrf.mxu0
  %v4373 = vadd.f32 %v4360, %v4372
  %v4374 = vpop.f32.mrf.mxu0
  %4375 = vdwg.mxu0
  %4376 = vmatpush.bf16.msra.mxu0 %v3796
  %4377 = vmatpush.bf16.msra.mxu0 %v3792
  %4378 = vmatpush.bf16.msra.mxu0 %v3788
  %4379 = vmatpush.bf16.msra.mxu0 %v3784
  %4380 = vmatpush.bf16.msra.mxu0 %v3780
  %4381 = vmatpush.bf16.msra.mxu0 %v3776
  %4382 = vmatpush.bf16.msra.mxu0 %v3772
  %4383 = vmatpush.bf16.msra.mxu0 %v3768
  %4384 = vmatmul.bf16.gmra.mxu0 %v2871
  %v4385 = vpop.f32.mrf.mxu0
  %v4386 = vadd.f32 %v4373, %v4385
  %v4387 = vpop.f32.mrf.mxu0
  %4388 = vdwg.mxu0
  %4389 = vmatpush.bf16.msra.mxu0 %v3828
  %4390 = vmatpush.bf16.msra.mxu0 %v3824
  %4391 = vmatpush.bf16.msra.mxu0 %v3820
  %4392 = vmatpush.bf16.msra.mxu0 %v3816
  %4393 = vmatpush.bf16.msra.mxu0 %v3812
  %4394 = vmatpush.bf16.msra.mxu0 %v3808
  %4395 = vmatpush.bf16.msra.mxu0 %v3804
  %4396 = vmatpush.bf16.msra.mxu0 %v3800
  %4397 = vmatmul.bf16.gmra.mxu0 %v2872
  %v4398 = vpop.f32.mrf.mxu0
  %v4399 = vadd.f32 %v4386, %v4398
  %v4400 = vpop.f32.mrf.mxu0
  %4401 = vdwg.mxu0
  %4402 = vmatpush.bf16.msra.mxu0 %v3860
  %4403 = vmatpush.bf16.msra.mxu0 %v3856
  %4404 = vmatpush.bf16.msra.mxu0 %v3852
  %4405 = vmatpush.bf16.msra.mxu0 %v3848
  %4406 = vmatpush.bf16.msra.mxu0 %v3844
  %4407 = vmatpush.bf16.msra.mxu0 %v3840
  %4408 = vmatpush.bf16.msra.mxu0 %v3836
  %4409 = vmatpush.bf16.msra.mxu0 %v3832
  %4410 = vmatmul.bf16.gmra.mxu0 %v2873
  %v4411 = vpop.f32.mrf.mxu0
  %v4412 = vadd.f32 %v4399, %v4411
  %v4413 = vpop.f32.mrf.mxu0
  %4414 = vdwg.mxu0
  %4415 = vmatpush.bf16.msra.mxu0 0
  %4416 = vmatpush.bf16.msra.mxu0 0
  %4417 = vmatpush.bf16.msra.mxu0 0
  %4418 = vmatpush.bf16.msra.mxu0 0
  %4419 = vmatpush.bf16.msra.mxu0 0
  %4420 = vmatpush.bf16.msra.mxu0 0
  %4421 = vmatpush.bf16.msra.mxu0 0
  %4422 = vmatpush.bf16.msra.mxu0 %v3864
  %4423 = vmatmul.bf16.gmra.mxu0 %v4062
  %v4424 = vpop.f32.mrf.mxu0
  %v4425 = vadd.f32 %v4412, %v4424
  %v4426 = vpop.f32.mrf.mxu0
  %4427 = vdwg.mxu0
  %v4428 = vmax.f32 %v4152, 0.0
  %v4429 = vmax.f32 %v4243, 0.0
  %v4430 = vmax.f32 %v4334, 0.0
  %v4431 = vmax.f32 %v4425, 0.0
  %v4432 = vpack.c.bf16 %v4428, %v4428
  %v4433 = vpack.c.bf16 %v4429, %v4429
  %v4434 = vpack.c.bf16 %v4430, %v4430
  %v4435 = vpack.c.bf16 %v4431, %v4431
  %v4436 = vld [vmem:[%s5] sm:$0xf]
  %v4437 = vld [vmem:[%s5 + $0x4] sm:$0xf]
  %v4438 = vld [vmem:[%s5 + $0x8] sm:$0xf]
  %v4439 = vld [vmem:[%s5 + $0xc] sm:$0xf]
  %v4440 = vld [vmem:[%s5 + $0x10] sm:$0xf]
  %v4441 = vld [vmem:[%s5 + $0x14] sm:$0xf]
  %v4442 = vld [vmem:[%s5 + $0x18] sm:$0xf]
  %v4443 = vld [vmem:[%s5 + $0x1c] sm:$0xf]
  %v4444 = vld [vmem:[%s5 + $0x20] sm:$0xf]
  %v4445 = vld [vmem:[%s5 + $0x24] sm:$0xf]
  %v4446 = vld [vmem:[%s5 + $0x28] sm:$0xf]
  %v4447 = vld [vmem:[%s5 + $0x2c] sm:$0xf]
  %v4448 = vld [vmem:[%s5 + $0x30] sm:$0xf]
  %v4449 = vld [vmem:[%s5 + $0x34] sm:$0xf]
  %v4450 = vld [vmem:[%s5 + $0x38] sm:$0xf]
  %v4451 = vld [vmem:[%s5 + $0x3c] sm:$0xf]
  %v4452 = vld [vmem:[%s5 + $0x40] sm:$0xf]
  %v4453 = vld [vmem:[%s5 + $0x44] sm:$0xf]
  %v4454 = vld [vmem:[%s5 + $0x48] sm:$0xf]
  %v4455 = vld [vmem:[%s5 + $0x4c] sm:$0xf]
  %v4456 = vld [vmem:[%s5 + $0x50] sm:$0xf]
  %v4457 = vld [vmem:[%s5 + $0x54] sm:$0xf]
  %v4458 = vld [vmem:[%s5 + $0x58] sm:$0xf]
  %v4459 = vld [vmem:[%s5 + $0x5c] sm:$0xf]
  %v4460 = vld [vmem:[%s5 + $0x60] sm:$0xf]
  %v4461 = vld [vmem:[%s5 + $0x64] sm:$0xf]
  %v4462 = vld [vmem:[%s5 + $0x68] sm:$0xf]
  %v4463 = vld [vmem:[%s5 + $0x6c] sm:$0xf]
  %v4464 = vld [vmem:[%s5 + $0x70] sm:$0xf]
  %v4465 = vld [vmem:[%s5 + $0x74] sm:$0xf]
  %v4466 = vld [vmem:[%s5 + $0x78] sm:$0xf]
  %v4467 = vld [vmem:[%s5 + $0x7c] sm:$0xf]
  %v4468 = vld [vmem:[%s5 + $0x80] sm:$0xf]
  %v4469 = vld [vmem:[%s5 + $0x84] sm:$0xf]
  %v4470 = vld [vmem:[%s5 + $0x88] sm:$0xf]
  %v4471 = vld [vmem:[%s5 + $0x8c] sm:$0xf]
  %v4472 = vld [vmem:[%s5 + $0x90] sm:$0xf]
  %v4473 = vld [vmem:[%s5 + $0x94] sm:$0xf]
  %v4474 = vld [vmem:[%s5 + $0x98] sm:$0xf]
  %v4475 = vld [vmem:[%s5 + $0x9c] sm:$0xf]
  %v4476 = vld [vmem:[%s5 + $0xa0] sm:$0xf]
  %v4477 = vld [vmem:[%s5 + $0xa4] sm:$0xf]
  %v4478 = vld [vmem:[%s5 + $0xa8] sm:$0xf]
  %v4479 = vld [vmem:[%s5 + $0xac] sm:$0xf]
  %v4480 = vld [vmem:[%s5 + $0xb0] sm:$0xf]
  %v4481 = vld [vmem:[%s5 + $0xb4] sm:$0xf]
  %v4482 = vld [vmem:[%s5 + $0xb8] sm:$0xf]
  %v4483 = vld [vmem:[%s5 + $0xbc] sm:$0xf]
  %v4484 = vld [vmem:[%s5 + $0xc0] sm:$0xf]
  %v4485 = vld [vmem:[%s6] sm:$0x1]
  %v4487 = vperm.slane %v4485, 0
  %v4538 = vunpack.c.l.b16 %v4436
  %v4539 = vunpack.c.l.b16 %v4437
  %v4540 = vunpack.c.l.b16 %v4438
  %v4541 = vunpack.c.l.b16 %v4439
  %v4542 = vunpack.c.l.b16 %v4440
  %v4543 = vunpack.c.l.b16 %v4441
  %v4544 = vunpack.c.l.b16 %v4442
  %v4545 = vunpack.c.l.b16 %v4443
  %v4546 = vunpack.c.l.b16 %v4444
  %v4547 = vunpack.c.l.b16 %v4445
  %v4548 = vunpack.c.l.b16 %v4446
  %v4549 = vunpack.c.l.b16 %v4447
  %v4550 = vunpack.c.l.b16 %v4448
  %v4551 = vunpack.c.l.b16 %v4449
  %v4552 = vunpack.c.l.b16 %v4450
  %v4553 = vunpack.c.l.b16 %v4451
  %v4554 = vunpack.c.l.b16 %v4452
  %v4555 = vunpack.c.l.b16 %v4453
  %v4556 = vunpack.c.l.b16 %v4454
  %v4557 = vunpack.c.l.b16 %v4455
  %v4558 = vunpack.c.l.b16 %v4456
  %v4559 = vunpack.c.l.b16 %v4457
  %v4560 = vunpack.c.l.b16 %v4458
  %v4561 = vunpack.c.l.b16 %v4459
  %v4562 = vunpack.c.l.b16 %v4460
  %v4563 = vunpack.c.l.b16 %v4461
  %v4564 = vunpack.c.l.b16 %v4462
  %v4565 = vunpack.c.l.b16 %v4463
  %v4566 = vunpack.c.l.b16 %v4464
  %v4567 = vunpack.c.l.b16 %v4465
  %v4568 = vunpack.c.l.b16 %v4466
  %v4569 = vunpack.c.l.b16 %v4467
  %v4570 = vunpack.c.l.b16 %v4468
  %v4571 = vunpack.c.l.b16 %v4469
  %v4572 = vunpack.c.l.b16 %v4470
  %v4573 = vunpack.c.l.b16 %v4471
  %v4574 = vunpack.c.l.b16 %v4472
  %v4575 = vunpack.c.l.b16 %v4473
  %v4576 = vunpack.c.l.b16 %v4474
  %v4577 = vunpack.c.l.b16 %v4475
  %v4578 = vunpack.c.l.b16 %v4476
  %v4579 = vunpack.c.l.b16 %v4477
  %v4580 = vunpack.c.l.b16 %v4478
  %v4581 = vunpack.c.l.b16 %v4479
  %v4582 = vunpack.c.l.b16 %v4480
  %v4583 = vunpack.c.l.b16 %v4481
  %v4584 = vunpack.c.l.b16 %v4482
  %v4585 = vunpack.c.l.b16 %v4483
  %v4586 = vunpack.c.l.b16 %v4484
  %v4587 = vpack.c.b16 %v4539, %v4538
  %v4588 = vpack.c.b16 %v4541, %v4540
  %v4589 = vpack.c.b16 %v4543, %v4542
  %v4590 = vpack.c.b16 %v4545, %v4544
  %v4591 = vpack.c.b16 %v4547, %v4546
  %v4592 = vpack.c.b16 %v4549, %v4548
  %v4593 = vpack.c.b16 %v4551, %v4550
  %v4594 = vpack.c.b16 %v4553, %v4552
  %v4595 = vpack.c.b16 %v4555, %v4554
  %v4596 = vpack.c.b16 %v4557, %v4556
  %v4597 = vpack.c.b16 %v4559, %v4558
  %v4598 = vpack.c.b16 %v4561, %v4560
  %v4599 = vpack.c.b16 %v4563, %v4562
  %v4600 = vpack.c.b16 %v4565, %v4564
  %v4601 = vpack.c.b16 %v4567, %v4566
  %v4602 = vpack.c.b16 %v4569, %v4568
  %v4603 = vpack.c.b16 %v4571, %v4570
  %v4604 = vpack.c.b16 %v4573, %v4572
  %v4605 = vpack.c.b16 %v4575, %v4574
  %v4606 = vpack.c.b16 %v4577, %v4576
  %v4607 = vpack.c.b16 %v4579, %v4578
  %v4608 = vpack.c.b16 %v4581, %v4580
  %v4609 = vpack.c.b16 %v4583, %v4582
  %v4610 = vpack.c.b16 %v4585, %v4584
  %v4611 = vpack.c.b16 %v4586, %v4586
  %vm4636 = vcmask 64512
  %v4638 = vsel %vm4636, %v4435, 0
  %vm4640 = vcmask 1043456
  %v4642 = vsel %vm4640, %v4611, 0
  %4644 = vmatpush.bf16.msra.mxu0 %v4594
  %4645 = vmatpush.bf16.msra.mxu0 %v4593
  %4646 = vmatpush.bf16.msra.mxu0 %v4592
  %4647 = vmatpush.bf16.msra.mxu0 %v4591
  %4648 = vmatpush.bf16.msra.mxu0 %v4590
  %4649 = vmatpush.bf16.msra.mxu0 %v4589
  %4650 = vmatpush.bf16.msra.mxu0 %v4588
  %4651 = vmatpush.bf16.msra.mxu0 %v4587
  %4652 = vmatmul.bf16.gmra.mxu0 %v4432
  %v4653 = vpop.f32.mrf.mxu0
  %v4654 = vadd.f32 %v4487, %v4653
  %v4655 = vpop.f32.mrf.mxu0
  %4656 = vdwg.mxu0
  %4657 = vmatpush.bf16.msra.mxu0 %v4602
  %4658 = vmatpush.bf16.msra.mxu0 %v4601
  %4659 = vmatpush.bf16.msra.mxu0 %v4600
  %4660 = vmatpush.bf16.msra.mxu0 %v4599
  %4661 = vmatpush.bf16.msra.mxu0 %v4598
  %4662 = vmatpush.bf16.msra.mxu0 %v4597
  %4663 = vmatpush.bf16.msra.mxu0 %v4596
  %4664 = vmatpush.bf16.msra.mxu0 %v4595
  %4665 = vmatmul.bf16.gmra.mxu0 %v4433
  %v4666 = vpop.f32.mrf.mxu0
  %v4667 = vadd.f32 %v4654, %v4666
  %v4668 = vpop.f32.mrf.mxu0
  %4669 = vdwg.mxu0
  %4670 = vmatpush.bf16.msra.mxu0 %v4610
  %4671 = vmatpush.bf16.msra.mxu0 %v4609
  %4672 = vmatpush.bf16.msra.mxu0 %v4608
  %4673 = vmatpush.bf16.msra.mxu0 %v4607
  %4674 = vmatpush.bf16.msra.mxu0 %v4606
  %4675 = vmatpush.bf16.msra.mxu0 %v4605
  %4676 = vmatpush.bf16.msra.mxu0 %v4604
  %4677 = vmatpush.bf16.msra.mxu0 %v4603
  %4678 = vmatmul.bf16.gmra.mxu0 %v4434
  %v4679 = vpop.f32.mrf.mxu0
  %v4680 = vadd.f32 %v4667, %v4679
  %v4681 = vpop.f32.mrf.mxu0
  %4682 = vdwg.mxu0
  %4683 = vmatpush.bf16.msra.mxu0 0
  %4684 = vmatpush.bf16.msra.mxu0 0
  %4685 = vmatpush.bf16.msra.mxu0 0
  %4686 = vmatpush.bf16.msra.mxu0 0
  %4687 = vmatpush.bf16.msra.mxu0 0
  %4688 = vmatpush.bf16.msra.mxu0 0
  %4689 = vmatpush.bf16.msra.mxu0 0
  %4690 = vmatpush.bf16.msra.mxu0 %v4642
  %4691 = vmatmul.bf16.gmra.mxu0 %v4638
  %v4692 = vpop.f32.mrf.mxu0
  %v4693 = vadd.f32 %v4680, %v4692
  %v4694 = vpop.f32.mrf.mxu0
  %4695 = vdwg.mxu0
  %v4696 = vmax.f32 %v4693, 0.0
  %v4697 = vpack.c.bf16 %v4696, %v4696
  %v4698 = vld [vmem:[%s7] sm:$0xf]
  %v4699 = vld [vmem:[%s7 + $0x4] sm:$0xf]
  %v4700 = vld [vmem:[%s7 + $0x8] sm:$0xf]
  %v4701 = vld [vmem:[%s7 + $0xc] sm:$0xf]
  %v4702 = vld [vmem:[%s7 + $0x10] sm:$0xf]
  %v4703 = vld [vmem:[%s7 + $0x14] sm:$0xf]
  %v4704 = vld [vmem:[%s7 + $0x18] sm:$0xf]
  %v4705 = vld [vmem:[%s7 + $0x1c] sm:$0xf]
  %v4706 = vld [vmem:[%s7 + $0x20] sm:$0xf]
  %v4707 = vld [vmem:[%s7 + $0x24] sm:$0xf]
  %v4708 = vld [vmem:[%s7 + $0x28] sm:$0xf]
  %v4709 = vld [vmem:[%s7 + $0x2c] sm:$0xf]
  %v4710 = vld [vmem:[%s7 + $0x30] sm:$0xf]
  %v4711 = vld [vmem:[%s7 + $0x34] sm:$0xf]
  %v4712 = vld [vmem:[%s7 + $0x38] sm:$0xf]
  %v4713 = vld [vmem:[%s7 + $0x3c] sm:$0xf]
  %v4714 = vld [vmem:[%s8] sm:$0x1]
  %v4716 = vperm.slane %v4714, 0
  %v4734 = vunpack.c.l.b16 %v4698
  %v4735 = vunpack.c.l.b16 %v4699
  %v4736 = vunpack.c.l.b16 %v4700
  %v4737 = vunpack.c.l.b16 %v4701
  %v4738 = vunpack.c.l.b16 %v4702
  %v4739 = vunpack.c.l.b16 %v4703
  %v4740 = vunpack.c.l.b16 %v4704
  %v4741 = vunpack.c.l.b16 %v4705
  %v4742 = vunpack.c.l.b16 %v4706
  %v4743 = vunpack.c.l.b16 %v4707
  %v4744 = vunpack.c.l.b16 %v4708
  %v4745 = vunpack.c.l.b16 %v4709
  %v4746 = vunpack.c.l.b16 %v4710
  %v4747 = vunpack.c.l.b16 %v4711
  %v4748 = vunpack.c.l.b16 %v4712
  %v4749 = vunpack.c.l.b16 %v4713
  %v4750 = vpack.c.b16 %v4735, %v4734
  %v4751 = vpack.c.b16 %v4737, %v4736
  %v4752 = vpack.c.b16 %v4739, %v4738
  %v4753 = vpack.c.b16 %v4741, %v4740
  %v4754 = vpack.c.b16 %v4743, %v4742
  %v4755 = vpack.c.b16 %v4745, %v4744
  %v4756 = vpack.c.b16 %v4747, %v4746
  %v4757 = vpack.c.b16 %v4749, %v4748
  %4766 = vmatpush.bf16.msra.mxu0 %v4757
  %4767 = vmatpush.bf16.msra.mxu0 %v4756
  %4768 = vmatpush.bf16.msra.mxu0 %v4755
  %4769 = vmatpush.bf16.msra.mxu0 %v4754
  %4770 = vmatpush.bf16.msra.mxu0 %v4753
  %4771 = vmatpush.bf16.msra.mxu0 %v4752
  %4772 = vmatpush.bf16.msra.mxu0 %v4751
  %4773 = vmatpush.bf16.msra.mxu0 %v4750
  %4774 = vmatmul.bf16.gmra.mxu0 %v4697
  %v4775 = vpop.f32.mrf.mxu0
  %v4776 = vadd.f32 %v4716, %v4775
  %v4777 = vpop.f32.mrf.mxu0
  %4778 = vdwg.mxu0
  %vm4779 = vcmask 74752
  %4780 = vst.msk [vmem:[%s9] sm:$0x3] %vm4779, %v4776
  // Predicated region
  $region38: #{network_forward.1} parent=0 // pred_check
    _
  $region39: #{network_forward.1} parent=0 // pred_check_branch
    %4782 = sbr.rel (0) target = $region41
  $region40: #{network_forward.1} parent=0 // pred_region
    _
  $region41: #{network_forward.1} parent=0 // pred_fallthru
    _
  // Predicated region
  $region42: #{network_forward.1} parent=0 // pred_check
    _
  $region43: #{network_forward.1} parent=0 // pred_check_branch
    %4784 = sbr.rel (0) target = $region45
  $region44: #{network_forward.1} parent=0 // pred_region
    _
  $region45: #{network_forward.1} parent=0 // pred_fallthru
    _

</llo_original>
